<compile_context>
chip_gen: v7x
topology: tpu7x:2x2x1
jax: 0.10.0
libtpu: 0.0.40
codegen_flags: <defaults>
</compile_context>

<pallas_src>
import functools

import jax
import jax.numpy as jnp
from jax import lax
from jax.experimental import pallas as pl
from jax.experimental.pallas import tpu as pltpu


def mha_kernel(x_ref, wq_ref, bq_ref, wk_ref, bk_ref, wv_ref, bv_ref,
               wo_ref, bo_ref, out_ref, *rest, heads, q_tile, compute_attw):
    """One (batch row, query tile) grid step.

    x_ref   : (L, E)  full sequence of this batch row (resident across q tiles)
    wq/wk/wv: (H, E, D) per-head projection weights (scaling folded into wq/bq)
    wo_ref  : (H, D, E) per-head output-projection slabs
    bq/bk/bv: (H, 1, D) biases (f32);  bo_ref: (1, E)
    out_ref : (TQ, E)  attention output tile
    attw_ref: (TQ, L)  head-averaged attention weights (optional)
    scratch : k_scr, v_scr (H, L, D) per-batch-row K/V, persisted in VMEM
    """
    if compute_attw:
        attw_ref, k_scr, v_scr = rest
    else:
        attw_ref = None
        k_scr, v_scr = rest

    f32 = jnp.float32
    cd = k_scr.dtype                      # MXU operand dtype (bf16 or f32)
    L, E = x_ref.shape
    qi = pl.program_id(1)

    # ---- K/V projections: once per batch row, kept resident in VMEM --------
    @pl.when(qi == 0)
    def _():
        xs = x_ref[...]                   # (L, E)
        for h in range(heads):            # static unroll; major-axis slices only
            k_h = jnp.dot(xs, wk_ref[h], preferred_element_type=f32) + bk_ref[h]
            v_h = jnp.dot(xs, wv_ref[h], preferred_element_type=f32) + bv_ref[h]
            k_scr[h] = k_h.astype(cd)
            v_scr[h] = v_h.astype(cd)

    # ---- query tile, sliced from the already-resident sequence block -------
    q_start = pl.multiple_of(qi * q_tile, q_tile)
    xq = x_ref[pl.ds(q_start, q_tile), :]                 # (TQ, E)

    out_acc = jnp.zeros((q_tile, E), f32)
    attw_acc = jnp.zeros((q_tile, L), f32) if compute_attw else None

    # Per-head attention: every operand is 2-D and indexed only along the
    # leading (major) axis of pre-split weights / scratch, so the head
    # split/merge never touches the lane layout (no reshape/swapaxes copies).
    for h in range(heads):
        # Q projection (1/sqrt(D) scaling pre-folded into wq/bq host-side).
        q_h = jnp.dot(xq, wq_ref[h], preferred_element_type=f32) + bq_ref[h]
        # scores = q_h @ k_h^T  — MXU consumes the transposed operand directly.
        s = lax.dot_general(q_h.astype(cd), k_scr[h],
                            (((1,), (1,)), ((), ())),
                            preferred_element_type=f32)    # (TQ, L)
        # Numerically stable softmax over keys, in f32.
        s = s - jnp.max(s, axis=-1, keepdims=True)
        p = jnp.exp(s)
        denom = jnp.sum(p, axis=-1, keepdims=True)
        r = pl.reciprocal(denom, approx=True)               # EUP seed
        r = r * (2.0 - denom * r)                           # one Newton step
        p = p * r                                            # (TQ, L) probs
        if compute_attw:
            attw_acc = attw_acc + p
        # Dropout p = 0.0 in the module default -> identity.
        ctx_h = jnp.dot(p.astype(cd), v_scr[h],
                        preferred_element_type=f32)          # (TQ, D)
        # Head merge fused into the output projection (per-head Wo slab);
        # the head sum is a plain f32 accumulate.
        out_acc = out_acc + jnp.dot(ctx_h.astype(cd), wo_ref[h],
                                    preferred_element_type=f32)   # (TQ, E)

    out_ref[...] = (out_acc + bo_ref[...]).astype(out_ref.dtype)
    if compute_attw:
        attw_ref[...] = (attw_acc * (1.0 / heads)).astype(attw_ref.dtype)


def mha_forward(x, params, heads, *, q_tile=None, use_bf16=False,
                return_attn_weights=True, attw_dtype=jnp.float32):
    """Multi-head self-attention forward.

    x      : (N, L, E) float32
    params : (wq, bq, wk, bk, wv, bv, wo, bo); weights pre-transposed to
             (E_in, E_out), biases (1, E_out)   (PyTorch Linear: y = x W^T + b)
    Returns (attn_out (N, L, E) f32, attn_weights_avg (N, L, L) | None).
    """
    N, L, E = x.shape
    head_dim = E // heads
    assert head_dim * heads == E, "embed_size must be divisible by heads"
    scaling = float(head_dim) ** (-0.5)

    wq, bq, wk, bk, wv, bv, wo, bo = params

    # Host-side weight prep (free constant folds):
    #   * fold the 1/sqrt(D) query scaling into Wq / bq,
    #   * pre-split every projection per head (H major) so the kernel never
    #     reshapes / transposes activations across the lane dimension,
    #   * Wo reshaped to (H, D, E) so the head merge is fused into the output
    #     projection.
    wq_h = (wq * scaling).reshape(E, heads, head_dim).transpose(1, 0, 2)  # (H,E,D)
    wk_h = wk.reshape(E, heads, head_dim).transpose(1, 0, 2)              # (H,E,D)
    wv_h = wv.reshape(E, heads, head_dim).transpose(1, 0, 2)              # (H,E,D)
    wo_h = wo.reshape(heads, head_dim, E)                                 # (H,D,E)
    bq_h = (bq * scaling).reshape(heads, 1, head_dim)                     # (H,1,D)
    bk_h = bk.reshape(heads, 1, head_dim)
    bv_h = bv.reshape(heads, 1, head_dim)

    in_dtype = jnp.bfloat16 if use_bf16 else jnp.float32
    x_in = x.astype(in_dtype)
    wq_h, wk_h, wv_h, wo_h = (w.astype(in_dtype) for w in (wq_h, wk_h, wv_h, wo_h))
    # Biases stay f32; they are added after the f32-accumulated matmuls.

    if q_tile is None:
        q_tile = L
    assert L % q_tile == 0 and (q_tile == L or q_tile % 8 == 0), \
        "q_tile must divide L and be a multiple of 8 (or equal L)"
    num_q_tiles = L // q_tile

    kernel = functools.partial(mha_kernel, heads=heads, q_tile=q_tile,
                               compute_attw=return_attn_weights)

    out_shapes = [jax.ShapeDtypeStruct((N, L, E), jnp.float32)]
    out_specs = [pl.BlockSpec((None, q_tile, E), lambda b, qi: (b, qi, 0))]
    if return_attn_weights:
        out_shapes.append(jax.ShapeDtypeStruct((N, L, L), attw_dtype))
        out_specs.append(pl.BlockSpec((None, q_tile, L), lambda b, qi: (b, qi, 0)))

    # Explicit VMEM budget so v7x (64 MiB physical / 32 MiB scoped default) and
    # v5e (16 MiB scoped default) do not become a silent wall.  Shrink q_tile
    # (or adopt KV-tiled online softmax) if this estimate grows past ~48 MiB.
    isz = jnp.dtype(in_dtype).itemsize
    est = (2 * L * E * isz                        # resident x block (2 buffers)
           + 2 * heads * L * head_dim * isz       # K / V scratch
           + 2 * (4 * E * E * isz + 4 * E * 4)    # weights + biases (<=2 buffers)
           + 4 * q_tile * L * 4                   # per-head scores / softmax set
           + 2 * q_tile * E * 4                   # output tile (2 buffers)
           + (2 * q_tile * L * jnp.dtype(attw_dtype).itemsize
              if return_attn_weights else 0)
           + (4 << 20))                           # headroom
    vmem_limit = int(min(max(est, 32 << 20), 64 << 20))

    def build(single_buffer_weights):
        def resident(shape):
            index_map = lambda b, qi: tuple(0 for _ in shape)
            if single_buffer_weights:
                # Never-changing operands do not need a second pipeline buffer.
                return pl.BlockSpec(shape, index_map, pipeline_mode=pl.Buffered(1))
            return pl.BlockSpec(shape, index_map)

        in_specs = [
            # Full sequence for this batch row; block index is independent of
            # the q-tile axis, so it is DMA'd once per batch row and the query
            # tile is sliced from it in-kernel (no duplicate HBM read of x).
            pl.BlockSpec((None, L, E), lambda b, qi: (b, 0, 0)),
            resident((heads, E, head_dim)), resident((heads, 1, head_dim)),  # Wq,bq
            resident((heads, E, head_dim)), resident((heads, 1, head_dim)),  # Wk,bk
            resident((heads, E, head_dim)), resident((heads, 1, head_dim)),  # Wv,bv
            resident((heads, head_dim, E)), resident((1, E)),                # Wo,bo
        ]
        return pl.pallas_call(
            kernel,
            out_shape=tuple(out_shapes),
            grid=(N, num_q_tiles),
            in_specs=in_specs,
            out_specs=tuple(out_specs),
            scratch_shapes=[pltpu.VMEM((heads, L, head_dim), in_dtype),   # K
                            pltpu.VMEM((heads, L, head_dim), in_dtype)],  # V
            compiler_params=pltpu.CompilerParams(
                # batch axis "parallel" (megacore / 2-TC sharding on v7x); the
                # q-tile axis is "arbitrary" because the K/V scratch written at
                # qi == 0 is reused by later q tiles of the same batch row.
                dimension_semantics=("parallel", "arbitrary"),
                vmem_limit_bytes=vmem_limit),
        )

    operands = (x_in, wq_h, bq_h, wk_h, bk_h, wv_h, bv_h, wo_h, bo)
    try:
        res = build(True)(*operands)
    except Exception:
        # Fallback for jax/Mosaic versions without single-buffer pipeline_mode
        # support; semantics are identical, only VMEM footprint differs.
        res = build(False)(*operands)

    if return_attn_weights:
        out, attw = res
        return out, attw
    (out,) = res
    return out, None


def mha_reference(x, params, heads):
    """Pure-JAX reference mirroring the PyTorch forward."""
    N, L, E = x.shape
    D = E // heads
    scaling = float(D) ** (-0.5)
    wq, bq, wk, bk, wv, bv, wo, bo = params

    def split_heads(t):
        return t.reshape(N, L, heads, D).transpose(0, 2, 1, 3)

    v = split_heads(x @ wv + bv[0])
    k = split_heads(x @ wk + bk[0])
    q = split_heads((x @ wq + bq[0]) * scaling)

    attn_w = jnp.einsum('nhqd,nhkd->nhqk', q, k)
    attn_w = jax.nn.softmax(attn_w, axis=-1)
    attn_w_avg = attn_w.mean(axis=1)
    attn = jnp.einsum('nhqk,nhkd->nhqd', attn_w, v)
    attn = attn.transpose(0, 2, 1, 3).reshape(N, L, E)
    attn = attn @ wo + bo[0]
    return attn, attn_w_avg


def init_params(key, embed_size):
    """Deterministic parameter init; weights stored pre-transposed (E_in, E_out)."""
    keys = jax.random.split(key, 8)
    E = embed_size
    scale = 1.0 / jnp.sqrt(E)

    def w(k):
        return jax.random.uniform(k, (E, E), jnp.float32, -1.0, 1.0) * scale

    def b(k):
        return jax.random.uniform(k, (1, E), jnp.float32, -1.0, 1.0) * scale

    wq, bq = w(keys[0]), b(keys[1])
    wk, bk = w(keys[2]), b(keys[3])
    wv, bv = w(keys[4]), b(keys[5])
    wo, bo = w(keys[6]), b(keys[7])
    return (wq, bq, wk, bk, wv, bv, wo, bo)


if __name__ == "__main__":
    # Small demo shapes consistent with the module (batch=2, seq=8, embed=32, heads=4).
    N, L, E, H = 2, 8, 32, 4
    key = jax.random.PRNGKey(0)
    kx, kp = jax.random.split(key)
    x = jax.random.normal(kx, (N, L, E), jnp.float32)
    params = init_params(kp, E)

    out, attw = mha_forward(x, params, H)
    out = jax.block_until_ready(out)
    attw = jax.block_until_ready(attw)

    ref_out, ref_attw = mha_reference(x, params, H)
    assert out.shape == (N, L, E) and attw.shape == (N, L, L)
    assert jnp.allclose(out, ref_out, atol=1e-3, rtol=1e-3)
    assert jnp.allclose(attw, ref_attw, atol=1e-3, rtol=1e-3)

    # Optional-output path (the (N, L, L) weights writeback removed entirely).
    out_nw, attw_nw = mha_forward(x, params, H, return_attn_weights=False)
    out_nw = jax.block_until_ready(out_nw)
    assert attw_nw is None
    assert jnp.allclose(out_nw, ref_out, atol=1e-3, rtol=1e-3)

    # Larger, lane/MXU-aligned shapes exercising query tiling, per-batch K/V
    # scratch reuse, bf16 matmul operands and bf16 attention-weight writeback.
    N2, L2, E2, H2 = 2, 256, 256, 4
    kx2, kp2 = jax.random.split(jax.random.PRNGKey(1))
    x2 = jax.random.normal(kx2, (N2, L2, E2), jnp.float32)
    params2 = init_params(kp2, E2)

    out2, attw2 = mha_forward(x2, params2, H2, q_tile=128, use_bf16=True,
                              attw_dtype=jnp.bfloat16)
    out2 = jax.block_until_ready(out2)
    attw2 = jax.block_until_ready(attw2)

    ref_out2, ref_attw2 = mha_reference(x2, params2, H2)
    assert out2.shape == (N2, L2, E2) and attw2.shape == (N2, L2, L2)
    assert jnp.allclose(out2, ref_out2, atol=5e-2, rtol=5e-2)
    assert jnp.allclose(attw2.astype(jnp.float32), ref_attw2, atol=2e-2, rtol=2e-2)

    print("KERNEL_OK")
</pallas_src>

<mosaic_0001>
module attributes {stable_mosaic.version = 11 : i64} {
  func.func @mha_kernel(%arg0: i32, %arg1: i32, %arg2: memref<1x8x32xf32, #tpu.memory_space<vmem>>, %arg3: memref<4x32x8xf32, #tpu.memory_space<vmem>>, %arg4: memref<4x1x8xf32, #tpu.memory_space<vmem>>, %arg5: memref<4x32x8xf32, #tpu.memory_space<vmem>>, %arg6: memref<4x1x8xf32, #tpu.memory_space<vmem>>, %arg7: memref<4x32x8xf32, #tpu.memory_space<vmem>>, %arg8: memref<4x1x8xf32, #tpu.memory_space<vmem>>, %arg9: memref<4x8x32xf32, #tpu.memory_space<vmem>>, %arg10: memref<1x32xf32, #tpu.memory_space<vmem>>, %arg11: memref<1x8x32xf32, #tpu.memory_space<vmem>>, %arg12: memref<1x8x8xf32, #tpu.memory_space<vmem>>, %arg13: memref<4x8x8xf32, #tpu.memory_space<vmem>>, %arg14: memref<4x8x8xf32, #tpu.memory_space<vmem>>) attributes {dimension_semantics = [#tpu.dimension_semantics<parallel>, #tpu.dimension_semantics<arbitrary>], iteration_bounds = array<i64: 2, 1>, scalar_prefetch = 0 : i64, scratch_operands = 2 : i64, tpu.core_type = #tpu.core_type<tc>, window_params = [{transform_indices = @transform_0, window_bounds = array<i64: 1, 8, 32>}, {pipeline_mode = #tpu.pipeline_mode<synchronous>, transform_indices = @transform_1, window_bounds = array<i64: 4, 32, 8>}, {pipeline_mode = #tpu.pipeline_mode<synchronous>, transform_indices = @transform_2, window_bounds = array<i64: 4, 1, 8>}, {pipeline_mode = #tpu.pipeline_mode<synchronous>, transform_indices = @transform_3, window_bounds = array<i64: 4, 32, 8>}, {pipeline_mode = #tpu.pipeline_mode<synchronous>, transform_indices = @transform_4, window_bounds = array<i64: 4, 1, 8>}, {pipeline_mode = #tpu.pipeline_mode<synchronous>, transform_indices = @transform_5, window_bounds = array<i64: 4, 32, 8>}, {pipeline_mode = #tpu.pipeline_mode<synchronous>, transform_indices = @transform_6, window_bounds = array<i64: 4, 1, 8>}, {pipeline_mode = #tpu.pipeline_mode<synchronous>, transform_indices = @transform_7, window_bounds = array<i64: 4, 8, 32>}, {pipeline_mode = #tpu.pipeline_mode<synchronous>, transform_indices = @transform_8, window_bounds = array<i64: 1, 32>}, {transform_indices = @transform_9, window_bounds = array<i64: 1, 8, 32>}, {transform_indices = @transform_10, window_bounds = array<i64: 1, 8, 8>}]} {
    %c0_i32 = arith.constant 0 : i32
    %0 = arith.cmpi eq, %arg1, %c0_i32 : i32
    %1 = arith.extui %0 : i1 to i32
    %c0_i32_0 = arith.constant 0 : i32
    %2 = arith.cmpi ne, %1, %c0_i32_0 : i32
    scf.if %2 {
      %c0_97 = arith.constant 0 : index
      %c0_98 = arith.constant 0 : index
      %c0_99 = arith.constant 0 : index
      %149 = vector.load %arg2[%c0_97, %c0_98, %c0_99] : memref<1x8x32xf32, #tpu.memory_space<vmem>>, vector<1x8x32xf32>
      %150 = vector.shape_cast %149 : vector<1x8x32xf32> to vector<8x32xf32>
      %c0_100 = arith.constant 0 : index
      %c0_101 = arith.constant 0 : index
      %c0_102 = arith.constant 0 : index
      %151 = vector.load %arg5[%c0_100, %c0_101, %c0_102] : memref<4x32x8xf32, #tpu.memory_space<vmem>>, vector<1x32x8xf32>
      %152 = vector.shape_cast %151 : vector<1x32x8xf32> to vector<32x8xf32>
      %cst_103 = arith.constant dense<0.000000e+00> : vector<8x8xf32>
      %153 = tpu.matmul %150, %152, %cst_103 {dimension_numbers = #tpu.dot_dimension_numbers<[1], [0], [0], [1], [0, 0, 1, 1], [], []>} : vector<8x32xf32>, vector<32x8xf32>, vector<8x8xf32> -> vector<8x8xf32>
      %c0_104 = arith.constant 0 : index
      %c0_105 = arith.constant 0 : index
      %c0_106 = arith.constant 0 : index
      %154 = vector.load %arg6[%c0_104, %c0_105, %c0_106] : memref<4x1x8xf32, #tpu.memory_space<vmem>>, vector<1x1x8xf32>
      %155 = vector.shape_cast %154 : vector<1x1x8xf32> to vector<1x8xf32>
      %156 = vector.broadcast %155 : vector<1x8xf32> to vector<8x8xf32>
      %157 = arith.addf %153, %156 : vector<8x8xf32>
      %c0_107 = arith.constant 0 : index
      %c0_108 = arith.constant 0 : index
      %c0_109 = arith.constant 0 : index
      %158 = vector.load %arg7[%c0_107, %c0_108, %c0_109] : memref<4x32x8xf32, #tpu.memory_space<vmem>>, vector<1x32x8xf32>
      %159 = vector.shape_cast %158 : vector<1x32x8xf32> to vector<32x8xf32>
      %cst_110 = arith.constant dense<0.000000e+00> : vector<8x8xf32>
      %160 = tpu.matmul %150, %159, %cst_110 {dimension_numbers = #tpu.dot_dimension_numbers<[1], [0], [0], [1], [0, 0, 1, 1], [], []>} : vector<8x32xf32>, vector<32x8xf32>, vector<8x8xf32> -> vector<8x8xf32>
      %c0_111 = arith.constant 0 : index
      %c0_112 = arith.constant 0 : index
      %c0_113 = arith.constant 0 : index
      %161 = vector.load %arg8[%c0_111, %c0_112, %c0_113] : memref<4x1x8xf32, #tpu.memory_space<vmem>>, vector<1x1x8xf32>
      %162 = vector.shape_cast %161 : vector<1x1x8xf32> to vector<1x8xf32>
      %163 = vector.broadcast %162 : vector<1x8xf32> to vector<8x8xf32>
      %164 = arith.addf %160, %163 : vector<8x8xf32>
      %c0_114 = arith.constant 0 : index
      %c0_115 = arith.constant 0 : index
      %c0_116 = arith.constant 0 : index
      %165 = vector.load %arg13[%c0_114, %c0_115, %c0_116] : memref<4x8x8xf32, #tpu.memory_space<vmem>>, vector<1x8x8xf32>
      %166 = vector.shape_cast %165 : vector<1x8x8xf32> to vector<8x8xf32>
      %167 = vector.shape_cast %157 : vector<8x8xf32> to vector<1x8x8xf32>
      tpu.vector_store %arg13[%c0_114, %c0_115, %c0_116], %167 {strides = array<i32>} : memref<4x8x8xf32, #tpu.memory_space<vmem>>, vector<1x8x8xf32>,
      %c0_117 = arith.constant 0 : index
      %c0_118 = arith.constant 0 : index
      %c0_119 = arith.constant 0 : index
      %168 = vector.load %arg14[%c0_117, %c0_118, %c0_119] : memref<4x8x8xf32, #tpu.memory_space<vmem>>, vector<1x8x8xf32>
      %169 = vector.shape_cast %168 : vector<1x8x8xf32> to vector<8x8xf32>
      %170 = vector.shape_cast %164 : vector<8x8xf32> to vector<1x8x8xf32>
      tpu.vector_store %arg14[%c0_117, %c0_118, %c0_119], %170 {strides = array<i32>} : memref<4x8x8xf32, #tpu.memory_space<vmem>>, vector<1x8x8xf32>,
      %c1_120 = arith.constant 1 : index
      %c0_121 = arith.constant 0 : index
      %c0_122 = arith.constant 0 : index
      %171 = vector.load %arg5[%c1_120, %c0_121, %c0_122] : memref<4x32x8xf32, #tpu.memory_space<vmem>>, vector<1x32x8xf32>
      %172 = vector.shape_cast %171 : vector<1x32x8xf32> to vector<32x8xf32>
      %cst_123 = arith.constant dense<0.000000e+00> : vector<8x8xf32>
      %173 = tpu.matmul %150, %172, %cst_123 {dimension_numbers = #tpu.dot_dimension_numbers<[1], [0], [0], [1], [0, 0, 1, 1], [], []>} : vector<8x32xf32>, vector<32x8xf32>, vector<8x8xf32> -> vector<8x8xf32>
      %c1_124 = arith.constant 1 : index
      %c0_125 = arith.constant 0 : index
      %c0_126 = arith.constant 0 : index
      %174 = vector.load %arg6[%c1_124, %c0_125, %c0_126] : memref<4x1x8xf32, #tpu.memory_space<vmem>>, vector<1x1x8xf32>
      %175 = vector.shape_cast %174 : vector<1x1x8xf32> to vector<1x8xf32>
      %176 = vector.broadcast %175 : vector<1x8xf32> to vector<8x8xf32>
      %177 = arith.addf %173, %176 : vector<8x8xf32>
      %c1_127 = arith.constant 1 : index
      %c0_128 = arith.constant 0 : index
      %c0_129 = arith.constant 0 : index
      %178 = vector.load %arg7[%c1_127, %c0_128, %c0_129] : memref<4x32x8xf32, #tpu.memory_space<vmem>>, vector<1x32x8xf32>
      %179 = vector.shape_cast %178 : vector<1x32x8xf32> to vector<32x8xf32>
      %cst_130 = arith.constant dense<0.000000e+00> : vector<8x8xf32>
      %180 = tpu.matmul %150, %179, %cst_130 {dimension_numbers = #tpu.dot_dimension_numbers<[1], [0], [0], [1], [0, 0, 1, 1], [], []>} : vector<8x32xf32>, vector<32x8xf32>, vector<8x8xf32> -> vector<8x8xf32>
      %c1_131 = arith.constant 1 : index
      %c0_132 = arith.constant 0 : index
      %c0_133 = arith.constant 0 : index
      %181 = vector.load %arg8[%c1_131, %c0_132, %c0_133] : memref<4x1x8xf32, #tpu.memory_space<vmem>>, vector<1x1x8xf32>
      %182 = vector.shape_cast %181 : vector<1x1x8xf32> to vector<1x8xf32>
      %183 = vector.broadcast %182 : vector<1x8xf32> to vector<8x8xf32>
      %184 = arith.addf %180, %183 : vector<8x8xf32>
      %c1_134 = arith.constant 1 : index
      %c0_135 = arith.constant 0 : index
      %c0_136 = arith.constant 0 : index
      %185 = vector.load %arg13[%c1_134, %c0_135, %c0_136] : memref<4x8x8xf32, #tpu.memory_space<vmem>>, vector<1x8x8xf32>
      %186 = vector.shape_cast %185 : vector<1x8x8xf32> to vector<8x8xf32>
      %187 = vector.shape_cast %177 : vector<8x8xf32> to vector<1x8x8xf32>
      tpu.vector_store %arg13[%c1_134, %c0_135, %c0_136], %187 {strides = array<i32>} : memref<4x8x8xf32, #tpu.memory_space<vmem>>, vector<1x8x8xf32>,
      %c1_137 = arith.constant 1 : index
      %c0_138 = arith.constant 0 : index
      %c0_139 = arith.constant 0 : index
      %188 = vector.load %arg14[%c1_137, %c0_138, %c0_139] : memref<4x8x8xf32, #tpu.memory_space<vmem>>, vector<1x8x8xf32>
      %189 = vector.shape_cast %188 : vector<1x8x8xf32> to vector<8x8xf32>
      %190 = vector.shape_cast %184 : vector<8x8xf32> to vector<1x8x8xf32>
      tpu.vector_store %arg14[%c1_137, %c0_138, %c0_139], %190 {strides = array<i32>} : memref<4x8x8xf32, #tpu.memory_space<vmem>>, vector<1x8x8xf32>,
      %c2_140 = arith.constant 2 : index
      %c0_141 = arith.constant 0 : index
      %c0_142 = arith.constant 0 : index
      %191 = vector.load %arg5[%c2_140, %c0_141, %c0_142] : memref<4x32x8xf32, #tpu.memory_space<vmem>>, vector<1x32x8xf32>
      %192 = vector.shape_cast %191 : vector<1x32x8xf32> to vector<32x8xf32>
      %cst_143 = arith.constant dense<0.000000e+00> : vector<8x8xf32>
      %193 = tpu.matmul %150, %192, %cst_143 {dimension_numbers = #tpu.dot_dimension_numbers<[1], [0], [0], [1], [0, 0, 1, 1], [], []>} : vector<8x32xf32>, vector<32x8xf32>, vector<8x8xf32> -> vector<8x8xf32>
      %c2_144 = arith.constant 2 : index
      %c0_145 = arith.constant 0 : index
      %c0_146 = arith.constant 0 : index
      %194 = vector.load %arg6[%c2_144, %c0_145, %c0_146] : memref<4x1x8xf32, #tpu.memory_space<vmem>>, vector<1x1x8xf32>
      %195 = vector.shape_cast %194 : vector<1x1x8xf32> to vector<1x8xf32>
      %196 = vector.broadcast %195 : vector<1x8xf32> to vector<8x8xf32>
      %197 = arith.addf %193, %196 : vector<8x8xf32>
      %c2_147 = arith.constant 2 : index
      %c0_148 = arith.constant 0 : index
      %c0_149 = arith.constant 0 : index
      %198 = vector.load %arg7[%c2_147, %c0_148, %c0_149] : memref<4x32x8xf32, #tpu.memory_space<vmem>>, vector<1x32x8xf32>
      %199 = vector.shape_cast %198 : vector<1x32x8xf32> to vector<32x8xf32>
      %cst_150 = arith.constant dense<0.000000e+00> : vector<8x8xf32>
      %200 = tpu.matmul %150, %199, %cst_150 {dimension_numbers = #tpu.dot_dimension_numbers<[1], [0], [0], [1], [0, 0, 1, 1], [], []>} : vector<8x32xf32>, vector<32x8xf32>, vector<8x8xf32> -> vector<8x8xf32>
      %c2_151 = arith.constant 2 : index
      %c0_152 = arith.constant 0 : index
      %c0_153 = arith.constant 0 : index
      %201 = vector.load %arg8[%c2_151, %c0_152, %c0_153] : memref<4x1x8xf32, #tpu.memory_space<vmem>>, vector<1x1x8xf32>
      %202 = vector.shape_cast %201 : vector<1x1x8xf32> to vector<1x8xf32>
      %203 = vector.broadcast %202 : vector<1x8xf32> to vector<8x8xf32>
      %204 = arith.addf %200, %203 : vector<8x8xf32>
      %c2_154 = arith.constant 2 : index
      %c0_155 = arith.constant 0 : index
      %c0_156 = arith.constant 0 : index
      %205 = vector.load %arg13[%c2_154, %c0_155, %c0_156] : memref<4x8x8xf32, #tpu.memory_space<vmem>>, vector<1x8x8xf32>
      %206 = vector.shape_cast %205 : vector<1x8x8xf32> to vector<8x8xf32>
      %207 = vector.shape_cast %197 : vector<8x8xf32> to vector<1x8x8xf32>
      tpu.vector_store %arg13[%c2_154, %c0_155, %c0_156], %207 {strides = array<i32>} : memref<4x8x8xf32, #tpu.memory_space<vmem>>, vector<1x8x8xf32>,
      %c2_157 = arith.constant 2 : index
      %c0_158 = arith.constant 0 : index
      %c0_159 = arith.constant 0 : index
      %208 = vector.load %arg14[%c2_157, %c0_158, %c0_159] : memref<4x8x8xf32, #tpu.memory_space<vmem>>, vector<1x8x8xf32>
      %209 = vector.shape_cast %208 : vector<1x8x8xf32> to vector<8x8xf32>
      %210 = vector.shape_cast %204 : vector<8x8xf32> to vector<1x8x8xf32>
      tpu.vector_store %arg14[%c2_157, %c0_158, %c0_159], %210 {strides = array<i32>} : memref<4x8x8xf32, #tpu.memory_space<vmem>>, vector<1x8x8xf32>,
      %c3_160 = arith.constant 3 : index
      %c0_161 = arith.constant 0 : index
      %c0_162 = arith.constant 0 : index
      %211 = vector.load %arg5[%c3_160, %c0_161, %c0_162] : memref<4x32x8xf32, #tpu.memory_space<vmem>>, vector<1x32x8xf32>
      %212 = vector.shape_cast %211 : vector<1x32x8xf32> to vector<32x8xf32>
      %cst_163 = arith.constant dense<0.000000e+00> : vector<8x8xf32>
      %213 = tpu.matmul %150, %212, %cst_163 {dimension_numbers = #tpu.dot_dimension_numbers<[1], [0], [0], [1], [0, 0, 1, 1], [], []>} : vector<8x32xf32>, vector<32x8xf32>, vector<8x8xf32> -> vector<8x8xf32>
      %c3_164 = arith.constant 3 : index
      %c0_165 = arith.constant 0 : index
      %c0_166 = arith.constant 0 : index
      %214 = vector.load %arg6[%c3_164, %c0_165, %c0_166] : memref<4x1x8xf32, #tpu.memory_space<vmem>>, vector<1x1x8xf32>
      %215 = vector.shape_cast %214 : vector<1x1x8xf32> to vector<1x8xf32>
      %216 = vector.broadcast %215 : vector<1x8xf32> to vector<8x8xf32>
      %217 = arith.addf %213, %216 : vector<8x8xf32>
      %c3_167 = arith.constant 3 : index
      %c0_168 = arith.constant 0 : index
      %c0_169 = arith.constant 0 : index
      %218 = vector.load %arg7[%c3_167, %c0_168, %c0_169] : memref<4x32x8xf32, #tpu.memory_space<vmem>>, vector<1x32x8xf32>
      %219 = vector.shape_cast %218 : vector<1x32x8xf32> to vector<32x8xf32>
      %cst_170 = arith.constant dense<0.000000e+00> : vector<8x8xf32>
      %220 = tpu.matmul %150, %219, %cst_170 {dimension_numbers = #tpu.dot_dimension_numbers<[1], [0], [0], [1], [0, 0, 1, 1], [], []>} : vector<8x32xf32>, vector<32x8xf32>, vector<8x8xf32> -> vector<8x8xf32>
      %c3_171 = arith.constant 3 : index
      %c0_172 = arith.constant 0 : index
      %c0_173 = arith.constant 0 : index
      %221 = vector.load %arg8[%c3_171, %c0_172, %c0_173] : memref<4x1x8xf32, #tpu.memory_space<vmem>>, vector<1x1x8xf32>
      %222 = vector.shape_cast %221 : vector<1x1x8xf32> to vector<1x8xf32>
      %223 = vector.broadcast %222 : vector<1x8xf32> to vector<8x8xf32>
      %224 = arith.addf %220, %223 : vector<8x8xf32>
      %c3_174 = arith.constant 3 : index
      %c0_175 = arith.constant 0 : index
      %c0_176 = arith.constant 0 : index
      %225 = vector.load %arg13[%c3_174, %c0_175, %c0_176] : memref<4x8x8xf32, #tpu.memory_space<vmem>>, vector<1x8x8xf32>
      %226 = vector.shape_cast %225 : vector<1x8x8xf32> to vector<8x8xf32>
      %227 = vector.shape_cast %217 : vector<8x8xf32> to vector<1x8x8xf32>
      tpu.vector_store %arg13[%c3_174, %c0_175, %c0_176], %227 {strides = array<i32>} : memref<4x8x8xf32, #tpu.memory_space<vmem>>, vector<1x8x8xf32>,
      %c3_177 = arith.constant 3 : index
      %c0_178 = arith.constant 0 : index
      %c0_179 = arith.constant 0 : index
      %228 = vector.load %arg14[%c3_177, %c0_178, %c0_179] : memref<4x8x8xf32, #tpu.memory_space<vmem>>, vector<1x8x8xf32>
      %229 = vector.shape_cast %228 : vector<1x8x8xf32> to vector<8x8xf32>
      %230 = vector.shape_cast %224 : vector<8x8xf32> to vector<1x8x8xf32>
      tpu.vector_store %arg14[%c3_177, %c0_178, %c0_179], %230 {strides = array<i32>} : memref<4x8x8xf32, #tpu.memory_space<vmem>>, vector<1x8x8xf32>,
    } else {
    }
    %c8_i32 = arith.constant 8 : i32
    %3 = arith.muli %arg1, %c8_i32 : i32
    %4 = tpu.assume_multiple %3, 8 : i32
    %c0 = arith.constant 0 : index
    %5 = arith.index_cast %4 : i32 to index
    %c0_1 = arith.constant 0 : index
    %6 = vector.load %arg2[%c0, %5, %c0_1] : memref<1x8x32xf32, #tpu.memory_space<vmem>>, vector<1x8x32xf32>
    %7 = vector.shape_cast %6 : vector<1x8x32xf32> to vector<8x32xf32>
    %cst = arith.constant 0.000000e+00 : f32
    %8 = vector.broadcast %cst : f32 to vector<8x32xf32>
    %cst_2 = arith.constant 0.000000e+00 : f32
    %9 = vector.broadcast %cst_2 : f32 to vector<8x8xf32>
    %c0_3 = arith.constant 0 : index
    %c0_4 = arith.constant 0 : index
    %c0_5 = arith.constant 0 : index
    %10 = vector.load %arg3[%c0_3, %c0_4, %c0_5] : memref<4x32x8xf32, #tpu.memory_space<vmem>>, vector<1x32x8xf32>
    %11 = vector.shape_cast %10 : vector<1x32x8xf32> to vector<32x8xf32>
    %cst_6 = arith.constant dense<0.000000e+00> : vector<8x8xf32>
    %12 = tpu.matmul %7, %11, %cst_6 {dimension_numbers = #tpu.dot_dimension_numbers<[1], [0], [0], [1], [0, 0, 1, 1], [], []>} : vector<8x32xf32>, vector<32x8xf32>, vector<8x8xf32> -> vector<8x8xf32>
    %c0_7 = arith.constant 0 : index
    %c0_8 = arith.constant 0 : index
    %c0_9 = arith.constant 0 : index
    %13 = vector.load %arg4[%c0_7, %c0_8, %c0_9] : memref<4x1x8xf32, #tpu.memory_space<vmem>>, vector<1x1x8xf32>
    %14 = vector.shape_cast %13 : vector<1x1x8xf32> to vector<1x8xf32>
    %15 = vector.broadcast %14 : vector<1x8xf32> to vector<8x8xf32>
    %16 = arith.addf %12, %15 : vector<8x8xf32>
    %c0_10 = arith.constant 0 : index
    %c0_11 = arith.constant 0 : index
    %c0_12 = arith.constant 0 : index
    %17 = vector.load %arg13[%c0_10, %c0_11, %c0_12] : memref<4x8x8xf32, #tpu.memory_space<vmem>>, vector<1x8x8xf32>
    %18 = vector.shape_cast %17 : vector<1x8x8xf32> to vector<8x8xf32>
    %cst_13 = arith.constant dense<0.000000e+00> : vector<8x8xf32>
    %19 = tpu.matmul %16, %18, %cst_13 {dimension_numbers = #tpu.dot_dimension_numbers<[1], [1], [0], [0], [0, 0, 1, 0], [], []>} : vector<8x8xf32>, vector<8x8xf32>, vector<8x8xf32> -> vector<8x8xf32>
    %cst_14 = arith.constant dense<0xFF800000> : vector<8xf32>
    %20 = vector.multi_reduction <maximumf>, %19, %cst_14 [1] : vector<8x8xf32> to vector<8xf32>
    %21 = vector.shape_cast %20 : vector<8xf32> to vector<8x1xf32>
    %22 = vector.broadcast %21 : vector<8x1xf32> to vector<8x8xf32>
    %23 = arith.subf %19, %22 : vector<8x8xf32>
    %24 = math.exp %23 : vector<8x8xf32>
    %cst_15 = arith.constant dense<0.000000e+00> : vector<8xf32>
    %25 = vector.multi_reduction <add>, %24, %cst_15 [1] : vector<8x8xf32> to vector<8xf32>
    %26 = vector.shape_cast %25 : vector<8xf32> to vector<8x1xf32>
    %27 = tpu.reciprocal %26 {approx = true} : vector<8x1xf32> -> vector<8x1xf32>
    %28 = arith.mulf %26, %27 : vector<8x1xf32>
    %cst_16 = arith.constant 2.000000e+00 : f32
    %29 = vector.broadcast %cst_16 : f32 to vector<8x1xf32>
    %30 = arith.subf %29, %28 : vector<8x1xf32>
    %31 = arith.mulf %27, %30 : vector<8x1xf32>
    %32 = vector.broadcast %31 : vector<8x1xf32> to vector<8x8xf32>
    %33 = arith.mulf %24, %32 : vector<8x8xf32>
    %34 = arith.addf %9, %33 : vector<8x8xf32>
    %c0_17 = arith.constant 0 : index
    %c0_18 = arith.constant 0 : index
    %c0_19 = arith.constant 0 : index
    %35 = vector.load %arg14[%c0_17, %c0_18, %c0_19] : memref<4x8x8xf32, #tpu.memory_space<vmem>>, vector<1x8x8xf32>
    %36 = vector.shape_cast %35 : vector<1x8x8xf32> to vector<8x8xf32>
    %cst_20 = arith.constant dense<0.000000e+00> : vector<8x8xf32>
    %37 = tpu.matmul %33, %36, %cst_20 {dimension_numbers = #tpu.dot_dimension_numbers<[1], [0], [0], [1], [0, 0, 1, 1], [], []>} : vector<8x8xf32>, vector<8x8xf32>, vector<8x8xf32> -> vector<8x8xf32>
    %c0_21 = arith.constant 0 : index
    %c0_22 = arith.constant 0 : index
    %c0_23 = arith.constant 0 : index
    %38 = vector.load %arg9[%c0_21, %c0_22, %c0_23] : memref<4x8x32xf32, #tpu.memory_space<vmem>>, vector<1x8x32xf32>
    %39 = vector.shape_cast %38 : vector<1x8x32xf32> to vector<8x32xf32>
    %cst_24 = arith.constant dense<0.000000e+00> : vector<8x32xf32>
    %40 = tpu.matmul %37, %39, %cst_24 {dimension_numbers = #tpu.dot_dimension_numbers<[1], [0], [0], [1], [0, 0, 1, 1], [], []>} : vector<8x8xf32>, vector<8x32xf32>, vector<8x32xf32> -> vector<8x32xf32>
    %41 = arith.addf %8, %40 : vector<8x32xf32>
    %c1 = arith.constant 1 : index
    %c0_25 = arith.constant 0 : index
    %c0_26 = arith.constant 0 : index
    %42 = vector.load %arg3[%c1, %c0_25, %c0_26] : memref<4x32x8xf32, #tpu.memory_space<vmem>>, vector<1x32x8xf32>
    %43 = vector.shape_cast %42 : vector<1x32x8xf32> to vector<32x8xf32>
    %cst_27 = arith.constant dense<0.000000e+00> : vector<8x8xf32>
    %44 = tpu.matmul %7, %43, %cst_27 {dimension_numbers = #tpu.dot_dimension_numbers<[1], [0], [0], [1], [0, 0, 1, 1], [], []>} : vector<8x32xf32>, vector<32x8xf32>, vector<8x8xf32> -> vector<8x8xf32>
    %c1_28 = arith.constant 1 : index
    %c0_29 = arith.constant 0 : index
    %c0_30 = arith.constant 0 : index
    %45 = vector.load %arg4[%c1_28, %c0_29, %c0_30] : memref<4x1x8xf32, #tpu.memory_space<vmem>>, vector<1x1x8xf32>
    %46 = vector.shape_cast %45 : vector<1x1x8xf32> to vector<1x8xf32>
    %47 = vector.broadcast %46 : vector<1x8xf32> to vector<8x8xf32>
    %48 = arith.addf %44, %47 : vector<8x8xf32>
    %c1_31 = arith.constant 1 : index
    %c0_32 = arith.constant 0 : index
    %c0_33 = arith.constant 0 : index
    %49 = vector.load %arg13[%c1_31, %c0_32, %c0_33] : memref<4x8x8xf32, #tpu.memory_space<vmem>>, vector<1x8x8xf32>
    %50 = vector.shape_cast %49 : vector<1x8x8xf32> to vector<8x8xf32>
    %cst_34 = arith.constant dense<0.000000e+00> : vector<8x8xf32>
    %51 = tpu.matmul %48, %50, %cst_34 {dimension_numbers = #tpu.dot_dimension_numbers<[1], [1], [0], [0], [0, 0, 1, 0], [], []>} : vector<8x8xf32>, vector<8x8xf32>, vector<8x8xf32> -> vector<8x8xf32>
    %cst_35 = arith.constant dense<0xFF800000> : vector<8xf32>
    %52 = vector.multi_reduction <maximumf>, %51, %cst_35 [1] : vector<8x8xf32> to vector<8xf32>
    %53 = vector.shape_cast %52 : vector<8xf32> to vector<8x1xf32>
    %54 = vector.broadcast %53 : vector<8x1xf32> to vector<8x8xf32>
    %55 = arith.subf %51, %54 : vector<8x8xf32>
    %56 = math.exp %55 : vector<8x8xf32>
    %cst_36 = arith.constant dense<0.000000e+00> : vector<8xf32>
    %57 = vector.multi_reduction <add>, %56, %cst_36 [1] : vector<8x8xf32> to vector<8xf32>
    %58 = vector.shape_cast %57 : vector<8xf32> to vector<8x1xf32>
    %59 = tpu.reciprocal %58 {approx = true} : vector<8x1xf32> -> vector<8x1xf32>
    %60 = arith.mulf %58, %59 : vector<8x1xf32>
    %cst_37 = arith.constant 2.000000e+00 : f32
    %61 = vector.broadcast %cst_37 : f32 to vector<8x1xf32>
    %62 = arith.subf %61, %60 : vector<8x1xf32>
    %63 = arith.mulf %59, %62 : vector<8x1xf32>
    %64 = vector.broadcast %63 : vector<8x1xf32> to vector<8x8xf32>
    %65 = arith.mulf %56, %64 : vector<8x8xf32>
    %66 = arith.addf %34, %65 : vector<8x8xf32>
    %c1_38 = arith.constant 1 : index
    %c0_39 = arith.constant 0 : index
    %c0_40 = arith.constant 0 : index
    %67 = vector.load %arg14[%c1_38, %c0_39, %c0_40] : memref<4x8x8xf32, #tpu.memory_space<vmem>>, vector<1x8x8xf32>
    %68 = vector.shape_cast %67 : vector<1x8x8xf32> to vector<8x8xf32>
    %cst_41 = arith.constant dense<0.000000e+00> : vector<8x8xf32>
    %69 = tpu.matmul %65, %68, %cst_41 {dimension_numbers = #tpu.dot_dimension_numbers<[1], [0], [0], [1], [0, 0, 1, 1], [], []>} : vector<8x8xf32>, vector<8x8xf32>, vector<8x8xf32> -> vector<8x8xf32>
    %c1_42 = arith.constant 1 : index
    %c0_43 = arith.constant 0 : index
    %c0_44 = arith.constant 0 : index
    %70 = vector.load %arg9[%c1_42, %c0_43, %c0_44] : memref<4x8x32xf32, #tpu.memory_space<vmem>>, vector<1x8x32xf32>
    %71 = vector.shape_cast %70 : vector<1x8x32xf32> to vector<8x32xf32>
    %cst_45 = arith.constant dense<0.000000e+00> : vector<8x32xf32>
    %72 = tpu.matmul %69, %71, %cst_45 {dimension_numbers = #tpu.dot_dimension_numbers<[1], [0], [0], [1], [0, 0, 1, 1], [], []>} : vector<8x8xf32>, vector<8x32xf32>, vector<8x32xf32> -> vector<8x32xf32>
    %73 = arith.addf %41, %72 : vector<8x32xf32>
    %c2 = arith.constant 2 : index
    %c0_46 = arith.constant 0 : index
    %c0_47 = arith.constant 0 : index
    %74 = vector.load %arg3[%c2, %c0_46, %c0_47] : memref<4x32x8xf32, #tpu.memory_space<vmem>>, vector<1x32x8xf32>
    %75 = vector.shape_cast %74 : vector<1x32x8xf32> to vector<32x8xf32>
    %cst_48 = arith.constant dense<0.000000e+00> : vector<8x8xf32>
    %76 = tpu.matmul %7, %75, %cst_48 {dimension_numbers = #tpu.dot_dimension_numbers<[1], [0], [0], [1], [0, 0, 1, 1], [], []>} : vector<8x32xf32>, vector<32x8xf32>, vector<8x8xf32> -> vector<8x8xf32>
    %c2_49 = arith.constant 2 : index
    %c0_50 = arith.constant 0 : index
    %c0_51 = arith.constant 0 : index
    %77 = vector.load %arg4[%c2_49, %c0_50, %c0_51] : memref<4x1x8xf32, #tpu.memory_space<vmem>>, vector<1x1x8xf32>
    %78 = vector.shape_cast %77 : vector<1x1x8xf32> to vector<1x8xf32>
    %79 = vector.broadcast %78 : vector<1x8xf32> to vector<8x8xf32>
    %80 = arith.addf %76, %79 : vector<8x8xf32>
    %c2_52 = arith.constant 2 : index
    %c0_53 = arith.constant 0 : index
    %c0_54 = arith.constant 0 : index
    %81 = vector.load %arg13[%c2_52, %c0_53, %c0_54] : memref<4x8x8xf32, #tpu.memory_space<vmem>>, vector<1x8x8xf32>
    %82 = vector.shape_cast %81 : vector<1x8x8xf32> to vector<8x8xf32>
    %cst_55 = arith.constant dense<0.000000e+00> : vector<8x8xf32>
    %83 = tpu.matmul %80, %82, %cst_55 {dimension_numbers = #tpu.dot_dimension_numbers<[1], [1], [0], [0], [0, 0, 1, 0], [], []>} : vector<8x8xf32>, vector<8x8xf32>, vector<8x8xf32> -> vector<8x8xf32>
    %cst_56 = arith.constant dense<0xFF800000> : vector<8xf32>
    %84 = vector.multi_reduction <maximumf>, %83, %cst_56 [1] : vector<8x8xf32> to vector<8xf32>
    %85 = vector.shape_cast %84 : vector<8xf32> to vector<8x1xf32>
    %86 = vector.broadcast %85 : vector<8x1xf32> to vector<8x8xf32>
    %87 = arith.subf %83, %86 : vector<8x8xf32>
    %88 = math.exp %87 : vector<8x8xf32>
    %cst_57 = arith.constant dense<0.000000e+00> : vector<8xf32>
    %89 = vector.multi_reduction <add>, %88, %cst_57 [1] : vector<8x8xf32> to vector<8xf32>
    %90 = vector.shape_cast %89 : vector<8xf32> to vector<8x1xf32>
    %91 = tpu.reciprocal %90 {approx = true} : vector<8x1xf32> -> vector<8x1xf32>
    %92 = arith.mulf %90, %91 : vector<8x1xf32>
    %cst_58 = arith.constant 2.000000e+00 : f32
    %93 = vector.broadcast %cst_58 : f32 to vector<8x1xf32>
    %94 = arith.subf %93, %92 : vector<8x1xf32>
    %95 = arith.mulf %91, %94 : vector<8x1xf32>
    %96 = vector.broadcast %95 : vector<8x1xf32> to vector<8x8xf32>
    %97 = arith.mulf %88, %96 : vector<8x8xf32>
    %98 = arith.addf %66, %97 : vector<8x8xf32>
    %c2_59 = arith.constant 2 : index
    %c0_60 = arith.constant 0 : index
    %c0_61 = arith.constant 0 : index
    %99 = vector.load %arg14[%c2_59, %c0_60, %c0_61] : memref<4x8x8xf32, #tpu.memory_space<vmem>>, vector<1x8x8xf32>
    %100 = vector.shape_cast %99 : vector<1x8x8xf32> to vector<8x8xf32>
    %cst_62 = arith.constant dense<0.000000e+00> : vector<8x8xf32>
    %101 = tpu.matmul %97, %100, %cst_62 {dimension_numbers = #tpu.dot_dimension_numbers<[1], [0], [0], [1], [0, 0, 1, 1], [], []>} : vector<8x8xf32>, vector<8x8xf32>, vector<8x8xf32> -> vector<8x8xf32>
    %c2_63 = arith.constant 2 : index
    %c0_64 = arith.constant 0 : index
    %c0_65 = arith.constant 0 : index
    %102 = vector.load %arg9[%c2_63, %c0_64, %c0_65] : memref<4x8x32xf32, #tpu.memory_space<vmem>>, vector<1x8x32xf32>
    %103 = vector.shape_cast %102 : vector<1x8x32xf32> to vector<8x32xf32>
    %cst_66 = arith.constant dense<0.000000e+00> : vector<8x32xf32>
    %104 = tpu.matmul %101, %103, %cst_66 {dimension_numbers = #tpu.dot_dimension_numbers<[1], [0], [0], [1], [0, 0, 1, 1], [], []>} : vector<8x8xf32>, vector<8x32xf32>, vector<8x32xf32> -> vector<8x32xf32>
    %105 = arith.addf %73, %104 : vector<8x32xf32>
    %c3 = arith.constant 3 : index
    %c0_67 = arith.constant 0 : index
    %c0_68 = arith.constant 0 : index
    %106 = vector.load %arg3[%c3, %c0_67, %c0_68] : memref<4x32x8xf32, #tpu.memory_space<vmem>>, vector<1x32x8xf32>
    %107 = vector.shape_cast %106 : vector<1x32x8xf32> to vector<32x8xf32>
    %cst_69 = arith.constant dense<0.000000e+00> : vector<8x8xf32>
    %108 = tpu.matmul %7, %107, %cst_69 {dimension_numbers = #tpu.dot_dimension_numbers<[1], [0], [0], [1], [0, 0, 1, 1], [], []>} : vector<8x32xf32>, vector<32x8xf32>, vector<8x8xf32> -> vector<8x8xf32>
    %c3_70 = arith.constant 3 : index
    %c0_71 = arith.constant 0 : index
    %c0_72 = arith.constant 0 : index
    %109 = vector.load %arg4[%c3_70, %c0_71, %c0_72] : memref<4x1x8xf32, #tpu.memory_space<vmem>>, vector<1x1x8xf32>
    %110 = vector.shape_cast %109 : vector<1x1x8xf32> to vector<1x8xf32>
    %111 = vector.broadcast %110 : vector<1x8xf32> to vector<8x8xf32>
    %112 = arith.addf %108, %111 : vector<8x8xf32>
    %c3_73 = arith.constant 3 : index
    %c0_74 = arith.constant 0 : index
    %c0_75 = arith.constant 0 : index
    %113 = vector.load %arg13[%c3_73, %c0_74, %c0_75] : memref<4x8x8xf32, #tpu.memory_space<vmem>>, vector<1x8x8xf32>
    %114 = vector.shape_cast %113 : vector<1x8x8xf32> to vector<8x8xf32>
    %cst_76 = arith.constant dense<0.000000e+00> : vector<8x8xf32>
    %115 = tpu.matmul %112, %114, %cst_76 {dimension_numbers = #tpu.dot_dimension_numbers<[1], [1], [0], [0], [0, 0, 1, 0], [], []>} : vector<8x8xf32>, vector<8x8xf32>, vector<8x8xf32> -> vector<8x8xf32>
    %cst_77 = arith.constant dense<0xFF800000> : vector<8xf32>
    %116 = vector.multi_reduction <maximumf>, %115, %cst_77 [1] : vector<8x8xf32> to vector<8xf32>
    %117 = vector.shape_cast %116 : vector<8xf32> to vector<8x1xf32>
    %118 = vector.broadcast %117 : vector<8x1xf32> to vector<8x8xf32>
    %119 = arith.subf %115, %118 : vector<8x8xf32>
    %120 = math.exp %119 : vector<8x8xf32>
    %cst_78 = arith.constant dense<0.000000e+00> : vector<8xf32>
    %121 = vector.multi_reduction <add>, %120, %cst_78 [1] : vector<8x8xf32> to vector<8xf32>
    %122 = vector.shape_cast %121 : vector<8xf32> to vector<8x1xf32>
    %123 = tpu.reciprocal %122 {approx = true} : vector<8x1xf32> -> vector<8x1xf32>
    %124 = arith.mulf %122, %123 : vector<8x1xf32>
    %cst_79 = arith.constant 2.000000e+00 : f32
    %125 = vector.broadcast %cst_79 : f32 to vector<8x1xf32>
    %126 = arith.subf %125, %124 : vector<8x1xf32>
    %127 = arith.mulf %123, %126 : vector<8x1xf32>
    %128 = vector.broadcast %127 : vector<8x1xf32> to vector<8x8xf32>
    %129 = arith.mulf %120, %128 : vector<8x8xf32>
    %130 = arith.addf %98, %129 : vector<8x8xf32>
    %c3_80 = arith.constant 3 : index
    %c0_81 = arith.constant 0 : index
    %c0_82 = arith.constant 0 : index
    %131 = vector.load %arg14[%c3_80, %c0_81, %c0_82] : memref<4x8x8xf32, #tpu.memory_space<vmem>>, vector<1x8x8xf32>
    %132 = vector.shape_cast %131 : vector<1x8x8xf32> to vector<8x8xf32>
    %cst_83 = arith.constant dense<0.000000e+00> : vector<8x8xf32>
    %133 = tpu.matmul %129, %132, %cst_83 {dimension_numbers = #tpu.dot_dimension_numbers<[1], [0], [0], [1], [0, 0, 1, 1], [], []>} : vector<8x8xf32>, vector<8x8xf32>, vector<8x8xf32> -> vector<8x8xf32>
    %c3_84 = arith.constant 3 : index
    %c0_85 = arith.constant 0 : index
    %c0_86 = arith.constant 0 : index
    %134 = vector.load %arg9[%c3_84, %c0_85, %c0_86] : memref<4x8x32xf32, #tpu.memory_space<vmem>>, vector<1x8x32xf32>
    %135 = vector.shape_cast %134 : vector<1x8x32xf32> to vector<8x32xf32>
    %cst_87 = arith.constant dense<0.000000e+00> : vector<8x32xf32>
    %136 = tpu.matmul %133, %135, %cst_87 {dimension_numbers = #tpu.dot_dimension_numbers<[1], [0], [0], [1], [0, 0, 1, 1], [], []>} : vector<8x8xf32>, vector<8x32xf32>, vector<8x32xf32> -> vector<8x32xf32>
    %137 = arith.addf %105, %136 : vector<8x32xf32>
    %c0_88 = arith.constant 0 : index
    %c0_89 = arith.constant 0 : index
    %138 = vector.load %arg10[%c0_88, %c0_89] : memref<1x32xf32, #tpu.memory_space<vmem>>, vector<1x32xf32>
    %139 = vector.broadcast %138 : vector<1x32xf32> to vector<8x32xf32>
    %140 = arith.addf %137, %139 : vector<8x32xf32>
    %c0_90 = arith.constant 0 : index
    %c0_91 = arith.constant 0 : index
    %c0_92 = arith.constant 0 : index
    %141 = vector.load %arg11[%c0_90, %c0_91, %c0_92] : memref<1x8x32xf32, #tpu.memory_space<vmem>>, vector<1x8x32xf32>
    %142 = vector.shape_cast %141 : vector<1x8x32xf32> to vector<8x32xf32>
    %143 = vector.shape_cast %140 : vector<8x32xf32> to vector<1x8x32xf32>
    tpu.vector_store %arg11[%c0_90, %c0_91, %c0_92], %143 {strides = array<i32>} : memref<1x8x32xf32, #tpu.memory_space<vmem>>, vector<1x8x32xf32>,
    %cst_93 = arith.constant 2.500000e-01 : f32
    %144 = vector.broadcast %cst_93 : f32 to vector<8x8xf32>
    %145 = arith.mulf %130, %144 : vector<8x8xf32>
    %c0_94 = arith.constant 0 : index
    %c0_95 = arith.constant 0 : index
    %c0_96 = arith.constant 0 : index
    %146 = vector.load %arg12[%c0_94, %c0_95, %c0_96] : memref<1x8x8xf32, #tpu.memory_space<vmem>>, vector<1x8x8xf32>
    %147 = vector.shape_cast %146 : vector<1x8x8xf32> to vector<8x8xf32>
    %148 = vector.shape_cast %145 : vector<8x8xf32> to vector<1x8x8xf32>
    tpu.vector_store %arg12[%c0_94, %c0_95, %c0_96], %148 {strides = array<i32>} : memref<1x8x8xf32, #tpu.memory_space<vmem>>, vector<1x8x8xf32>,
    return
  }
  func.func @transform_0(%arg0: i32, %arg1: i32) -> (i32, i32, i32) {
    %c0_i32 = arith.constant 0 : i32
    %c0_i32_0 = arith.constant 0 : i32
    %c0_i32_1 = arith.constant 0 : i32
    return %arg0, %c0_i32, %c0_i32_0 : i32, i32, i32
  }
  func.func @transform_1(%arg0: i32, %arg1: i32) -> (i32, i32, i32) {
    %c0_i32 = arith.constant 0 : i32
    %c0_i32_0 = arith.constant 0 : i32
    %c0_i32_1 = arith.constant 0 : i32
    %c0_i32_2 = arith.constant 0 : i32
    return %c0_i32, %c0_i32_0, %c0_i32_1 : i32, i32, i32
  }
  func.func @transform_2(%arg0: i32, %arg1: i32) -> (i32, i32, i32) {
    %c0_i32 = arith.constant 0 : i32
    %c0_i32_0 = arith.constant 0 : i32
    %c0_i32_1 = arith.constant 0 : i32
    %c0_i32_2 = arith.constant 0 : i32
    return %c0_i32, %c0_i32_0, %c0_i32_1 : i32, i32, i32
  }
  func.func @transform_3(%arg0: i32, %arg1: i32) -> (i32, i32, i32) {
    %c0_i32 = arith.constant 0 : i32
    %c0_i32_0 = arith.constant 0 : i32
    %c0_i32_1 = arith.constant 0 : i32
    %c0_i32_2 = arith.constant 0 : i32
    return %c0_i32, %c0_i32_0, %c0_i32_1 : i32, i32, i32
  }
  func.func @transform_4(%arg0: i32, %arg1: i32) -> (i32, i32, i32) {
    %c0_i32 = arith.constant 0 : i32
    %c0_i32_0 = arith.constant 0 : i32
    %c0_i32_1 = arith.constant 0 : i32
    %c0_i32_2 = arith.constant 0 : i32
    return %c0_i32, %c0_i32_0, %c0_i32_1 : i32, i32, i32
  }
  func.func @transform_5(%arg0: i32, %arg1: i32) -> (i32, i32, i32) {
    %c0_i32 = arith.constant 0 : i32
    %c0_i32_0 = arith.constant 0 : i32
    %c0_i32_1 = arith.constant 0 : i32
    %c0_i32_2 = arith.constant 0 : i32
    return %c0_i32, %c0_i32_0, %c0_i32_1 : i32, i32, i32
  }
  func.func @transform_6(%arg0: i32, %arg1: i32) -> (i32, i32, i32) {
    %c0_i32 = arith.constant 0 : i32
    %c0_i32_0 = arith.constant 0 : i32
    %c0_i32_1 = arith.constant 0 : i32
    %c0_i32_2 = arith.constant 0 : i32
    return %c0_i32, %c0_i32_0, %c0_i32_1 : i32, i32, i32
  }
  func.func @transform_7(%arg0: i32, %arg1: i32) -> (i32, i32, i32) {
    %c0_i32 = arith.constant 0 : i32
    %c0_i32_0 = arith.constant 0 : i32
    %c0_i32_1 = arith.constant 0 : i32
    %c0_i32_2 = arith.constant 0 : i32
    return %c0_i32, %c0_i32_0, %c0_i32_1 : i32, i32, i32
  }
  func.func @transform_8(%arg0: i32, %arg1: i32) -> (i32, i32) {
    %c0_i32 = arith.constant 0 : i32
    %c0_i32_0 = arith.constant 0 : i32
    %c0_i32_1 = arith.constant 0 : i32
    return %c0_i32, %c0_i32_0 : i32, i32
  }
  func.func @transform_9(%arg0: i32, %arg1: i32) -> (i32, i32, i32) {
    %c0_i32 = arith.constant 0 : i32
    %c0_i32_0 = arith.constant 0 : i32
    return %arg0, %arg1, %c0_i32 : i32, i32, i32
  }
  func.func @transform_10(%arg0: i32, %arg1: i32) -> (i32, i32, i32) {
    %c0_i32 = arith.constant 0 : i32
    %c0_i32_0 = arith.constant 0 : i32
    return %arg0, %arg1, %c0_i32 : i32, i32, i32
  }
}

module attributes {stable_mosaic.version = 11 : i64} {
  func.func @mha_kernel(%arg0: i32, %arg1: i32, %arg2: memref<1x8x32xf32, #tpu.memory_space<vmem>>, %arg3: memref<4x32x8xf32, #tpu.memory_space<vmem>>, %arg4: memref<4x1x8xf32, #tpu.memory_space<vmem>>, %arg5: memref<4x32x8xf32, #tpu.memory_space<vmem>>, %arg6: memref<4x1x8xf32, #tpu.memory_space<vmem>>, %arg7: memref<4x32x8xf32, #tpu.memory_space<vmem>>, %arg8: memref<4x1x8xf32, #tpu.memory_space<vmem>>, %arg9: memref<4x8x32xf32, #tpu.memory_space<vmem>>, %arg10: memref<1x32xf32, #tpu.memory_space<vmem>>, %arg11: memref<1x8x32xf32, #tpu.memory_space<vmem>>, %arg12: memref<1x8x8xf32, #tpu.memory_space<vmem>>, %arg13: memref<4x8x8xf32, #tpu.memory_space<vmem>>, %arg14: memref<4x8x8xf32, #tpu.memory_space<vmem>>) attributes {dimension_semantics = [#tpu.dimension_semantics<parallel>, #tpu.dimension_semantics<arbitrary>], iteration_bounds = array<i64: 2, 1>, scalar_prefetch = 0 : i64, scratch_operands = 2 : i64, tpu.core_type = #tpu.core_type<tc>, window_params = [{transform_indices = @transform_0, window_bounds = array<i64: 1, 8, 32>}, {pipeline_mode = #tpu.pipeline_mode<synchronous>, transform_indices = @transform_1, window_bounds = array<i64: 4, 32, 8>}, {pipeline_mode = #tpu.pipeline_mode<synchronous>, transform_indices = @transform_2, window_bounds = array<i64: 4, 1, 8>}, {pipeline_mode = #tpu.pipeline_mode<synchronous>, transform_indices = @transform_3, window_bounds = array<i64: 4, 32, 8>}, {pipeline_mode = #tpu.pipeline_mode<synchronous>, transform_indices = @transform_4, window_bounds = array<i64: 4, 1, 8>}, {pipeline_mode = #tpu.pipeline_mode<synchronous>, transform_indices = @transform_5, window_bounds = array<i64: 4, 32, 8>}, {pipeline_mode = #tpu.pipeline_mode<synchronous>, transform_indices = @transform_6, window_bounds = array<i64: 4, 1, 8>}, {pipeline_mode = #tpu.pipeline_mode<synchronous>, transform_indices = @transform_7, window_bounds = array<i64: 4, 8, 32>}, {pipeline_mode = #tpu.pipeline_mode<synchronous>, transform_indices = @transform_8, window_bounds = array<i64: 1, 32>}, {transform_indices = @transform_9, window_bounds = array<i64: 1, 8, 32>}, {transform_indices = @transform_10, window_bounds = array<i64: 1, 8, 8>}]} {
    %c0_i32 = arith.constant 0 : i32
    %0 = arith.cmpi eq, %arg1, %c0_i32 : i32
    %1 = arith.extui %0 : i1 to i32
    %c0_i32_0 = arith.constant 0 : i32
    %2 = arith.cmpi ne, %1, %c0_i32_0 : i32
    scf.if %2 {
      %c0_97 = arith.constant 0 : index
      %c0_98 = arith.constant 0 : index
      %c0_99 = arith.constant 0 : index
      %149 = vector.load %arg2[%c0_97, %c0_98, %c0_99] : memref<1x8x32xf32, #tpu.memory_space<vmem>>, vector<1x8x32xf32>
      %150 = vector.shape_cast %149 : vector<1x8x32xf32> to vector<8x32xf32>
      %c0_100 = arith.constant 0 : index
      %c0_101 = arith.constant 0 : index
      %c0_102 = arith.constant 0 : index
      %151 = vector.load %arg5[%c0_100, %c0_101, %c0_102] : memref<4x32x8xf32, #tpu.memory_space<vmem>>, vector<1x32x8xf32>
      %152 = vector.shape_cast %151 : vector<1x32x8xf32> to vector<32x8xf32>
      %cst_103 = arith.constant dense<0.000000e+00> : vector<8x8xf32>
      %153 = tpu.matmul %150, %152, %cst_103 {dimension_numbers = #tpu.dot_dimension_numbers<[1], [0], [0], [1], [0, 0, 1, 1], [], []>} : vector<8x32xf32>, vector<32x8xf32>, vector<8x8xf32> -> vector<8x8xf32>
      %c0_104 = arith.constant 0 : index
      %c0_105 = arith.constant 0 : index
      %c0_106 = arith.constant 0 : index
      %154 = vector.load %arg6[%c0_104, %c0_105, %c0_106] : memref<4x1x8xf32, #tpu.memory_space<vmem>>, vector<1x1x8xf32>
      %155 = vector.shape_cast %154 : vector<1x1x8xf32> to vector<1x8xf32>
      %156 = vector.broadcast %155 : vector<1x8xf32> to vector<8x8xf32>
      %157 = arith.addf %153, %156 : vector<8x8xf32>
      %c0_107 = arith.constant 0 : index
      %c0_108 = arith.constant 0 : index
      %c0_109 = arith.constant 0 : index
      %158 = vector.load %arg7[%c0_107, %c0_108, %c0_109] : memref<4x32x8xf32, #tpu.memory_space<vmem>>, vector<1x32x8xf32>
      %159 = vector.shape_cast %158 : vector<1x32x8xf32> to vector<32x8xf32>
      %cst_110 = arith.constant dense<0.000000e+00> : vector<8x8xf32>
      %160 = tpu.matmul %150, %159, %cst_110 {dimension_numbers = #tpu.dot_dimension_numbers<[1], [0], [0], [1], [0, 0, 1, 1], [], []>} : vector<8x32xf32>, vector<32x8xf32>, vector<8x8xf32> -> vector<8x8xf32>
      %c0_111 = arith.constant 0 : index
      %c0_112 = arith.constant 0 : index
      %c0_113 = arith.constant 0 : index
      %161 = vector.load %arg8[%c0_111, %c0_112, %c0_113] : memref<4x1x8xf32, #tpu.memory_space<vmem>>, vector<1x1x8xf32>
      %162 = vector.shape_cast %161 : vector<1x1x8xf32> to vector<1x8xf32>
      %163 = vector.broadcast %162 : vector<1x8xf32> to vector<8x8xf32>
      %164 = arith.addf %160, %163 : vector<8x8xf32>
      %c0_114 = arith.constant 0 : index
      %c0_115 = arith.constant 0 : index
      %c0_116 = arith.constant 0 : index
      %165 = vector.load %arg13[%c0_114, %c0_115, %c0_116] : memref<4x8x8xf32, #tpu.memory_space<vmem>>, vector<1x8x8xf32>
      %166 = vector.shape_cast %165 : vector<1x8x8xf32> to vector<8x8xf32>
      %167 = vector.shape_cast %157 : vector<8x8xf32> to vector<1x8x8xf32>
      tpu.vector_store %arg13[%c0_114, %c0_115, %c0_116], %167 {strides = array<i32>} : memref<4x8x8xf32, #tpu.memory_space<vmem>>, vector<1x8x8xf32>,
      %c0_117 = arith.constant 0 : index
      %c0_118 = arith.constant 0 : index
      %c0_119 = arith.constant 0 : index
      %168 = vector.load %arg14[%c0_117, %c0_118, %c0_119] : memref<4x8x8xf32, #tpu.memory_space<vmem>>, vector<1x8x8xf32>
      %169 = vector.shape_cast %168 : vector<1x8x8xf32> to vector<8x8xf32>
      %170 = vector.shape_cast %164 : vector<8x8xf32> to vector<1x8x8xf32>
      tpu.vector_store %arg14[%c0_117, %c0_118, %c0_119], %170 {strides = array<i32>} : memref<4x8x8xf32, #tpu.memory_space<vmem>>, vector<1x8x8xf32>,
      %c1_120 = arith.constant 1 : index
      %c0_121 = arith.constant 0 : index
      %c0_122 = arith.constant 0 : index
      %171 = vector.load %arg5[%c1_120, %c0_121, %c0_122] : memref<4x32x8xf32, #tpu.memory_space<vmem>>, vector<1x32x8xf32>
      %172 = vector.shape_cast %171 : vector<1x32x8xf32> to vector<32x8xf32>
      %cst_123 = arith.constant dense<0.000000e+00> : vector<8x8xf32>
      %173 = tpu.matmul %150, %172, %cst_123 {dimension_numbers = #tpu.dot_dimension_numbers<[1], [0], [0], [1], [0, 0, 1, 1], [], []>} : vector<8x32xf32>, vector<32x8xf32>, vector<8x8xf32> -> vector<8x8xf32>
      %c1_124 = arith.constant 1 : index
      %c0_125 = arith.constant 0 : index
      %c0_126 = arith.constant 0 : index
      %174 = vector.load %arg6[%c1_124, %c0_125, %c0_126] : memref<4x1x8xf32, #tpu.memory_space<vmem>>, vector<1x1x8xf32>
      %175 = vector.shape_cast %174 : vector<1x1x8xf32> to vector<1x8xf32>
      %176 = vector.broadcast %175 : vector<1x8xf32> to vector<8x8xf32>
      %177 = arith.addf %173, %176 : vector<8x8xf32>
      %c1_127 = arith.constant 1 : index
      %c0_128 = arith.constant 0 : index
      %c0_129 = arith.constant 0 : index
      %178 = vector.load %arg7[%c1_127, %c0_128, %c0_129] : memref<4x32x8xf32, #tpu.memory_space<vmem>>, vector<1x32x8xf32>
      %179 = vector.shape_cast %178 : vector<1x32x8xf32> to vector<32x8xf32>
      %cst_130 = arith.constant dense<0.000000e+00> : vector<8x8xf32>
      %180 = tpu.matmul %150, %179, %cst_130 {dimension_numbers = #tpu.dot_dimension_numbers<[1], [0], [0], [1], [0, 0, 1, 1], [], []>} : vector<8x32xf32>, vector<32x8xf32>, vector<8x8xf32> -> vector<8x8xf32>
      %c1_131 = arith.constant 1 : index
      %c0_132 = arith.constant 0 : index
      %c0_133 = arith.constant 0 : index
      %181 = vector.load %arg8[%c1_131, %c0_132, %c0_133] : memref<4x1x8xf32, #tpu.memory_space<vmem>>, vector<1x1x8xf32>
      %182 = vector.shape_cast %181 : vector<1x1x8xf32> to vector<1x8xf32>
      %183 = vector.broadcast %182 : vector<1x8xf32> to vector<8x8xf32>
      %184 = arith.addf %180, %183 : vector<8x8xf32>
      %c1_134 = arith.constant 1 : index
      %c0_135 = arith.constant 0 : index
      %c0_136 = arith.constant 0 : index
      %185 = vector.load %arg13[%c1_134, %c0_135, %c0_136] : memref<4x8x8xf32, #tpu.memory_space<vmem>>, vector<1x8x8xf32>
      %186 = vector.shape_cast %185 : vector<1x8x8xf32> to vector<8x8xf32>
      %187 = vector.shape_cast %177 : vector<8x8xf32> to vector<1x8x8xf32>
      tpu.vector_store %arg13[%c1_134, %c0_135, %c0_136], %187 {strides = array<i32>} : memref<4x8x8xf32, #tpu.memory_space<vmem>>, vector<1x8x8xf32>,
      %c1_137 = arith.constant 1 : index
      %c0_138 = arith.constant 0 : index
      %c0_139 = arith.constant 0 : index
      %188 = vector.load %arg14[%c1_137, %c0_138, %c0_139] : memref<4x8x8xf32, #tpu.memory_space<vmem>>, vector<1x8x8xf32>
      %189 = vector.shape_cast %188 : vector<1x8x8xf32> to vector<8x8xf32>
      %190 = vector.shape_cast %184 : vector<8x8xf32> to vector<1x8x8xf32>
      tpu.vector_store %arg14[%c1_137, %c0_138, %c0_139], %190 {strides = array<i32>} : memref<4x8x8xf32, #tpu.memory_space<vmem>>, vector<1x8x8xf32>,
      %c2_140 = arith.constant 2 : index
      %c0_141 = arith.constant 0 : index
      %c0_142 = arith.constant 0 : index
      %191 = vector.load %arg5[%c2_140, %c0_141, %c0_142] : memref<4x32x8xf32, #tpu.memory_space<vmem>>, vector<1x32x8xf32>
      %192 = vector.shape_cast %191 : vector<1x32x8xf32> to vector<32x8xf32>
      %cst_143 = arith.constant dense<0.000000e+00> : vector<8x8xf32>
      %193 = tpu.matmul %150, %192, %cst_143 {dimension_numbers = #tpu.dot_dimension_numbers<[1], [0], [0], [1], [0, 0, 1, 1], [], []>} : vector<8x32xf32>, vector<32x8xf32>, vector<8x8xf32> -> vector<8x8xf32>
      %c2_144 = arith.constant 2 : index
      %c0_145 = arith.constant 0 : index
      %c0_146 = arith.constant 0 : index
      %194 = vector.load %arg6[%c2_144, %c0_145, %c0_146] : memref<4x1x8xf32, #tpu.memory_space<vmem>>, vector<1x1x8xf32>
      %195 = vector.shape_cast %194 : vector<1x1x8xf32> to vector<1x8xf32>
      %196 = vector.broadcast %195 : vector<1x8xf32> to vector<8x8xf32>
      %197 = arith.addf %193, %196 : vector<8x8xf32>
      %c2_147 = arith.constant 2 : index
      %c0_148 = arith.constant 0 : index
      %c0_149 = arith.constant 0 : index
      %198 = vector.load %arg7[%c2_147, %c0_148, %c0_149] : memref<4x32x8xf32, #tpu.memory_space<vmem>>, vector<1x32x8xf32>
      %199 = vector.shape_cast %198 : vector<1x32x8xf32> to vector<32x8xf32>
      %cst_150 = arith.constant dense<0.000000e+00> : vector<8x8xf32>
      %200 = tpu.matmul %150, %199, %cst_150 {dimension_numbers = #tpu.dot_dimension_numbers<[1], [0], [0], [1], [0, 0, 1, 1], [], []>} : vector<8x32xf32>, vector<32x8xf32>, vector<8x8xf32> -> vector<8x8xf32>
      %c2_151 = arith.constant 2 : index
      %c0_152 = arith.constant 0 : index
      %c0_153 = arith.constant 0 : index
      %201 = vector.load %arg8[%c2_151, %c0_152, %c0_153] : memref<4x1x8xf32, #tpu.memory_space<vmem>>, vector<1x1x8xf32>
      %202 = vector.shape_cast %201 : vector<1x1x8xf32> to vector<1x8xf32>
      %203 = vector.broadcast %202 : vector<1x8xf32> to vector<8x8xf32>
      %204 = arith.addf %200, %203 : vector<8x8xf32>
      %c2_154 = arith.constant 2 : index
      %c0_155 = arith.constant 0 : index
      %c0_156 = arith.constant 0 : index
      %205 = vector.load %arg13[%c2_154, %c0_155, %c0_156] : memref<4x8x8xf32, #tpu.memory_space<vmem>>, vector<1x8x8xf32>
      %206 = vector.shape_cast %205 : vector<1x8x8xf32> to vector<8x8xf32>
      %207 = vector.shape_cast %197 : vector<8x8xf32> to vector<1x8x8xf32>
      tpu.vector_store %arg13[%c2_154, %c0_155, %c0_156], %207 {strides = array<i32>} : memref<4x8x8xf32, #tpu.memory_space<vmem>>, vector<1x8x8xf32>,
      %c2_157 = arith.constant 2 : index
      %c0_158 = arith.constant 0 : index
      %c0_159 = arith.constant 0 : index
      %208 = vector.load %arg14[%c2_157, %c0_158, %c0_159] : memref<4x8x8xf32, #tpu.memory_space<vmem>>, vector<1x8x8xf32>
      %209 = vector.shape_cast %208 : vector<1x8x8xf32> to vector<8x8xf32>
      %210 = vector.shape_cast %204 : vector<8x8xf32> to vector<1x8x8xf32>
      tpu.vector_store %arg14[%c2_157, %c0_158, %c0_159], %210 {strides = array<i32>} : memref<4x8x8xf32, #tpu.memory_space<vmem>>, vector<1x8x8xf32>,
      %c3_160 = arith.constant 3 : index
      %c0_161 = arith.constant 0 : index
      %c0_162 = arith.constant 0 : index
      %211 = vector.load %arg5[%c3_160, %c0_161, %c0_162] : memref<4x32x8xf32, #tpu.memory_space<vmem>>, vector<1x32x8xf32>
      %212 = vector.shape_cast %211 : vector<1x32x8xf32> to vector<32x8xf32>
      %cst_163 = arith.constant dense<0.000000e+00> : vector<8x8xf32>
      %213 = tpu.matmul %150, %212, %cst_163 {dimension_numbers = #tpu.dot_dimension_numbers<[1], [0], [0], [1], [0, 0, 1, 1], [], []>} : vector<8x32xf32>, vector<32x8xf32>, vector<8x8xf32> -> vector<8x8xf32>
      %c3_164 = arith.constant 3 : index
      %c0_165 = arith.constant 0 : index
      %c0_166 = arith.constant 0 : index
      %214 = vector.load %arg6[%c3_164, %c0_165, %c0_166] : memref<4x1x8xf32, #tpu.memory_space<vmem>>, vector<1x1x8xf32>
      %215 = vector.shape_cast %214 : vector<1x1x8xf32> to vector<1x8xf32>
      %216 = vector.broadcast %215 : vector<1x8xf32> to vector<8x8xf32>
      %217 = arith.addf %213, %216 : vector<8x8xf32>
      %c3_167 = arith.constant 3 : index
      %c0_168 = arith.constant 0 : index
      %c0_169 = arith.constant 0 : index
      %218 = vector.load %arg7[%c3_167, %c0_168, %c0_169] : memref<4x32x8xf32, #tpu.memory_space<vmem>>, vector<1x32x8xf32>
      %219 = vector.shape_cast %218 : vector<1x32x8xf32> to vector<32x8xf32>
      %cst_170 = arith.constant dense<0.000000e+00> : vector<8x8xf32>
      %220 = tpu.matmul %150, %219, %cst_170 {dimension_numbers = #tpu.dot_dimension_numbers<[1], [0], [0], [1], [0, 0, 1, 1], [], []>} : vector<8x32xf32>, vector<32x8xf32>, vector<8x8xf32> -> vector<8x8xf32>
      %c3_171 = arith.constant 3 : index
      %c0_172 = arith.constant 0 : index
      %c0_173 = arith.constant 0 : index
      %221 = vector.load %arg8[%c3_171, %c0_172, %c0_173] : memref<4x1x8xf32, #tpu.memory_space<vmem>>, vector<1x1x8xf32>
      %222 = vector.shape_cast %221 : vector<1x1x8xf32> to vector<1x8xf32>
      %223 = vector.broadcast %222 : vector<1x8xf32> to vector<8x8xf32>
      %224 = arith.addf %220, %223 : vector<8x8xf32>
      %c3_174 = arith.constant 3 : index
      %c0_175 = arith.constant 0 : index
      %c0_176 = arith.constant 0 : index
      %225 = vector.load %arg13[%c3_174, %c0_175, %c0_176] : memref<4x8x8xf32, #tpu.memory_space<vmem>>, vector<1x8x8xf32>
      %226 = vector.shape_cast %225 : vector<1x8x8xf32> to vector<8x8xf32>
      %227 = vector.shape_cast %217 : vector<8x8xf32> to vector<1x8x8xf32>
      tpu.vector_store %arg13[%c3_174, %c0_175, %c0_176], %227 {strides = array<i32>} : memref<4x8x8xf32, #tpu.memory_space<vmem>>, vector<1x8x8xf32>,
      %c3_177 = arith.constant 3 : index
      %c0_178 = arith.constant 0 : index
      %c0_179 = arith.constant 0 : index
      %228 = vector.load %arg14[%c3_177, %c0_178, %c0_179] : memref<4x8x8xf32, #tpu.memory_space<vmem>>, vector<1x8x8xf32>
      %229 = vector.shape_cast %228 : vector<1x8x8xf32> to vector<8x8xf32>
      %230 = vector.shape_cast %224 : vector<8x8xf32> to vector<1x8x8xf32>
      tpu.vector_store %arg14[%c3_177, %c0_178, %c0_179], %230 {strides = array<i32>} : memref<4x8x8xf32, #tpu.memory_space<vmem>>, vector<1x8x8xf32>,
    } else {
    }
    %c8_i32 = arith.constant 8 : i32
    %3 = arith.muli %arg1, %c8_i32 : i32
    %4 = tpu.assume_multiple %3, 8 : i32
    %c0 = arith.constant 0 : index
    %5 = arith.index_cast %4 : i32 to index
    %c0_1 = arith.constant 0 : index
    %6 = vector.load %arg2[%c0, %5, %c0_1] : memref<1x8x32xf32, #tpu.memory_space<vmem>>, vector<1x8x32xf32>
    %7 = vector.shape_cast %6 : vector<1x8x32xf32> to vector<8x32xf32>
    %cst = arith.constant 0.000000e+00 : f32
    %8 = vector.broadcast %cst : f32 to vector<8x32xf32>
    %cst_2 = arith.constant 0.000000e+00 : f32
    %9 = vector.broadcast %cst_2 : f32 to vector<8x8xf32>
    %c0_3 = arith.constant 0 : index
    %c0_4 = arith.constant 0 : index
    %c0_5 = arith.constant 0 : index
    %10 = vector.load %arg3[%c0_3, %c0_4, %c0_5] : memref<4x32x8xf32, #tpu.memory_space<vmem>>, vector<1x32x8xf32>
    %11 = vector.shape_cast %10 : vector<1x32x8xf32> to vector<32x8xf32>
    %cst_6 = arith.constant dense<0.000000e+00> : vector<8x8xf32>
    %12 = tpu.matmul %7, %11, %cst_6 {dimension_numbers = #tpu.dot_dimension_numbers<[1], [0], [0], [1], [0, 0, 1, 1], [], []>} : vector<8x32xf32>, vector<32x8xf32>, vector<8x8xf32> -> vector<8x8xf32>
    %c0_7 = arith.constant 0 : index
    %c0_8 = arith.constant 0 : index
    %c0_9 = arith.constant 0 : index
    %13 = vector.load %arg4[%c0_7, %c0_8, %c0_9] : memref<4x1x8xf32, #tpu.memory_space<vmem>>, vector<1x1x8xf32>
    %14 = vector.shape_cast %13 : vector<1x1x8xf32> to vector<1x8xf32>
    %15 = vector.broadcast %14 : vector<1x8xf32> to vector<8x8xf32>
    %16 = arith.addf %12, %15 : vector<8x8xf32>
    %c0_10 = arith.constant 0 : index
    %c0_11 = arith.constant 0 : index
    %c0_12 = arith.constant 0 : index
    %17 = vector.load %arg13[%c0_10, %c0_11, %c0_12] : memref<4x8x8xf32, #tpu.memory_space<vmem>>, vector<1x8x8xf32>
    %18 = vector.shape_cast %17 : vector<1x8x8xf32> to vector<8x8xf32>
    %cst_13 = arith.constant dense<0.000000e+00> : vector<8x8xf32>
    %19 = tpu.matmul %16, %18, %cst_13 {dimension_numbers = #tpu.dot_dimension_numbers<[1], [1], [0], [0], [0, 0, 1, 0], [], []>} : vector<8x8xf32>, vector<8x8xf32>, vector<8x8xf32> -> vector<8x8xf32>
    %cst_14 = arith.constant dense<0xFF800000> : vector<8xf32>
    %20 = vector.multi_reduction <maximumf>, %19, %cst_14 [1] : vector<8x8xf32> to vector<8xf32>
    %21 = vector.shape_cast %20 : vector<8xf32> to vector<8x1xf32>
    %22 = vector.broadcast %21 : vector<8x1xf32> to vector<8x8xf32>
    %23 = arith.subf %19, %22 : vector<8x8xf32>
    %24 = math.exp %23 : vector<8x8xf32>
    %cst_15 = arith.constant dense<0.000000e+00> : vector<8xf32>
    %25 = vector.multi_reduction <add>, %24, %cst_15 [1] : vector<8x8xf32> to vector<8xf32>
    %26 = vector.shape_cast %25 : vector<8xf32> to vector<8x1xf32>
    %27 = tpu.reciprocal %26 {approx = true} : vector<8x1xf32> -> vector<8x1xf32>
    %28 = arith.mulf %26, %27 : vector<8x1xf32>
    %cst_16 = arith.constant 2.000000e+00 : f32
    %29 = vector.broadcast %cst_16 : f32 to vector<8x1xf32>
    %30 = arith.subf %29, %28 : vector<8x1xf32>
    %31 = arith.mulf %27, %30 : vector<8x1xf32>
    %32 = vector.broadcast %31 : vector<8x1xf32> to vector<8x8xf32>
    %33 = arith.mulf %24, %32 : vector<8x8xf32>
    %34 = arith.addf %9, %33 : vector<8x8xf32>
    %c0_17 = arith.constant 0 : index
    %c0_18 = arith.constant 0 : index
    %c0_19 = arith.constant 0 : index
    %35 = vector.load %arg14[%c0_17, %c0_18, %c0_19] : memref<4x8x8xf32, #tpu.memory_space<vmem>>, vector<1x8x8xf32>
    %36 = vector.shape_cast %35 : vector<1x8x8xf32> to vector<8x8xf32>
    %cst_20 = arith.constant dense<0.000000e+00> : vector<8x8xf32>
    %37 = tpu.matmul %33, %36, %cst_20 {dimension_numbers = #tpu.dot_dimension_numbers<[1], [0], [0], [1], [0, 0, 1, 1], [], []>} : vector<8x8xf32>, vector<8x8xf32>, vector<8x8xf32> -> vector<8x8xf32>
    %c0_21 = arith.constant 0 : index
    %c0_22 = arith.constant 0 : index
    %c0_23 = arith.constant 0 : index
    %38 = vector.load %arg9[%c0_21, %c0_22, %c0_23] : memref<4x8x32xf32, #tpu.memory_space<vmem>>, vector<1x8x32xf32>
    %39 = vector.shape_cast %38 : vector<1x8x32xf32> to vector<8x32xf32>
    %cst_24 = arith.constant dense<0.000000e+00> : vector<8x32xf32>
    %40 = tpu.matmul %37, %39, %cst_24 {dimension_numbers = #tpu.dot_dimension_numbers<[1], [0], [0], [1], [0, 0, 1, 1], [], []>} : vector<8x8xf32>, vector<8x32xf32>, vector<8x32xf32> -> vector<8x32xf32>
    %41 = arith.addf %8, %40 : vector<8x32xf32>
    %c1 = arith.constant 1 : index
    %c0_25 = arith.constant 0 : index
    %c0_26 = arith.constant 0 : index
    %42 = vector.load %arg3[%c1, %c0_25, %c0_26] : memref<4x32x8xf32, #tpu.memory_space<vmem>>, vector<1x32x8xf32>
    %43 = vector.shape_cast %42 : vector<1x32x8xf32> to vector<32x8xf32>
    %cst_27 = arith.constant dense<0.000000e+00> : vector<8x8xf32>
    %44 = tpu.matmul %7, %43, %cst_27 {dimension_numbers = #tpu.dot_dimension_numbers<[1], [0], [0], [1], [0, 0, 1, 1], [], []>} : vector<8x32xf32>, vector<32x8xf32>, vector<8x8xf32> -> vector<8x8xf32>
    %c1_28 = arith.constant 1 : index
    %c0_29 = arith.constant 0 : index
    %c0_30 = arith.constant 0 : index
    %45 = vector.load %arg4[%c1_28, %c0_29, %c0_30] : memref<4x1x8xf32, #tpu.memory_space<vmem>>, vector<1x1x8xf32>
    %46 = vector.shape_cast %45 : vector<1x1x8xf32> to vector<1x8xf32>
    %47 = vector.broadcast %46 : vector<1x8xf32> to vector<8x8xf32>
    %48 = arith.addf %44, %47 : vector<8x8xf32>
    %c1_31 = arith.constant 1 : index
    %c0_32 = arith.constant 0 : index
    %c0_33 = arith.constant 0 : index
    %49 = vector.load %arg13[%c1_31, %c0_32, %c0_33] : memref<4x8x8xf32, #tpu.memory_space<vmem>>, vector<1x8x8xf32>
    %50 = vector.shape_cast %49 : vector<1x8x8xf32> to vector<8x8xf32>
    %cst_34 = arith.constant dense<0.000000e+00> : vector<8x8xf32>
    %51 = tpu.matmul %48, %50, %cst_34 {dimension_numbers = #tpu.dot_dimension_numbers<[1], [1], [0], [0], [0, 0, 1, 0], [], []>} : vector<8x8xf32>, vector<8x8xf32>, vector<8x8xf32> -> vector<8x8xf32>
    %cst_35 = arith.constant dense<0xFF800000> : vector<8xf32>
    %52 = vector.multi_reduction <maximumf>, %51, %cst_35 [1] : vector<8x8xf32> to vector<8xf32>
    %53 = vector.shape_cast %52 : vector<8xf32> to vector<8x1xf32>
    %54 = vector.broadcast %53 : vector<8x1xf32> to vector<8x8xf32>
    %55 = arith.subf %51, %54 : vector<8x8xf32>
    %56 = math.exp %55 : vector<8x8xf32>
    %cst_36 = arith.constant dense<0.000000e+00> : vector<8xf32>
    %57 = vector.multi_reduction <add>, %56, %cst_36 [1] : vector<8x8xf32> to vector<8xf32>
    %58 = vector.shape_cast %57 : vector<8xf32> to vector<8x1xf32>
    %59 = tpu.reciprocal %58 {approx = true} : vector<8x1xf32> -> vector<8x1xf32>
    %60 = arith.mulf %58, %59 : vector<8x1xf32>
    %cst_37 = arith.constant 2.000000e+00 : f32
    %61 = vector.broadcast %cst_37 : f32 to vector<8x1xf32>
    %62 = arith.subf %61, %60 : vector<8x1xf32>
    %63 = arith.mulf %59, %62 : vector<8x1xf32>
    %64 = vector.broadcast %63 : vector<8x1xf32> to vector<8x8xf32>
    %65 = arith.mulf %56, %64 : vector<8x8xf32>
    %66 = arith.addf %34, %65 : vector<8x8xf32>
    %c1_38 = arith.constant 1 : index
    %c0_39 = arith.constant 0 : index
    %c0_40 = arith.constant 0 : index
    %67 = vector.load %arg14[%c1_38, %c0_39, %c0_40] : memref<4x8x8xf32, #tpu.memory_space<vmem>>, vector<1x8x8xf32>
    %68 = vector.shape_cast %67 : vector<1x8x8xf32> to vector<8x8xf32>
    %cst_41 = arith.constant dense<0.000000e+00> : vector<8x8xf32>
    %69 = tpu.matmul %65, %68, %cst_41 {dimension_numbers = #tpu.dot_dimension_numbers<[1], [0], [0], [1], [0, 0, 1, 1], [], []>} : vector<8x8xf32>, vector<8x8xf32>, vector<8x8xf32> -> vector<8x8xf32>
    %c1_42 = arith.constant 1 : index
    %c0_43 = arith.constant 0 : index
    %c0_44 = arith.constant 0 : index
    %70 = vector.load %arg9[%c1_42, %c0_43, %c0_44] : memref<4x8x32xf32, #tpu.memory_space<vmem>>, vector<1x8x32xf32>
    %71 = vector.shape_cast %70 : vector<1x8x32xf32> to vector<8x32xf32>
    %cst_45 = arith.constant dense<0.000000e+00> : vector<8x32xf32>
    %72 = tpu.matmul %69, %71, %cst_45 {dimension_numbers = #tpu.dot_dimension_numbers<[1], [0], [0], [1], [0, 0, 1, 1], [], []>} : vector<8x8xf32>, vector<8x32xf32>, vector<8x32xf32> -> vector<8x32xf32>
    %73 = arith.addf %41, %72 : vector<8x32xf32>
    %c2 = arith.constant 2 : index
    %c0_46 = arith.constant 0 : index
    %c0_47 = arith.constant 0 : index
    %74 = vector.load %arg3[%c2, %c0_46, %c0_47] : memref<4x32x8xf32, #tpu.memory_space<vmem>>, vector<1x32x8xf32>
    %75 = vector.shape_cast %74 : vector<1x32x8xf32> to vector<32x8xf32>
    %cst_48 = arith.constant dense<0.000000e+00> : vector<8x8xf32>
    %76 = tpu.matmul %7, %75, %cst_48 {dimension_numbers = #tpu.dot_dimension_numbers<[1], [0], [0], [1], [0, 0, 1, 1], [], []>} : vector<8x32xf32>, vector<32x8xf32>, vector<8x8xf32> -> vector<8x8xf32>
    %c2_49 = arith.constant 2 : index
    %c0_50 = arith.constant 0 : index
    %c0_51 = arith.constant 0 : index
    %77 = vector.load %arg4[%c2_49, %c0_50, %c0_51] : memref<4x1x8xf32, #tpu.memory_space<vmem>>, vector<1x1x8xf32>
    %78 = vector.shape_cast %77 : vector<1x1x8xf32> to vector<1x8xf32>
    %79 = vector.broadcast %78 : vector<1x8xf32> to vector<8x8xf32>
    %80 = arith.addf %76, %79 : vector<8x8xf32>
    %c2_52 = arith.constant 2 : index
    %c0_53 = arith.constant 0 : index
    %c0_54 = arith.constant 0 : index
    %81 = vector.load %arg13[%c2_52, %c0_53, %c0_54] : memref<4x8x8xf32, #tpu.memory_space<vmem>>, vector<1x8x8xf32>
    %82 = vector.shape_cast %81 : vector<1x8x8xf32> to vector<8x8xf32>
    %cst_55 = arith.constant dense<0.000000e+00> : vector<8x8xf32>
    %83 = tpu.matmul %80, %82, %cst_55 {dimension_numbers = #tpu.dot_dimension_numbers<[1], [1], [0], [0], [0, 0, 1, 0], [], []>} : vector<8x8xf32>, vector<8x8xf32>, vector<8x8xf32> -> vector<8x8xf32>
    %cst_56 = arith.constant dense<0xFF800000> : vector<8xf32>
    %84 = vector.multi_reduction <maximumf>, %83, %cst_56 [1] : vector<8x8xf32> to vector<8xf32>
    %85 = vector.shape_cast %84 : vector<8xf32> to vector<8x1xf32>
    %86 = vector.broadcast %85 : vector<8x1xf32> to vector<8x8xf32>
    %87 = arith.subf %83, %86 : vector<8x8xf32>
    %88 = math.exp %87 : vector<8x8xf32>
    %cst_57 = arith.constant dense<0.000000e+00> : vector<8xf32>
    %89 = vector.multi_reduction <add>, %88, %cst_57 [1] : vector<8x8xf32> to vector<8xf32>
    %90 = vector.shape_cast %89 : vector<8xf32> to vector<8x1xf32>
    %91 = tpu.reciprocal %90 {approx = true} : vector<8x1xf32> -> vector<8x1xf32>
    %92 = arith.mulf %90, %91 : vector<8x1xf32>
    %cst_58 = arith.constant 2.000000e+00 : f32
    %93 = vector.broadcast %cst_58 : f32 to vector<8x1xf32>
    %94 = arith.subf %93, %92 : vector<8x1xf32>
    %95 = arith.mulf %91, %94 : vector<8x1xf32>
    %96 = vector.broadcast %95 : vector<8x1xf32> to vector<8x8xf32>
    %97 = arith.mulf %88, %96 : vector<8x8xf32>
    %98 = arith.addf %66, %97 : vector<8x8xf32>
    %c2_59 = arith.constant 2 : index
    %c0_60 = arith.constant 0 : index
    %c0_61 = arith.constant 0 : index
    %99 = vector.load %arg14[%c2_59, %c0_60, %c0_61] : memref<4x8x8xf32, #tpu.memory_space<vmem>>, vector<1x8x8xf32>
    %100 = vector.shape_cast %99 : vector<1x8x8xf32> to vector<8x8xf32>
    %cst_62 = arith.constant dense<0.000000e+00> : vector<8x8xf32>
    %101 = tpu.matmul %97, %100, %cst_62 {dimension_numbers = #tpu.dot_dimension_numbers<[1], [0], [0], [1], [0, 0, 1, 1], [], []>} : vector<8x8xf32>, vector<8x8xf32>, vector<8x8xf32> -> vector<8x8xf32>
    %c2_63 = arith.constant 2 : index
    %c0_64 = arith.constant 0 : index
    %c0_65 = arith.constant 0 : index
    %102 = vector.load %arg9[%c2_63, %c0_64, %c0_65] : memref<4x8x32xf32, #tpu.memory_space<vmem>>, vector<1x8x32xf32>
    %103 = vector.shape_cast %102 : vector<1x8x32xf32> to vector<8x32xf32>
    %cst_66 = arith.constant dense<0.000000e+00> : vector<8x32xf32>
    %104 = tpu.matmul %101, %103, %cst_66 {dimension_numbers = #tpu.dot_dimension_numbers<[1], [0], [0], [1], [0, 0, 1, 1], [], []>} : vector<8x8xf32>, vector<8x32xf32>, vector<8x32xf32> -> vector<8x32xf32>
    %105 = arith.addf %73, %104 : vector<8x32xf32>
    %c3 = arith.constant 3 : index
    %c0_67 = arith.constant 0 : index
    %c0_68 = arith.constant 0 : index
    %106 = vector.load %arg3[%c3, %c0_67, %c0_68] : memref<4x32x8xf32, #tpu.memory_space<vmem>>, vector<1x32x8xf32>
    %107 = vector.shape_cast %106 : vector<1x32x8xf32> to vector<32x8xf32>
    %cst_69 = arith.constant dense<0.000000e+00> : vector<8x8xf32>
    %108 = tpu.matmul %7, %107, %cst_69 {dimension_numbers = #tpu.dot_dimension_numbers<[1], [0], [0], [1], [0, 0, 1, 1], [], []>} : vector<8x32xf32>, vector<32x8xf32>, vector<8x8xf32> -> vector<8x8xf32>
    %c3_70 = arith.constant 3 : index
    %c0_71 = arith.constant 0 : index
    %c0_72 = arith.constant 0 : index
    %109 = vector.load %arg4[%c3_70, %c0_71, %c0_72] : memref<4x1x8xf32, #tpu.memory_space<vmem>>, vector<1x1x8xf32>
    %110 = vector.shape_cast %109 : vector<1x1x8xf32> to vector<1x8xf32>
    %111 = vector.broadcast %110 : vector<1x8xf32> to vector<8x8xf32>
    %112 = arith.addf %108, %111 : vector<8x8xf32>
    %c3_73 = arith.constant 3 : index
    %c0_74 = arith.constant 0 : index
    %c0_75 = arith.constant 0 : index
    %113 = vector.load %arg13[%c3_73, %c0_74, %c0_75] : memref<4x8x8xf32, #tpu.memory_space<vmem>>, vector<1x8x8xf32>
    %114 = vector.shape_cast %113 : vector<1x8x8xf32> to vector<8x8xf32>
    %cst_76 = arith.constant dense<0.000000e+00> : vector<8x8xf32>
    %115 = tpu.matmul %112, %114, %cst_76 {dimension_numbers = #tpu.dot_dimension_numbers<[1], [1], [0], [0], [0, 0, 1, 0], [], []>} : vector<8x8xf32>, vector<8x8xf32>, vector<8x8xf32> -> vector<8x8xf32>
    %cst_77 = arith.constant dense<0xFF800000> : vector<8xf32>
    %116 = vector.multi_reduction <maximumf>, %115, %cst_77 [1] : vector<8x8xf32> to vector<8xf32>
    %117 = vector.shape_cast %116 : vector<8xf32> to vector<8x1xf32>
    %118 = vector.broadcast %117 : vector<8x1xf32> to vector<8x8xf32>
    %119 = arith.subf %115, %118 : vector<8x8xf32>
    %120 = math.exp %119 : vector<8x8xf32>
    %cst_78 = arith.constant dense<0.000000e+00> : vector<8xf32>
    %121 = vector.multi_reduction <add>, %120, %cst_78 [1] : vector<8x8xf32> to vector<8xf32>
    %122 = vector.shape_cast %121 : vector<8xf32> to vector<8x1xf32>
    %123 = tpu.reciprocal %122 {approx = true} : vector<8x1xf32> -> vector<8x1xf32>
    %124 = arith.mulf %122, %123 : vector<8x1xf32>
    %cst_79 = arith.constant 2.000000e+00 : f32
    %125 = vector.broadcast %cst_79 : f32 to vector<8x1xf32>
    %126 = arith.subf %125, %124 : vector<8x1xf32>
    %127 = arith.mulf %123, %126 : vector<8x1xf32>
    %128 = vector.broadcast %127 : vector<8x1xf32> to vector<8x8xf32>
    %129 = arith.mulf %120, %128 : vector<8x8xf32>
    %130 = arith.addf %98, %129 : vector<8x8xf32>
    %c3_80 = arith.constant 3 : index
    %c0_81 = arith.constant 0 : index
    %c0_82 = arith.constant 0 : index
    %131 = vector.load %arg14[%c3_80, %c0_81, %c0_82] : memref<4x8x8xf32, #tpu.memory_space<vmem>>, vector<1x8x8xf32>
    %132 = vector.shape_cast %131 : vector<1x8x8xf32> to vector<8x8xf32>
    %cst_83 = arith.constant dense<0.000000e+00> : vector<8x8xf32>
    %133 = tpu.matmul %129, %132, %cst_83 {dimension_numbers = #tpu.dot_dimension_numbers<[1], [0], [0], [1], [0, 0, 1, 1], [], []>} : vector<8x8xf32>, vector<8x8xf32>, vector<8x8xf32> -> vector<8x8xf32>
    %c3_84 = arith.constant 3 : index
    %c0_85 = arith.constant 0 : index
    %c0_86 = arith.constant 0 : index
    %134 = vector.load %arg9[%c3_84, %c0_85, %c0_86] : memref<4x8x32xf32, #tpu.memory_space<vmem>>, vector<1x8x32xf32>
    %135 = vector.shape_cast %134 : vector<1x8x32xf32> to vector<8x32xf32>
    %cst_87 = arith.constant dense<0.000000e+00> : vector<8x32xf32>
    %136 = tpu.matmul %133, %135, %cst_87 {dimension_numbers = #tpu.dot_dimension_numbers<[1], [0], [0], [1], [0, 0, 1, 1], [], []>} : vector<8x8xf32>, vector<8x32xf32>, vector<8x32xf32> -> vector<8x32xf32>
    %137 = arith.addf %105, %136 : vector<8x32xf32>
    %c0_88 = arith.constant 0 : index
    %c0_89 = arith.constant 0 : index
    %138 = vector.load %arg10[%c0_88, %c0_89] : memref<1x32xf32, #tpu.memory_space<vmem>>, vector<1x32xf32>
    %139 = vector.broadcast %138 : vector<1x32xf32> to vector<8x32xf32>
    %140 = arith.addf %137, %139 : vector<8x32xf32>
    %c0_90 = arith.constant 0 : index
    %c0_91 = arith.constant 0 : index
    %c0_92 = arith.constant 0 : index
    %141 = vector.load %arg11[%c0_90, %c0_91, %c0_92] : memref<1x8x32xf32, #tpu.memory_space<vmem>>, vector<1x8x32xf32>
    %142 = vector.shape_cast %141 : vector<1x8x32xf32> to vector<8x32xf32>
    %143 = vector.shape_cast %140 : vector<8x32xf32> to vector<1x8x32xf32>
    tpu.vector_store %arg11[%c0_90, %c0_91, %c0_92], %143 {strides = array<i32>} : memref<1x8x32xf32, #tpu.memory_space<vmem>>, vector<1x8x32xf32>,
    %cst_93 = arith.constant 2.500000e-01 : f32
    %144 = vector.broadcast %cst_93 : f32 to vector<8x8xf32>
    %145 = arith.mulf %130, %144 : vector<8x8xf32>
    %c0_94 = arith.constant 0 : index
    %c0_95 = arith.constant 0 : index
    %c0_96 = arith.constant 0 : index
    %146 = vector.load %arg12[%c0_94, %c0_95, %c0_96] : memref<1x8x8xf32, #tpu.memory_space<vmem>>, vector<1x8x8xf32>
    %147 = vector.shape_cast %146 : vector<1x8x8xf32> to vector<8x8xf32>
    %148 = vector.shape_cast %145 : vector<8x8xf32> to vector<1x8x8xf32>
    tpu.vector_store %arg12[%c0_94, %c0_95, %c0_96], %148 {strides = array<i32>} : memref<1x8x8xf32, #tpu.memory_space<vmem>>, vector<1x8x8xf32>,
    return
  }
  func.func @transform_0(%arg0: i32, %arg1: i32) -> (i32, i32, i32) {
    %c0_i32 = arith.constant 0 : i32
    %c0_i32_0 = arith.constant 0 : i32
    %c0_i32_1 = arith.constant 0 : i32
    return %arg0, %c0_i32, %c0_i32_0 : i32, i32, i32
  }
  func.func @transform_1(%arg0: i32, %arg1: i32) -> (i32, i32, i32) {
    %c0_i32 = arith.constant 0 : i32
    %c0_i32_0 = arith.constant 0 : i32
    %c0_i32_1 = arith.constant 0 : i32
    %c0_i32_2 = arith.constant 0 : i32
    return %c0_i32, %c0_i32_0, %c0_i32_1 : i32, i32, i32
  }
  func.func @transform_2(%arg0: i32, %arg1: i32) -> (i32, i32, i32) {
    %c0_i32 = arith.constant 0 : i32
    %c0_i32_0 = arith.constant 0 : i32
    %c0_i32_1 = arith.constant 0 : i32
    %c0_i32_2 = arith.constant 0 : i32
    return %c0_i32, %c0_i32_0, %c0_i32_1 : i32, i32, i32
  }
  func.func @transform_3(%arg0: i32, %arg1: i32) -> (i32, i32, i32) {
    %c0_i32 = arith.constant 0 : i32
    %c0_i32_0 = arith.constant 0 : i32
    %c0_i32_1 = arith.constant 0 : i32
    %c0_i32_2 = arith.constant 0 : i32
    return %c0_i32, %c0_i32_0, %c0_i32_1 : i32, i32, i32
  }
  func.func @transform_4(%arg0: i32, %arg1: i32) -> (i32, i32, i32) {
    %c0_i32 = arith.constant 0 : i32
    %c0_i32_0 = arith.constant 0 : i32
    %c0_i32_1 = arith.constant 0 : i32
    %c0_i32_2 = arith.constant 0 : i32
    return %c0_i32, %c0_i32_0, %c0_i32_1 : i32, i32, i32
  }
  func.func @transform_5(%arg0: i32, %arg1: i32) -> (i32, i32, i32) {
    %c0_i32 = arith.constant 0 : i32
    %c0_i32_0 = arith.constant 0 : i32
    %c0_i32_1 = arith.constant 0 : i32
    %c0_i32_2 = arith.constant 0 : i32
    return %c0_i32, %c0_i32_0, %c0_i32_1 : i32, i32, i32
  }
  func.func @transform_6(%arg0: i32, %arg1: i32) -> (i32, i32, i32) {
    %c0_i32 = arith.constant 0 : i32
    %c0_i32_0 = arith.constant 0 : i32
    %c0_i32_1 = arith.constant 0 : i32
    %c0_i32_2 = arith.constant 0 : i32
    return %c0_i32, %c0_i32_0, %c0_i32_1 : i32, i32, i32
  }
  func.func @transform_7(%arg0: i32, %arg1: i32) -> (i32, i32, i32) {
    %c0_i32 = arith.constant 0 : i32
    %c0_i32_0 = arith.constant 0 : i32
    %c0_i32_1 = arith.constant 0 : i32
    %c0_i32_2 = arith.constant 0 : i32
    return %c0_i32, %c0_i32_0, %c0_i32_1 : i32, i32, i32
  }
  func.func @transform_8(%arg0: i32, %arg1: i32) -> (i32, i32) {
    %c0_i32 = arith.constant 0 : i32
    %c0_i32_0 = arith.constant 0 : i32
    %c0_i32_1 = arith.constant 0 : i32
    return %c0_i32, %c0_i32_0 : i32, i32
  }
  func.func @transform_9(%arg0: i32, %arg1: i32) -> (i32, i32, i32) {
    %c0_i32 = arith.constant 0 : i32
    %c0_i32_0 = arith.constant 0 : i32
    return %arg0, %arg1, %c0_i32 : i32, i32, i32
  }
  func.func @transform_10(%arg0: i32, %arg1: i32) -> (i32, i32, i32) {
    %c0_i32 = arith.constant 0 : i32
    %c0_i32_0 = arith.constant 0 : i32
    return %arg0, %arg1, %c0_i32 : i32, i32, i32
  }
}

</mosaic_0001>

<llo_original>
// kernel: tpu_custom_call.1
$region0: #{tpu_custom_call.1}
  #allocation0 [shape = 'u32[]', space=smem, size = 0x4, offset = 0x4, fixed_abs, tag = 'smem constant byte address 0x4 - core index']
  #allocation1 [shape = 'u32[144,128]{1,0:T(1,128)}', space=vmem, size = 0x12000, scoped, tag = 'internal scratch']
  #allocation2 [shape = 'f32[4,8,8]{2,1,0:T(8,128)}', space=vmem, size = 0x4000, scoped, tag = 'scratch operand']
  #allocation3 [shape = 'f32[4,8,8]{2,1,0:T(8,128)}', space=vmem, size = 0x4000, scoped, tag = 'scratch operand']
  %s0 = inlined_call_operand.vmem [shape: f32[2,8,32], index: 0, kind: input, shape index: {}]
  %s1 = inlined_call_operand.vmem [shape: f32[4,32,8], index: 1, kind: input, shape index: {}]
  %s2 = inlined_call_operand.vmem [shape: f32[4,1,8], index: 2, kind: input, shape index: {}]
  %s3 = inlined_call_operand.vmem [shape: f32[4,32,8], index: 3, kind: input, shape index: {}]
  %s4 = inlined_call_operand.vmem [shape: f32[4,1,8], index: 4, kind: input, shape index: {}]
  %s5 = inlined_call_operand.vmem [shape: f32[4,32,8], index: 5, kind: input, shape index: {}]
  %s6 = inlined_call_operand.vmem [shape: f32[4,1,8], index: 6, kind: input, shape index: {}]
  %s7 = inlined_call_operand.vmem [shape: f32[4,8,32], index: 7, kind: input, shape index: {}]
  %s8 = inlined_call_operand.vmem [shape: f32[1,32], index: 8, kind: input, shape index: {}]
  %s9 = inlined_call_operand.hbm [shape: f32[2,8,32], index: 9, kind: output, shape index: {0}]
  %s10 = inlined_call_operand.hbm [shape: f32[2,8,8], index: 10, kind: output, shape index: {1}]
  %11 = xla_tuple %s9, %s10
  %s12 = sld [smem:[#allocation0]]
  $region81: #{tpu_custom_call.1} parent=0
    _
  %s14 = ssub.s32 1, %s12
  %s15 = scalar_select 0, %s14, %s12
  $region1: #{tpu_custom_call.1} parent=0
    #allocation4 [shape = 'u8[8192]{0}', space=vmem, size = 0x2000, scoped, tag = 'output window, operand 0']
    #allocation5 [shape = 's32[2]{0}', space=sflag, size = 0x8, scoped, tag = 'scoped memory for tpu_custom_call.1']
    #allocation6 [shape = 'u8[8192]{0}', space=vmem, size = 0x2000, scoped, tag = 'output window, operand 1']
    #allocation7 [shape = 's32[2]{0}', space=sflag, size = 0x8, scoped, tag = 'scoped memory for tpu_custom_call.1']
    %16 = vsyncpa [#allocation5], 0
    %s17 = scalar_lea.sflag [#allocation5], 1
    %18 = vsyncpa %s17, 0
    %19 = vsyncpa [#allocation7], 0
    %s20 = scalar_lea.sflag [#allocation7], 1
    %21 = vsyncpa %s20, 0
    loop: start=0, step=1, limit=4
    $region2: #{tpu_custom_call.1} parent=1 // loop_pre_header
      _
    $region3: #{tpu_custom_call.1} parent=1 // loop_header
      %s23 = sphi 0, %s27
      %p24 = scmp.ge.s32.totalorder %s23, 4
      %s30 = sphi 0, %s42
      %s31 = sphi 0, %s38
      %s32 = sphi 0, %s30
      %s33 = sphi 0, %s31
      %s34 = sphi 0, %s32
      %s35 = sphi 0, %s33
      %s45 = sphi 0, %s47
      %s48 = sphi 0, %s45
      %s49 = sphi 0, %s48
      %s65 = sphi 0, %s49
      %s69 = sphi 0, %s69
      %s71 = sphi 0, %s69
      %s72 = sphi 0, %s71
      %s86 = sphi 0, %s72
      %s90 = sphi 0, %s90
      %s92 = sphi 0, %s90
      %s93 = sphi 0, %s92
      %s107 = sphi 0, %s93
      %s111 = sphi 0, %s111
      %s113 = sphi 0, %s111
      %s114 = sphi 0, %s113
      %s128 = sphi 0, %s114
      %s132 = sphi 0, %s132
      %s134 = sphi 0, %s132
      %s135 = sphi 0, %s134
      %s149 = sphi 0, %s135
      %s153 = sphi 0, %s153
      %s155 = sphi 0, %s153
      %s156 = sphi 0, %s155
      %s170 = sphi 0, %s156
      %s174 = sphi 0, %s174
      %s176 = sphi 0, %s174
      %s177 = sphi 0, %s176
      %s191 = sphi 0, %s177
      %s195 = sphi 0, %s195
      %s197 = sphi 0, %s195
      %s198 = sphi 0, %s197
      %s212 = sphi 0, %s198
      %s216 = sphi 0, %s216
      %s218 = sphi 0, %s216
      %s219 = sphi 0, %s218
      %s233 = sphi 0, %s219
      %s241 = sphi 0, %s243
      %s244 = sphi 0, %s241
      %s245 = sphi 0, %s244
      %s261 = sphi 0, %s245
      %s269 = sphi 0, %s271
      %s272 = sphi 0, %s269
      %s273 = sphi 0, %s272
      %s289 = sphi 0, %s273
    $region4: #{tpu_custom_call.1} parent=1 // loop_header_branch
      %26 = sbr.rel (%p24) target = $region8
    $region5: #{tpu_custom_call.1} parent=1 // loop_body
      %s28 = ssub.s32 %s23, 1
      %s29 = ssub.s32 %s23, 2
      %s36 = sadd.s32 1, %s31
      %p37 = scmp.ge.s32.totalorder %s36, 1
      %s38 = scalar_select %p37, 0, %s36
      %s39 = sadd.s32 1, %s30
      %s40 = scalar_select %p37, %s39, %s30
      %p41 = scmp.ge.s32.totalorder %s40, 2
      %s42 = scalar_select %p41, 0, %s40
      %s43 = ssub.s32 %s30, %s42
      %p44 = scmp.eq.s32.totalorder %s43, 0
      %s46 = sadd.s32 %s45, 1
      %s47 = scalar_select %p44, %s45, %s46
      %p50 = pneg %p44
      %p51 = scmp.eq.s32.totalorder %s23, 1
      %p52 = por %p50, %p51
      %p53 = scmp.ne.s32.totalorder %s45, %s48
      %p54 = scmp.eq.s32.totalorder %s23, 0
      %p55 = por %p53, %p54
      %p56 = scmp.ne.s32.totalorder %s45, %s48
      %p57 = scmp.eq.s32.totalorder %s28, 1
      %p58 = por %p56, %p57
      %p59 = scmp.ne.s32.totalorder %s48, %s49
      %p60 = scmp.eq.s32.totalorder %s28, 0
      %p61 = por %p59, %p60
      %p62 = scmp.ne.s32.totalorder %s48, %s49
      %p63 = scmp.eq.s32.totalorder %s29, 1
      %p64 = por %p62, %p63
      %p66 = scmp.ne.s32.totalorder %s49, %s65
      %p67 = scmp.eq.s32.totalorder %s29, 0
      %p68 = por %p66, %p67
      %s70 = sadd.s32 %s69, 1
      %p73 = scmp.eq.s32.totalorder %s23, 1
      %p74 = scmp.ne.s32.totalorder %s69, %s71
      %p75 = scmp.eq.s32.totalorder %s23, 0
      %p76 = por %p74, %p75
      %p77 = scmp.ne.s32.totalorder %s69, %s71
      %p78 = scmp.eq.s32.totalorder %s28, 1
      %p79 = por %p77, %p78
      %p80 = scmp.ne.s32.totalorder %s71, %s72
      %p81 = scmp.eq.s32.totalorder %s28, 0
      %p82 = por %p80, %p81
      %p83 = scmp.ne.s32.totalorder %s71, %s72
      %p84 = scmp.eq.s32.totalorder %s29, 1
      %p85 = por %p83, %p84
      %p87 = scmp.ne.s32.totalorder %s72, %s86
      %p88 = scmp.eq.s32.totalorder %s29, 0
      %p89 = por %p87, %p88
      %s91 = sadd.s32 %s90, 1
      %p94 = scmp.eq.s32.totalorder %s23, 1
      %p95 = scmp.ne.s32.totalorder %s90, %s92
      %p96 = scmp.eq.s32.totalorder %s23, 0
      %p97 = por %p95, %p96
      %p98 = scmp.ne.s32.totalorder %s90, %s92
      %p99 = scmp.eq.s32.totalorder %s28, 1
      %p100 = por %p98, %p99
      %p101 = scmp.ne.s32.totalorder %s92, %s93
      %p102 = scmp.eq.s32.totalorder %s28, 0
      %p103 = por %p101, %p102
      %p104 = scmp.ne.s32.totalorder %s92, %s93
      %p105 = scmp.eq.s32.totalorder %s29, 1
      %p106 = por %p104, %p105
      %p108 = scmp.ne.s32.totalorder %s93, %s107
      %p109 = scmp.eq.s32.totalorder %s29, 0
      %p110 = por %p108, %p109
      %s112 = sadd.s32 %s111, 1
      %p115 = scmp.eq.s32.totalorder %s23, 1
      %p116 = scmp.ne.s32.totalorder %s111, %s113
      %p117 = scmp.eq.s32.totalorder %s23, 0
      %p118 = por %p116, %p117
      %p119 = scmp.ne.s32.totalorder %s111, %s113
      %p120 = scmp.eq.s32.totalorder %s28, 1
      %p121 = por %p119, %p120
      %p122 = scmp.ne.s32.totalorder %s113, %s114
      %p123 = scmp.eq.s32.totalorder %s28, 0
      %p124 = por %p122, %p123
      %p125 = scmp.ne.s32.totalorder %s113, %s114
      %p126 = scmp.eq.s32.totalorder %s29, 1
      %p127 = por %p125, %p126
      %p129 = scmp.ne.s32.totalorder %s114, %s128
      %p130 = scmp.eq.s32.totalorder %s29, 0
      %p131 = por %p129, %p130
      %s133 = sadd.s32 %s132, 1
      %p136 = scmp.eq.s32.totalorder %s23, 1
      %p137 = scmp.ne.s32.totalorder %s132, %s134
      %p138 = scmp.eq.s32.totalorder %s23, 0
      %p139 = por %p137, %p138
      %p140 = scmp.ne.s32.totalorder %s132, %s134
      %p141 = scmp.eq.s32.totalorder %s28, 1
      %p142 = por %p140, %p141
      %p143 = scmp.ne.s32.totalorder %s134, %s135
      %p144 = scmp.eq.s32.totalorder %s28, 0
      %p145 = por %p143, %p144
      %p146 = scmp.ne.s32.totalorder %s134, %s135
      %p147 = scmp.eq.s32.totalorder %s29, 1
      %p148 = por %p146, %p147
      %p150 = scmp.ne.s32.totalorder %s135, %s149
      %p151 = scmp.eq.s32.totalorder %s29, 0
      %p152 = por %p150, %p151
      %s154 = sadd.s32 %s153, 1
      %p157 = scmp.eq.s32.totalorder %s23, 1
      %p158 = scmp.ne.s32.totalorder %s153, %s155
      %p159 = scmp.eq.s32.totalorder %s23, 0
      %p160 = por %p158, %p159
      %p161 = scmp.ne.s32.totalorder %s153, %s155
      %p162 = scmp.eq.s32.totalorder %s28, 1
      %p163 = por %p161, %p162
      %p164 = scmp.ne.s32.totalorder %s155, %s156
      %p165 = scmp.eq.s32.totalorder %s28, 0
      %p166 = por %p164, %p165
      %p167 = scmp.ne.s32.totalorder %s155, %s156
      %p168 = scmp.eq.s32.totalorder %s29, 1
      %p169 = por %p167, %p168
      %p171 = scmp.ne.s32.totalorder %s156, %s170
      %p172 = scmp.eq.s32.totalorder %s29, 0
      %p173 = por %p171, %p172
      %s175 = sadd.s32 %s174, 1
      %p178 = scmp.eq.s32.totalorder %s23, 1
      %p179 = scmp.ne.s32.totalorder %s174, %s176
      %p180 = scmp.eq.s32.totalorder %s23, 0
      %p181 = por %p179, %p180
      %p182 = scmp.ne.s32.totalorder %s174, %s176
      %p183 = scmp.eq.s32.totalorder %s28, 1
      %p184 = por %p182, %p183
      %p185 = scmp.ne.s32.totalorder %s176, %s177
      %p186 = scmp.eq.s32.totalorder %s28, 0
      %p187 = por %p185, %p186
      %p188 = scmp.ne.s32.totalorder %s176, %s177
      %p189 = scmp.eq.s32.totalorder %s29, 1
      %p190 = por %p188, %p189
      %p192 = scmp.ne.s32.totalorder %s177, %s191
      %p193 = scmp.eq.s32.totalorder %s29, 0
      %p194 = por %p192, %p193
      %s196 = sadd.s32 %s195, 1
      %p199 = scmp.eq.s32.totalorder %s23, 1
      %p200 = scmp.ne.s32.totalorder %s195, %s197
      %p201 = scmp.eq.s32.totalorder %s23, 0
      %p202 = por %p200, %p201
      %p203 = scmp.ne.s32.totalorder %s195, %s197
      %p204 = scmp.eq.s32.totalorder %s28, 1
      %p205 = por %p203, %p204
      %p206 = scmp.ne.s32.totalorder %s197, %s198
      %p207 = scmp.eq.s32.totalorder %s28, 0
      %p208 = por %p206, %p207
      %p209 = scmp.ne.s32.totalorder %s197, %s198
      %p210 = scmp.eq.s32.totalorder %s29, 1
      %p211 = por %p209, %p210
      %p213 = scmp.ne.s32.totalorder %s198, %s212
      %p214 = scmp.eq.s32.totalorder %s29, 0
      %p215 = por %p213, %p214
      %s217 = sadd.s32 %s216, 1
      %p220 = scmp.eq.s32.totalorder %s23, 1
      %p221 = scmp.ne.s32.totalorder %s216, %s218
      %p222 = scmp.eq.s32.totalorder %s23, 0
      %p223 = por %p221, %p222
      %p224 = scmp.ne.s32.totalorder %s216, %s218
      %p225 = scmp.eq.s32.totalorder %s28, 1
      %p226 = por %p224, %p225
      %p227 = scmp.ne.s32.totalorder %s218, %s219
      %p228 = scmp.eq.s32.totalorder %s28, 0
      %p229 = por %p227, %p228
      %p230 = scmp.ne.s32.totalorder %s218, %s219
      %p231 = scmp.eq.s32.totalorder %s29, 1
      %p232 = por %p230, %p231
      %p234 = scmp.ne.s32.totalorder %s219, %s233
      %p235 = scmp.eq.s32.totalorder %s29, 0
      %p236 = por %p234, %p235
      %s237 = ssub.s32 %s30, %s42
      %s238 = ssub.s32 %s31, %s38
      %s239 = sor.u32 %s237, %s238
      %p240 = scmp.eq.s32.totalorder %s239, 0
      %s242 = sadd.s32 %s241, 1
      %s243 = scalar_select %p240, %s241, %s242
      %p246 = pneg %p240
      %p247 = scmp.eq.s32.totalorder %s23, 1
      %p248 = por %p246, %p247
      %p249 = scmp.ne.s32.totalorder %s241, %s244
      %p250 = scmp.eq.s32.totalorder %s23, 0
      %p251 = por %p249, %p250
      %p252 = scmp.ne.s32.totalorder %s241, %s244
      %p253 = scmp.eq.s32.totalorder %s28, 1
      %p254 = por %p252, %p253
      %p255 = scmp.ne.s32.totalorder %s244, %s245
      %p256 = scmp.eq.s32.totalorder %s28, 0
      %p257 = por %p255, %p256
      %p258 = scmp.ne.s32.totalorder %s244, %s245
      %p259 = scmp.eq.s32.totalorder %s29, 1
      %p260 = por %p258, %p259
      %p262 = scmp.ne.s32.totalorder %s245, %s261
      %p263 = scmp.eq.s32.totalorder %s29, 0
      %p264 = por %p262, %p263
      %s265 = ssub.s32 %s30, %s42
      %s266 = ssub.s32 %s31, %s38
      %s267 = sor.u32 %s265, %s266
      %p268 = scmp.eq.s32.totalorder %s267, 0
      %s270 = sadd.s32 %s269, 1
      %s271 = scalar_select %p268, %s269, %s270
      %p274 = pneg %p268
      %p275 = scmp.eq.s32.totalorder %s23, 1
      %p276 = por %p274, %p275
      %p277 = scmp.ne.s32.totalorder %s269, %s272
      %p278 = scmp.eq.s32.totalorder %s23, 0
      %p279 = por %p277, %p278
      %p280 = scmp.ne.s32.totalorder %s269, %s272
      %p281 = scmp.eq.s32.totalorder %s28, 1
      %p282 = por %p280, %p281
      %p283 = scmp.ne.s32.totalorder %s272, %s273
      %p284 = scmp.eq.s32.totalorder %s28, 0
      %p285 = por %p283, %p284
      %p286 = scmp.ne.s32.totalorder %s272, %s273
      %p287 = scmp.eq.s32.totalorder %s29, 1
      %p288 = por %p286, %p287
      %p290 = scmp.ne.s32.totalorder %s273, %s289
      %p291 = scmp.eq.s32.totalorder %s29, 0
      %p292 = por %p290, %p291
      %p293 = scmp.le.s32.totalorder 1, %s23
      %p294 = scmp.lt.s32.totalorder %s23, 3
      %p295 = pnand %p293, %p294
      %p296 = pneg %p295
      // Predicated region
      $region9: #{tpu_custom_call.1} parent=5 // pred_check
        _
      $region10: #{tpu_custom_call.1} parent=5 // pred_check_branch
        %298 = sbr.rel (%p295) target = $region12
      $region11: #{tpu_custom_call.1} parent=5 // pred_region
        %s299 = ssub.s32 %s23, 1
        // Predicated region
        $region13: #{tpu_custom_call.1} parent=11 // pred_check
          %p300 = pneg %p82
        $region14: #{tpu_custom_call.1} parent=11 // pred_check_branch
          %302 = sbr.rel (%p300) target = $region16
        $region15: #{tpu_custom_call.1} parent=11 // pred_region
          _
        $region16: #{tpu_custom_call.1} parent=11 // pred_fallthru
          _
        // Predicated region
        $region17: #{tpu_custom_call.1} parent=11 // pred_check
          %p303 = pneg %p103
        $region18: #{tpu_custom_call.1} parent=11 // pred_check_branch
          %305 = sbr.rel (%p303) target = $region20
        $region19: #{tpu_custom_call.1} parent=11 // pred_region
          _
        $region20: #{tpu_custom_call.1} parent=11 // pred_fallthru
          _
        // Predicated region
        $region21: #{tpu_custom_call.1} parent=11 // pred_check
          %p306 = pneg %p124
        $region22: #{tpu_custom_call.1} parent=11 // pred_check_branch
          %308 = sbr.rel (%p306) target = $region24
        $region23: #{tpu_custom_call.1} parent=11 // pred_region
          _
        $region24: #{tpu_custom_call.1} parent=11 // pred_fallthru
          _
        // Predicated region
        $region25: #{tpu_custom_call.1} parent=11 // pred_check
          %p309 = pneg %p145
        $region26: #{tpu_custom_call.1} parent=11 // pred_check_branch
          %311 = sbr.rel (%p309) target = $region28
        $region27: #{tpu_custom_call.1} parent=11 // pred_region
          _
        $region28: #{tpu_custom_call.1} parent=11 // pred_fallthru
          _
        // Predicated region
        $region29: #{tpu_custom_call.1} parent=11 // pred_check
          %p312 = pneg %p166
        $region30: #{tpu_custom_call.1} parent=11 // pred_check_branch
          %314 = sbr.rel (%p312) target = $region32
        $region31: #{tpu_custom_call.1} parent=11 // pred_region
          _
        $region32: #{tpu_custom_call.1} parent=11 // pred_fallthru
          _
        // Predicated region
        $region33: #{tpu_custom_call.1} parent=11 // pred_check
          %p315 = pneg %p187
        $region34: #{tpu_custom_call.1} parent=11 // pred_check_branch
          %317 = sbr.rel (%p315) target = $region36
        $region35: #{tpu_custom_call.1} parent=11 // pred_region
          _
        $region36: #{tpu_custom_call.1} parent=11 // pred_fallthru
          _
        // Predicated region
        $region37: #{tpu_custom_call.1} parent=11 // pred_check
          %p318 = pneg %p208
        $region38: #{tpu_custom_call.1} parent=11 // pred_check_branch
          %320 = sbr.rel (%p318) target = $region40
        $region39: #{tpu_custom_call.1} parent=11 // pred_region
          _
        $region40: #{tpu_custom_call.1} parent=11 // pred_fallthru
          _
        // Predicated region
        $region41: #{tpu_custom_call.1} parent=11 // pred_check
          %p321 = pneg %p229
        $region42: #{tpu_custom_call.1} parent=11 // pred_check_branch
          %323 = sbr.rel (%p321) target = $region44
        $region43: #{tpu_custom_call.1} parent=11 // pred_region
          _
        $region44: #{tpu_custom_call.1} parent=11 // pred_fallthru
          _
      $region12: #{tpu_custom_call.1} parent=5 // pred_fallthru
        _
      %p324 = scmp.lt.s32.totalorder %s23, 2
      // Predicated region
      $region45: #{tpu_custom_call.1} parent=5 // pred_check
        %p325 = pneg %p324
      $region46: #{tpu_custom_call.1} parent=5 // pred_check_branch
        %327 = sbr.rel (%p325) target = $region48
      $region47: #{tpu_custom_call.1} parent=5 // pred_region
        // Predicated region
        $region49: #{tpu_custom_call.1} parent=47 // pred_check
          %p328 = pneg %p55
        $region50: #{tpu_custom_call.1} parent=47 // pred_check_branch
          %330 = sbr.rel (%p328) target = $region52
        $region51: #{tpu_custom_call.1} parent=47 // pred_region
          %p331 = scmp.lt.s32.totalorder %s30, 1
          %s332 = scalar_select %p331, %s30, 1
          %s333 = smul.addr %s332, 8
          %s334 = scalar_lea.vmem %s0, %s333
        $region52: #{tpu_custom_call.1} parent=47 // pred_fallthru
          _
      $region48: #{tpu_custom_call.1} parent=5 // pred_fallthru
        _
      %p335 = scmp.le.s32.totalorder 1, %s23
      %p336 = scmp.lt.s32.totalorder %s23, 3
      %p337 = pnand %p335, %p336
      %p338 = pneg %p337
      // Predicated region
      $region53: #{tpu_custom_call.1} parent=5 // pred_check
        _
      $region54: #{tpu_custom_call.1} parent=5 // pred_check_branch
        %340 = sbr.rel (%p337) target = $region56
      $region55: #{tpu_custom_call.1} parent=5 // pred_region
        %s341 = ssub.s32 %s23, 1
        %p342 = scmp.lt.s32.totalorder %s32, 1
        %s343 = scalar_select %p342, %s32, 1
        %s344 = smul.addr %s343, 8
        %s345 = scalar_lea.vmem %s0, %s344
        %p346 = pneg %p61
        %p347 = pneg %p58
        %p348 = pneg %p82
        %p349 = pneg %p79
        %p350 = pneg %p103
        %p351 = pneg %p100
        %p352 = pneg %p124
        %p353 = pneg %p121
        %p354 = pneg %p145
        %p355 = pneg %p142
        %p356 = pneg %p166
        %p357 = pneg %p163
        %p358 = pneg %p187
        %p359 = pneg %p184
        %p360 = pneg %p208
        %p361 = pneg %p205
        %p362 = pneg %p229
        %p363 = pneg %p226
        %p364 = pneg %p257
        %p365 = pneg %p254
        %s366 = sand.u32 %s244, 1
        %s367 = scalar_lea.sflag [#allocation5], %s366
        %s368 = sand.u32 %s244, 1
        %s369 = smul.addr %s368, 8
        %s370 = scalar_lea.vmem [#allocation4], %s369
        %p371 = pneg %p285
        %p372 = pneg %p282
        %s373 = sand.u32 %s272, 1
        %s374 = scalar_lea.sflag [#allocation7], %s373
        %s375 = sand.u32 %s272, 1
        %s376 = smul.addr %s375, 8
        %s377 = scalar_lea.vmem [#allocation6], %s376
        %p378 = scmp.lt.s32.totalorder %s32, 1
        %s379 = scalar_select %p378, %s32, 1
        %s380 = smul.addr %s379, 8
        %s381 = scalar_lea.vmem %s0, %s380
        %p382 = scmp.eq.s32.totalorder %s33, 0
        // Predicated region
        $region57: #{tpu_custom_call.1} parent=55 // pred_check
          %p383 = pneg %p382
        $region58: #{tpu_custom_call.1} parent=55 // pred_check_branch
          %385 = sbr.rel (%p383) target = $region60
        $region59: #{tpu_custom_call.1} parent=55 // pred_region
          %v386 = vld [vmem:[%s381] sm:$0xff]
          %v387 = vld [vmem:[%s3] sm:$0xff]
          %v388 = vld [vmem:[%s3 + $0x8] sm:$0xff]
          %v389 = vld [vmem:[%s3 + $0x10] sm:$0xff]
          %v390 = vld [vmem:[%s3 + $0x18] sm:$0xff]
          %v391 = vld [vmem:[%s4] sm:$0x1]
          %v393 = vlaneseq
          %v394 = vshrl.u32 %v393, 7
          %v395 = vsub.s32 0, %v394
          %v396 = vrot.slane %v391, %v395
          %vm398 = vcmask 261120
          %v400 = vsel %vm398, %v386, 0
          %402 = vmatprep.subr.mxu0 0.0
          %403 = vmatpush1.msra.mxu0 %v387
          %404 = vmatprep.subr.mxu0 0.0
          %405 = vmatpush1.msra.mxu0 %v388
          %406 = vmatprep.subr.mxu0 0.0
          %407 = vmatpush1.msra.mxu0 %v389
          %408 = vmatprep.subr.mxu0 0.0
          %409 = vmatpush1.msra.mxu0 %v390
          %410 = vmatprep.subr.mxu0 0.0
          %411 = vmatpush1.msra.mxu0 0.0
          %412 = vmatprep.subr.mxu0 0.0
          %413 = vmatpush1.msra.mxu0 0.0
          %414 = vmatprep.subr.mxu0 0.0
          %415 = vmatpush1.msra.mxu0 0.0
          %416 = vmatprep.subr.mxu0 0.0
          %417 = vmatpush1.msra.mxu0 0.0
          %418 = vmatprep.subr.mxu0 0.0
          %419 = vmatpush1.msra.mxu0 0.0
          %420 = vmatprep.subr.mxu0 0.0
          %421 = vmatpush1.msra.mxu0 0.0
          %422 = vmatprep.subr.mxu0 0.0
          %423 = vmatpush1.msra.mxu0 0.0
          %424 = vmatprep.subr.mxu0 0.0
          %425 = vmatpush1.msra.mxu0 0.0
          %426 = vmatprep.subr.mxu0 0.0
          %427 = vmatpush1.msra.mxu0 0.0
          %428 = vmatprep.subr.mxu0 0.0
          %429 = vmatpush1.msra.mxu0 0.0
          %430 = vmatprep.subr.mxu0 0.0
          %431 = vmatpush1.msra.mxu0 0.0
          %432 = vmatprep.subr.mxu0 0.0
          %433 = vmatpush1.msra.mxu0 0.0
          %434 = vmatprep.subr.mxu0 0.0
          %435 = vmatpush1.msra.mxu0 0.0
          %436 = vmatprep.subr.mxu0 0.0
          %437 = vmatpush1.msra.mxu0 0.0
          %438 = vmatprep.subr.mxu0 0.0
          %439 = vmatpush1.msra.mxu0 0.0
          %440 = vmatprep.subr.mxu0 0.0
          %441 = vmatpush1.msra.mxu0 0.0
          %442 = vmatprep.subr.mxu0 0.0
          %443 = vmatpush1.msra.mxu0 0.0
          %444 = vmatprep.subr.mxu0 0.0
          %445 = vmatpush1.msra.mxu0 0.0
          %446 = vmatprep.subr.mxu0 0.0
          %447 = vmatpush1.msra.mxu0 0.0
          %448 = vmatprep.subr.mxu0 0.0
          %449 = vmatpush1.msra.mxu0 0.0
          %450 = vmatprep.subr.mxu0 0.0
          %451 = vmatpush1.msra.mxu0 0.0
          %452 = vmatprep.subr.mxu0 0.0
          %453 = vmatpush1.msra.mxu0 0.0
          %454 = vmatprep.subr.mxu0 0.0
          %455 = vmatpush1.msra.mxu0 0.0
          %456 = vmatprep.subr.mxu0 0.0
          %457 = vmatpush1.msra.mxu0 0.0
          %458 = vmatprep.subr.mxu0 0.0
          %459 = vmatpush1.msra.mxu0 0.0
          %460 = vmatprep.subr.mxu0 0.0
          %461 = vmatpush1.msra.mxu0 0.0
          %462 = vmatprep.subr.mxu0 0.0
          %463 = vmatpush1.msra.mxu0 0.0
          %464 = vmatprep.subr.mxu0 0.0
          %465 = vmatpush1.msra.mxu0 0.0
          %466 = vmatprep.mubr.f32.mxu0 0.0
          %467 = vmatmul.mubr.f32.gmra.mrb[0].mxu0 %v400
          %v468 = vpop.f32.mrb[0].mxu0
          %v469 = vadd.f32 %v396, %v468
          %v470 = vpop.f32.mrb[0].mxu0
          %471 = vdwg.mxu0
          %v472 = vld [vmem:[%s5] sm:$0xff]
          %v473 = vld [vmem:[%s5 + $0x8] sm:$0xff]
          %v474 = vld [vmem:[%s5 + $0x10] sm:$0xff]
          %v475 = vld [vmem:[%s5 + $0x18] sm:$0xff]
          %v476 = vld [vmem:[%s6] sm:$0x1]
          %v478 = vlaneseq
          %v479 = vshrl.u32 %v478, 7
          %v480 = vsub.s32 0, %v479
          %v481 = vrot.slane %v476, %v480
          %483 = vmatprep.subr.mxu0 0.0
          %484 = vmatpush1.msra.mxu0 %v472
          %485 = vmatprep.subr.mxu0 0.0
          %486 = vmatpush1.msra.mxu0 %v473
          %487 = vmatprep.subr.mxu0 0.0
          %488 = vmatpush1.msra.mxu0 %v474
          %489 = vmatprep.subr.mxu0 0.0
          %490 = vmatpush1.msra.mxu0 %v475
          %491 = vmatprep.subr.mxu0 0.0
          %492 = vmatpush1.msra.mxu0 0.0
          %493 = vmatprep.subr.mxu0 0.0
          %494 = vmatpush1.msra.mxu0 0.0
          %495 = vmatprep.subr.mxu0 0.0
          %496 = vmatpush1.msra.mxu0 0.0
          %497 = vmatprep.subr.mxu0 0.0
          %498 = vmatpush1.msra.mxu0 0.0
          %499 = vmatprep.subr.mxu0 0.0
          %500 = vmatpush1.msra.mxu0 0.0
          %501 = vmatprep.subr.mxu0 0.0
          %502 = vmatpush1.msra.mxu0 0.0
          %503 = vmatprep.subr.mxu0 0.0
          %504 = vmatpush1.msra.mxu0 0.0
          %505 = vmatprep.subr.mxu0 0.0
          %506 = vmatpush1.msra.mxu0 0.0
          %507 = vmatprep.subr.mxu0 0.0
          %508 = vmatpush1.msra.mxu0 0.0
          %509 = vmatprep.subr.mxu0 0.0
          %510 = vmatpush1.msra.mxu0 0.0
          %511 = vmatprep.subr.mxu0 0.0
          %512 = vmatpush1.msra.mxu0 0.0
          %513 = vmatprep.subr.mxu0 0.0
          %514 = vmatpush1.msra.mxu0 0.0
          %515 = vmatprep.subr.mxu0 0.0
          %516 = vmatpush1.msra.mxu0 0.0
          %517 = vmatprep.subr.mxu0 0.0
          %518 = vmatpush1.msra.mxu0 0.0
          %519 = vmatprep.subr.mxu0 0.0
          %520 = vmatpush1.msra.mxu0 0.0
          %521 = vmatprep.subr.mxu0 0.0
          %522 = vmatpush1.msra.mxu0 0.0
          %523 = vmatprep.subr.mxu0 0.0
          %524 = vmatpush1.msra.mxu0 0.0
          %525 = vmatprep.subr.mxu0 0.0
          %526 = vmatpush1.msra.mxu0 0.0
          %527 = vmatprep.subr.mxu0 0.0
          %528 = vmatpush1.msra.mxu0 0.0
          %529 = vmatprep.subr.mxu0 0.0
          %530 = vmatpush1.msra.mxu0 0.0
          %531 = vmatprep.subr.mxu0 0.0
          %532 = vmatpush1.msra.mxu0 0.0
          %533 = vmatprep.subr.mxu0 0.0
          %534 = vmatpush1.msra.mxu0 0.0
          %535 = vmatprep.subr.mxu0 0.0
          %536 = vmatpush1.msra.mxu0 0.0
          %537 = vmatprep.subr.mxu0 0.0
          %538 = vmatpush1.msra.mxu0 0.0
          %539 = vmatprep.subr.mxu0 0.0
          %540 = vmatpush1.msra.mxu0 0.0
          %541 = vmatprep.subr.mxu0 0.0
          %542 = vmatpush1.msra.mxu0 0.0
          %543 = vmatprep.subr.mxu0 0.0
          %544 = vmatpush1.msra.mxu0 0.0
          %545 = vmatprep.subr.mxu0 0.0
          %546 = vmatpush1.msra.mxu0 0.0
          %547 = vmatprep.mubr.f32.mxu0 0.0
          %548 = vmatmul.mubr.f32.gmra.mrb[0].mxu0 %v400
          %v549 = vpop.f32.mrb[0].mxu0
          %v550 = vadd.f32 %v481, %v549
          %v551 = vpop.f32.mrb[0].mxu0
          %552 = vdwg.mxu0
          %vm553 = vcmask 64512
          %554 = vst.msk [vmem:[#allocation2] sm:$0xff] %vm553, %v469
          %555 = vst.msk [vmem:[#allocation3] sm:$0xff] %vm553, %v550
          %s556 = scalar_lea.vmem %s3, 32
          %v557 = vld [vmem:[%s556] sm:$0xff]
          %v558 = vld [vmem:[%s556 + $0x8] sm:$0xff]
          %v559 = vld [vmem:[%s556 + $0x10] sm:$0xff]
          %v560 = vld [vmem:[%s556 + $0x18] sm:$0xff]
          %s561 = scalar_lea.vmem %s4, 1
          %v562 = vld [vmem:[%s561] sm:$0x1]
          %v564 = vlaneseq
          %v565 = vshrl.u32 %v564, 7
          %v566 = vsub.s32 0, %v565
          %v567 = vrot.slane %v562, %v566
          %569 = vmatprep.subr.mxu0 0.0
          %570 = vmatpush1.msra.mxu0 %v557
          %571 = vmatprep.subr.mxu0 0.0
          %572 = vmatpush1.msra.mxu0 %v558
          %573 = vmatprep.subr.mxu0 0.0
          %574 = vmatpush1.msra.mxu0 %v559
          %575 = vmatprep.subr.mxu0 0.0
          %576 = vmatpush1.msra.mxu0 %v560
          %577 = vmatprep.subr.mxu0 0.0
          %578 = vmatpush1.msra.mxu0 0.0
          %579 = vmatprep.subr.mxu0 0.0
          %580 = vmatpush1.msra.mxu0 0.0
          %581 = vmatprep.subr.mxu0 0.0
          %582 = vmatpush1.msra.mxu0 0.0
          %583 = vmatprep.subr.mxu0 0.0
          %584 = vmatpush1.msra.mxu0 0.0
          %585 = vmatprep.subr.mxu0 0.0
          %586 = vmatpush1.msra.mxu0 0.0
          %587 = vmatprep.subr.mxu0 0.0
          %588 = vmatpush1.msra.mxu0 0.0
          %589 = vmatprep.subr.mxu0 0.0
          %590 = vmatpush1.msra.mxu0 0.0
          %591 = vmatprep.subr.mxu0 0.0
          %592 = vmatpush1.msra.mxu0 0.0
          %593 = vmatprep.subr.mxu0 0.0
          %594 = vmatpush1.msra.mxu0 0.0
          %595 = vmatprep.subr.mxu0 0.0
          %596 = vmatpush1.msra.mxu0 0.0
          %597 = vmatprep.subr.mxu0 0.0
          %598 = vmatpush1.msra.mxu0 0.0
          %599 = vmatprep.subr.mxu0 0.0
          %600 = vmatpush1.msra.mxu0 0.0
          %601 = vmatprep.subr.mxu0 0.0
          %602 = vmatpush1.msra.mxu0 0.0
          %603 = vmatprep.subr.mxu0 0.0
          %604 = vmatpush1.msra.mxu0 0.0
          %605 = vmatprep.subr.mxu0 0.0
          %606 = vmatpush1.msra.mxu0 0.0
          %607 = vmatprep.subr.mxu0 0.0
          %608 = vmatpush1.msra.mxu0 0.0
          %609 = vmatprep.subr.mxu0 0.0
          %610 = vmatpush1.msra.mxu0 0.0
          %611 = vmatprep.subr.mxu0 0.0
          %612 = vmatpush1.msra.mxu0 0.0
          %613 = vmatprep.subr.mxu0 0.0
          %614 = vmatpush1.msra.mxu0 0.0
          %615 = vmatprep.subr.mxu0 0.0
          %616 = vmatpush1.msra.mxu0 0.0
          %617 = vmatprep.subr.mxu0 0.0
          %618 = vmatpush1.msra.mxu0 0.0
          %619 = vmatprep.subr.mxu0 0.0
          %620 = vmatpush1.msra.mxu0 0.0
          %621 = vmatprep.subr.mxu0 0.0
          %622 = vmatpush1.msra.mxu0 0.0
          %623 = vmatprep.subr.mxu0 0.0
          %624 = vmatpush1.msra.mxu0 0.0
          %625 = vmatprep.subr.mxu0 0.0
          %626 = vmatpush1.msra.mxu0 0.0
          %627 = vmatprep.subr.mxu0 0.0
          %628 = vmatpush1.msra.mxu0 0.0
          %629 = vmatprep.subr.mxu0 0.0
          %630 = vmatpush1.msra.mxu0 0.0
          %631 = vmatprep.subr.mxu0 0.0
          %632 = vmatpush1.msra.mxu0 0.0
          %633 = vmatprep.mubr.f32.mxu0 0.0
          %634 = vmatmul.mubr.f32.gmra.mrb[0].mxu0 %v400
          %v635 = vpop.f32.mrb[0].mxu0
          %v636 = vadd.f32 %v567, %v635
          %v637 = vpop.f32.mrb[0].mxu0
          %638 = vdwg.mxu0
          %s639 = scalar_lea.vmem %s5, 32
          %v640 = vld [vmem:[%s639] sm:$0xff]
          %v641 = vld [vmem:[%s639 + $0x8] sm:$0xff]
          %v642 = vld [vmem:[%s639 + $0x10] sm:$0xff]
          %v643 = vld [vmem:[%s639 + $0x18] sm:$0xff]
          %s644 = scalar_lea.vmem %s6, 1
          %v645 = vld [vmem:[%s644] sm:$0x1]
          %v647 = vlaneseq
          %v648 = vshrl.u32 %v647, 7
          %v649 = vsub.s32 0, %v648
          %v650 = vrot.slane %v645, %v649
          %652 = vmatprep.subr.mxu0 0.0
          %653 = vmatpush1.msra.mxu0 %v640
          %654 = vmatprep.subr.mxu0 0.0
          %655 = vmatpush1.msra.mxu0 %v641
          %656 = vmatprep.subr.mxu0 0.0
          %657 = vmatpush1.msra.mxu0 %v642
          %658 = vmatprep.subr.mxu0 0.0
          %659 = vmatpush1.msra.mxu0 %v643
          %660 = vmatprep.subr.mxu0 0.0
          %661 = vmatpush1.msra.mxu0 0.0
          %662 = vmatprep.subr.mxu0 0.0
          %663 = vmatpush1.msra.mxu0 0.0
          %664 = vmatprep.subr.mxu0 0.0
          %665 = vmatpush1.msra.mxu0 0.0
          %666 = vmatprep.subr.mxu0 0.0
          %667 = vmatpush1.msra.mxu0 0.0
          %668 = vmatprep.subr.mxu0 0.0
          %669 = vmatpush1.msra.mxu0 0.0
          %670 = vmatprep.subr.mxu0 0.0
          %671 = vmatpush1.msra.mxu0 0.0
          %672 = vmatprep.subr.mxu0 0.0
          %673 = vmatpush1.msra.mxu0 0.0
          %674 = vmatprep.subr.mxu0 0.0
          %675 = vmatpush1.msra.mxu0 0.0
          %676 = vmatprep.subr.mxu0 0.0
          %677 = vmatpush1.msra.mxu0 0.0
          %678 = vmatprep.subr.mxu0 0.0
          %679 = vmatpush1.msra.mxu0 0.0
          %680 = vmatprep.subr.mxu0 0.0
          %681 = vmatpush1.msra.mxu0 0.0
          %682 = vmatprep.subr.mxu0 0.0
          %683 = vmatpush1.msra.mxu0 0.0
          %684 = vmatprep.subr.mxu0 0.0
          %685 = vmatpush1.msra.mxu0 0.0
          %686 = vmatprep.subr.mxu0 0.0
          %687 = vmatpush1.msra.mxu0 0.0
          %688 = vmatprep.subr.mxu0 0.0
          %689 = vmatpush1.msra.mxu0 0.0
          %690 = vmatprep.subr.mxu0 0.0
          %691 = vmatpush1.msra.mxu0 0.0
          %692 = vmatprep.subr.mxu0 0.0
          %693 = vmatpush1.msra.mxu0 0.0
          %694 = vmatprep.subr.mxu0 0.0
          %695 = vmatpush1.msra.mxu0 0.0
          %696 = vmatprep.subr.mxu0 0.0
          %697 = vmatpush1.msra.mxu0 0.0
          %698 = vmatprep.subr.mxu0 0.0
          %699 = vmatpush1.msra.mxu0 0.0
          %700 = vmatprep.subr.mxu0 0.0
          %701 = vmatpush1.msra.mxu0 0.0
          %702 = vmatprep.subr.mxu0 0.0
          %703 = vmatpush1.msra.mxu0 0.0
          %704 = vmatprep.subr.mxu0 0.0
          %705 = vmatpush1.msra.mxu0 0.0
          %706 = vmatprep.subr.mxu0 0.0
          %707 = vmatpush1.msra.mxu0 0.0
          %708 = vmatprep.subr.mxu0 0.0
          %709 = vmatpush1.msra.mxu0 0.0
          %710 = vmatprep.subr.mxu0 0.0
          %711 = vmatpush1.msra.mxu0 0.0
          %712 = vmatprep.subr.mxu0 0.0
          %713 = vmatpush1.msra.mxu0 0.0
          %714 = vmatprep.subr.mxu0 0.0
          %715 = vmatpush1.msra.mxu0 0.0
          %716 = vmatprep.mubr.f32.mxu0 0.0
          %717 = vmatmul.mubr.f32.gmra.mrb[0].mxu0 %v400
          %v718 = vpop.f32.mrb[0].mxu0
          %v719 = vadd.f32 %v650, %v718
          %v720 = vpop.f32.mrb[0].mxu0
          %721 = vdwg.mxu0
          %s722 = scalar_lea.vmem [#allocation2], 8
          %723 = vst.msk [vmem:[%s722] sm:$0xff] %vm553, %v636
          %s724 = scalar_lea.vmem [#allocation3], 8
          %725 = vst.msk [vmem:[%s724] sm:$0xff] %vm553, %v719
          %s726 = scalar_lea.vmem %s3, 64
          %v727 = vld [vmem:[%s726] sm:$0xff]
          %v728 = vld [vmem:[%s726 + $0x8] sm:$0xff]
          %v729 = vld [vmem:[%s726 + $0x10] sm:$0xff]
          %v730 = vld [vmem:[%s726 + $0x18] sm:$0xff]
          %s731 = scalar_lea.vmem %s4, 2
          %v732 = vld [vmem:[%s731] sm:$0x1]
          %v734 = vlaneseq
          %v735 = vshrl.u32 %v734, 7
          %v736 = vsub.s32 0, %v735
          %v737 = vrot.slane %v732, %v736
          %739 = vmatprep.subr.mxu0 0.0
          %740 = vmatpush1.msra.mxu0 %v727
          %741 = vmatprep.subr.mxu0 0.0
          %742 = vmatpush1.msra.mxu0 %v728
          %743 = vmatprep.subr.mxu0 0.0
          %744 = vmatpush1.msra.mxu0 %v729
          %745 = vmatprep.subr.mxu0 0.0
          %746 = vmatpush1.msra.mxu0 %v730
          %747 = vmatprep.subr.mxu0 0.0
          %748 = vmatpush1.msra.mxu0 0.0
          %749 = vmatprep.subr.mxu0 0.0
          %750 = vmatpush1.msra.mxu0 0.0
          %751 = vmatprep.subr.mxu0 0.0
          %752 = vmatpush1.msra.mxu0 0.0
          %753 = vmatprep.subr.mxu0 0.0
          %754 = vmatpush1.msra.mxu0 0.0
          %755 = vmatprep.subr.mxu0 0.0
          %756 = vmatpush1.msra.mxu0 0.0
          %757 = vmatprep.subr.mxu0 0.0
          %758 = vmatpush1.msra.mxu0 0.0
          %759 = vmatprep.subr.mxu0 0.0
          %760 = vmatpush1.msra.mxu0 0.0
          %761 = vmatprep.subr.mxu0 0.0
          %762 = vmatpush1.msra.mxu0 0.0
          %763 = vmatprep.subr.mxu0 0.0
          %764 = vmatpush1.msra.mxu0 0.0
          %765 = vmatprep.subr.mxu0 0.0
          %766 = vmatpush1.msra.mxu0 0.0
          %767 = vmatprep.subr.mxu0 0.0
          %768 = vmatpush1.msra.mxu0 0.0
          %769 = vmatprep.subr.mxu0 0.0
          %770 = vmatpush1.msra.mxu0 0.0
          %771 = vmatprep.subr.mxu0 0.0
          %772 = vmatpush1.msra.mxu0 0.0
          %773 = vmatprep.subr.mxu0 0.0
          %774 = vmatpush1.msra.mxu0 0.0
          %775 = vmatprep.subr.mxu0 0.0
          %776 = vmatpush1.msra.mxu0 0.0
          %777 = vmatprep.subr.mxu0 0.0
          %778 = vmatpush1.msra.mxu0 0.0
          %779 = vmatprep.subr.mxu0 0.0
          %780 = vmatpush1.msra.mxu0 0.0
          %781 = vmatprep.subr.mxu0 0.0
          %782 = vmatpush1.msra.mxu0 0.0
          %783 = vmatprep.subr.mxu0 0.0
          %784 = vmatpush1.msra.mxu0 0.0
          %785 = vmatprep.subr.mxu0 0.0
          %786 = vmatpush1.msra.mxu0 0.0
          %787 = vmatprep.subr.mxu0 0.0
          %788 = vmatpush1.msra.mxu0 0.0
          %789 = vmatprep.subr.mxu0 0.0
          %790 = vmatpush1.msra.mxu0 0.0
          %791 = vmatprep.subr.mxu0 0.0
          %792 = vmatpush1.msra.mxu0 0.0
          %793 = vmatprep.subr.mxu0 0.0
          %794 = vmatpush1.msra.mxu0 0.0
          %795 = vmatprep.subr.mxu0 0.0
          %796 = vmatpush1.msra.mxu0 0.0
          %797 = vmatprep.subr.mxu0 0.0
          %798 = vmatpush1.msra.mxu0 0.0
          %799 = vmatprep.subr.mxu0 0.0
          %800 = vmatpush1.msra.mxu0 0.0
          %801 = vmatprep.subr.mxu0 0.0
          %802 = vmatpush1.msra.mxu0 0.0
          %803 = vmatprep.mubr.f32.mxu0 0.0
          %804 = vmatmul.mubr.f32.gmra.mrb[0].mxu0 %v400
          %v805 = vpop.f32.mrb[0].mxu0
          %v806 = vadd.f32 %v737, %v805
          %v807 = vpop.f32.mrb[0].mxu0
          %808 = vdwg.mxu0
          %s809 = scalar_lea.vmem %s5, 64
          %v810 = vld [vmem:[%s809] sm:$0xff]
          %v811 = vld [vmem:[%s809 + $0x8] sm:$0xff]
          %v812 = vld [vmem:[%s809 + $0x10] sm:$0xff]
          %v813 = vld [vmem:[%s809 + $0x18] sm:$0xff]
          %s814 = scalar_lea.vmem %s6, 2
          %v815 = vld [vmem:[%s814] sm:$0x1]
          %v817 = vlaneseq
          %v818 = vshrl.u32 %v817, 7
          %v819 = vsub.s32 0, %v818
          %v820 = vrot.slane %v815, %v819
          %822 = vmatprep.subr.mxu0 0.0
          %823 = vmatpush1.msra.mxu0 %v810
          %824 = vmatprep.subr.mxu0 0.0
          %825 = vmatpush1.msra.mxu0 %v811
          %826 = vmatprep.subr.mxu0 0.0
          %827 = vmatpush1.msra.mxu0 %v812
          %828 = vmatprep.subr.mxu0 0.0
          %829 = vmatpush1.msra.mxu0 %v813
          %830 = vmatprep.subr.mxu0 0.0
          %831 = vmatpush1.msra.mxu0 0.0
          %832 = vmatprep.subr.mxu0 0.0
          %833 = vmatpush1.msra.mxu0 0.0
          %834 = vmatprep.subr.mxu0 0.0
          %835 = vmatpush1.msra.mxu0 0.0
          %836 = vmatprep.subr.mxu0 0.0
          %837 = vmatpush1.msra.mxu0 0.0
          %838 = vmatprep.subr.mxu0 0.0
          %839 = vmatpush1.msra.mxu0 0.0
          %840 = vmatprep.subr.mxu0 0.0
          %841 = vmatpush1.msra.mxu0 0.0
          %842 = vmatprep.subr.mxu0 0.0
          %843 = vmatpush1.msra.mxu0 0.0
          %844 = vmatprep.subr.mxu0 0.0
          %845 = vmatpush1.msra.mxu0 0.0
          %846 = vmatprep.subr.mxu0 0.0
          %847 = vmatpush1.msra.mxu0 0.0
          %848 = vmatprep.subr.mxu0 0.0
          %849 = vmatpush1.msra.mxu0 0.0
          %850 = vmatprep.subr.mxu0 0.0
          %851 = vmatpush1.msra.mxu0 0.0
          %852 = vmatprep.subr.mxu0 0.0
          %853 = vmatpush1.msra.mxu0 0.0
          %854 = vmatprep.subr.mxu0 0.0
          %855 = vmatpush1.msra.mxu0 0.0
          %856 = vmatprep.subr.mxu0 0.0
          %857 = vmatpush1.msra.mxu0 0.0
          %858 = vmatprep.subr.mxu0 0.0
          %859 = vmatpush1.msra.mxu0 0.0
          %860 = vmatprep.subr.mxu0 0.0
          %861 = vmatpush1.msra.mxu0 0.0
          %862 = vmatprep.subr.mxu0 0.0
          %863 = vmatpush1.msra.mxu0 0.0
          %864 = vmatprep.subr.mxu0 0.0
          %865 = vmatpush1.msra.mxu0 0.0
          %866 = vmatprep.subr.mxu0 0.0
          %867 = vmatpush1.msra.mxu0 0.0
          %868 = vmatprep.subr.mxu0 0.0
          %869 = vmatpush1.msra.mxu0 0.0
          %870 = vmatprep.subr.mxu0 0.0
          %871 = vmatpush1.msra.mxu0 0.0
          %872 = vmatprep.subr.mxu0 0.0
          %873 = vmatpush1.msra.mxu0 0.0
          %874 = vmatprep.subr.mxu0 0.0
          %875 = vmatpush1.msra.mxu0 0.0
          %876 = vmatprep.subr.mxu0 0.0
          %877 = vmatpush1.msra.mxu0 0.0
          %878 = vmatprep.subr.mxu0 0.0
          %879 = vmatpush1.msra.mxu0 0.0
          %880 = vmatprep.subr.mxu0 0.0
          %881 = vmatpush1.msra.mxu0 0.0
          %882 = vmatprep.subr.mxu0 0.0
          %883 = vmatpush1.msra.mxu0 0.0
          %884 = vmatprep.subr.mxu0 0.0
          %885 = vmatpush1.msra.mxu0 0.0
          %886 = vmatprep.mubr.f32.mxu0 0.0
          %887 = vmatmul.mubr.f32.gmra.mrb[0].mxu0 %v400
          %v888 = vpop.f32.mrb[0].mxu0
          %v889 = vadd.f32 %v820, %v888
          %v890 = vpop.f32.mrb[0].mxu0
          %891 = vdwg.mxu0
          %s892 = scalar_lea.vmem [#allocation2], 16
          %893 = vst.msk [vmem:[%s892] sm:$0xff] %vm553, %v806
          %s894 = scalar_lea.vmem [#allocation3], 16
          %895 = vst.msk [vmem:[%s894] sm:$0xff] %vm553, %v889
          %s896 = scalar_lea.vmem %s3, 96
          %v897 = vld [vmem:[%s896] sm:$0xff]
          %v898 = vld [vmem:[%s896 + $0x8] sm:$0xff]
          %v899 = vld [vmem:[%s896 + $0x10] sm:$0xff]
          %v900 = vld [vmem:[%s896 + $0x18] sm:$0xff]
          %s901 = scalar_lea.vmem %s4, 3
          %v902 = vld [vmem:[%s901] sm:$0x1]
          %v904 = vlaneseq
          %v905 = vshrl.u32 %v904, 7
          %v906 = vsub.s32 0, %v905
          %v907 = vrot.slane %v902, %v906
          %909 = vmatprep.subr.mxu0 0.0
          %910 = vmatpush1.msra.mxu0 %v897
          %911 = vmatprep.subr.mxu0 0.0
          %912 = vmatpush1.msra.mxu0 %v898
          %913 = vmatprep.subr.mxu0 0.0
          %914 = vmatpush1.msra.mxu0 %v899
          %915 = vmatprep.subr.mxu0 0.0
          %916 = vmatpush1.msra.mxu0 %v900
          %917 = vmatprep.subr.mxu0 0.0
          %918 = vmatpush1.msra.mxu0 0.0
          %919 = vmatprep.subr.mxu0 0.0
          %920 = vmatpush1.msra.mxu0 0.0
          %921 = vmatprep.subr.mxu0 0.0
          %922 = vmatpush1.msra.mxu0 0.0
          %923 = vmatprep.subr.mxu0 0.0
          %924 = vmatpush1.msra.mxu0 0.0
          %925 = vmatprep.subr.mxu0 0.0
          %926 = vmatpush1.msra.mxu0 0.0
          %927 = vmatprep.subr.mxu0 0.0
          %928 = vmatpush1.msra.mxu0 0.0
          %929 = vmatprep.subr.mxu0 0.0
          %930 = vmatpush1.msra.mxu0 0.0
          %931 = vmatprep.subr.mxu0 0.0
          %932 = vmatpush1.msra.mxu0 0.0
          %933 = vmatprep.subr.mxu0 0.0
          %934 = vmatpush1.msra.mxu0 0.0
          %935 = vmatprep.subr.mxu0 0.0
          %936 = vmatpush1.msra.mxu0 0.0
          %937 = vmatprep.subr.mxu0 0.0
          %938 = vmatpush1.msra.mxu0 0.0
          %939 = vmatprep.subr.mxu0 0.0
          %940 = vmatpush1.msra.mxu0 0.0
          %941 = vmatprep.subr.mxu0 0.0
          %942 = vmatpush1.msra.mxu0 0.0
          %943 = vmatprep.subr.mxu0 0.0
          %944 = vmatpush1.msra.mxu0 0.0
          %945 = vmatprep.subr.mxu0 0.0
          %946 = vmatpush1.msra.mxu0 0.0
          %947 = vmatprep.subr.mxu0 0.0
          %948 = vmatpush1.msra.mxu0 0.0
          %949 = vmatprep.subr.mxu0 0.0
          %950 = vmatpush1.msra.mxu0 0.0
          %951 = vmatprep.subr.mxu0 0.0
          %952 = vmatpush1.msra.mxu0 0.0
          %953 = vmatprep.subr.mxu0 0.0
          %954 = vmatpush1.msra.mxu0 0.0
          %955 = vmatprep.subr.mxu0 0.0
          %956 = vmatpush1.msra.mxu0 0.0
          %957 = vmatprep.subr.mxu0 0.0
          %958 = vmatpush1.msra.mxu0 0.0
          %959 = vmatprep.subr.mxu0 0.0
          %960 = vmatpush1.msra.mxu0 0.0
          %961 = vmatprep.subr.mxu0 0.0
          %962 = vmatpush1.msra.mxu0 0.0
          %963 = vmatprep.subr.mxu0 0.0
          %964 = vmatpush1.msra.mxu0 0.0
          %965 = vmatprep.subr.mxu0 0.0
          %966 = vmatpush1.msra.mxu0 0.0
          %967 = vmatprep.subr.mxu0 0.0
          %968 = vmatpush1.msra.mxu0 0.0
          %969 = vmatprep.subr.mxu0 0.0
          %970 = vmatpush1.msra.mxu0 0.0
          %971 = vmatprep.subr.mxu0 0.0
          %972 = vmatpush1.msra.mxu0 0.0
          %973 = vmatprep.mubr.f32.mxu0 0.0
          %974 = vmatmul.mubr.f32.gmra.mrb[0].mxu0 %v400
          %v975 = vpop.f32.mrb[0].mxu0
          %v976 = vadd.f32 %v907, %v975
          %v977 = vpop.f32.mrb[0].mxu0
          %978 = vdwg.mxu0
          %s979 = scalar_lea.vmem %s5, 96
          %v980 = vld [vmem:[%s979] sm:$0xff]
          %v981 = vld [vmem:[%s979 + $0x8] sm:$0xff]
          %v982 = vld [vmem:[%s979 + $0x10] sm:$0xff]
          %v983 = vld [vmem:[%s979 + $0x18] sm:$0xff]
          %s984 = scalar_lea.vmem %s6, 3
          %v985 = vld [vmem:[%s984] sm:$0x1]
          %v987 = vlaneseq
          %v988 = vshrl.u32 %v987, 7
          %v989 = vsub.s32 0, %v988
          %v990 = vrot.slane %v985, %v989
          %992 = vmatprep.subr.mxu0 0.0
          %993 = vmatpush1.msra.mxu0 %v980
          %994 = vmatprep.subr.mxu0 0.0
          %995 = vmatpush1.msra.mxu0 %v981
          %996 = vmatprep.subr.mxu0 0.0
          %997 = vmatpush1.msra.mxu0 %v982
          %998 = vmatprep.subr.mxu0 0.0
          %999 = vmatpush1.msra.mxu0 %v983
          %1000 = vmatprep.subr.mxu0 0.0
          %1001 = vmatpush1.msra.mxu0 0.0
          %1002 = vmatprep.subr.mxu0 0.0
          %1003 = vmatpush1.msra.mxu0 0.0
          %1004 = vmatprep.subr.mxu0 0.0
          %1005 = vmatpush1.msra.mxu0 0.0
          %1006 = vmatprep.subr.mxu0 0.0
          %1007 = vmatpush1.msra.mxu0 0.0
          %1008 = vmatprep.subr.mxu0 0.0
          %1009 = vmatpush1.msra.mxu0 0.0
          %1010 = vmatprep.subr.mxu0 0.0
          %1011 = vmatpush1.msra.mxu0 0.0
          %1012 = vmatprep.subr.mxu0 0.0
          %1013 = vmatpush1.msra.mxu0 0.0
          %1014 = vmatprep.subr.mxu0 0.0
          %1015 = vmatpush1.msra.mxu0 0.0
          %1016 = vmatprep.subr.mxu0 0.0
          %1017 = vmatpush1.msra.mxu0 0.0
          %1018 = vmatprep.subr.mxu0 0.0
          %1019 = vmatpush1.msra.mxu0 0.0
          %1020 = vmatprep.subr.mxu0 0.0
          %1021 = vmatpush1.msra.mxu0 0.0
          %1022 = vmatprep.subr.mxu0 0.0
          %1023 = vmatpush1.msra.mxu0 0.0
          %1024 = vmatprep.subr.mxu0 0.0
          %1025 = vmatpush1.msra.mxu0 0.0
          %1026 = vmatprep.subr.mxu0 0.0
          %1027 = vmatpush1.msra.mxu0 0.0
          %1028 = vmatprep.subr.mxu0 0.0
          %1029 = vmatpush1.msra.mxu0 0.0
          %1030 = vmatprep.subr.mxu0 0.0
          %1031 = vmatpush1.msra.mxu0 0.0
          %1032 = vmatprep.subr.mxu0 0.0
          %1033 = vmatpush1.msra.mxu0 0.0
          %1034 = vmatprep.subr.mxu0 0.0
          %1035 = vmatpush1.msra.mxu0 0.0
          %1036 = vmatprep.subr.mxu0 0.0
          %1037 = vmatpush1.msra.mxu0 0.0
          %1038 = vmatprep.subr.mxu0 0.0
          %1039 = vmatpush1.msra.mxu0 0.0
          %1040 = vmatprep.subr.mxu0 0.0
          %1041 = vmatpush1.msra.mxu0 0.0
          %1042 = vmatprep.subr.mxu0 0.0
          %1043 = vmatpush1.msra.mxu0 0.0
          %1044 = vmatprep.subr.mxu0 0.0
          %1045 = vmatpush1.msra.mxu0 0.0
          %1046 = vmatprep.subr.mxu0 0.0
          %1047 = vmatpush1.msra.mxu0 0.0
          %1048 = vmatprep.subr.mxu0 0.0
          %1049 = vmatpush1.msra.mxu0 0.0
          %1050 = vmatprep.subr.mxu0 0.0
          %1051 = vmatpush1.msra.mxu0 0.0
          %1052 = vmatprep.subr.mxu0 0.0
          %1053 = vmatpush1.msra.mxu0 0.0
          %1054 = vmatprep.subr.mxu0 0.0
          %1055 = vmatpush1.msra.mxu0 0.0
          %1056 = vmatprep.mubr.f32.mxu0 0.0
          %1057 = vmatmul.mubr.f32.gmra.mrb[0].mxu0 %v400
          %v1058 = vpop.f32.mrb[0].mxu0
          %v1059 = vadd.f32 %v990, %v1058
          %v1060 = vpop.f32.mrb[0].mxu0
          %1061 = vdwg.mxu0
          %s1062 = scalar_lea.vmem [#allocation2], 24
          %1063 = vst.msk [vmem:[%s1062] sm:$0xff] %vm553, %v976
          %s1064 = scalar_lea.vmem [#allocation3], 24
          %1065 = vst.msk [vmem:[%s1064] sm:$0xff] %vm553, %v1059
        $region60: #{tpu_custom_call.1} parent=55 // pred_fallthru
          _
        %s1066 = smul.u32 %s33, 8
        %s1067 = scalar_lea.vmem %s381, %s1066
        %v1068 = vld [vmem:[%s1067] sm:$0xff]
        %v1069 = vld [vmem:[%s1] sm:$0xff]
        %v1070 = vld [vmem:[%s1 + $0x8] sm:$0xff]
        %v1071 = vld [vmem:[%s1 + $0x10] sm:$0xff]
        %v1072 = vld [vmem:[%s1 + $0x18] sm:$0xff]
        %v1073 = vld [vmem:[%s2] sm:$0x1]
        %v1075 = vlaneseq
        %v1076 = vshrl.u32 %v1075, 7
        %v1077 = vsub.s32 0, %v1076
        %v1078 = vrot.slane %v1073, %v1077
        %vm1080 = vcmask 261120
        %v1082 = vsel %vm1080, %v1068, 0
        %1084 = vmatprep.subr.mxu0 0.0
        %1085 = vmatpush1.msra.mxu0 %v1069
        %1086 = vmatprep.subr.mxu0 0.0
        %1087 = vmatpush1.msra.mxu0 %v1070
        %1088 = vmatprep.subr.mxu0 0.0
        %1089 = vmatpush1.msra.mxu0 %v1071
        %1090 = vmatprep.subr.mxu0 0.0
        %1091 = vmatpush1.msra.mxu0 %v1072
        %1092 = vmatprep.subr.mxu0 0.0
        %1093 = vmatpush1.msra.mxu0 0.0
        %1094 = vmatprep.subr.mxu0 0.0
        %1095 = vmatpush1.msra.mxu0 0.0
        %1096 = vmatprep.subr.mxu0 0.0
        %1097 = vmatpush1.msra.mxu0 0.0
        %1098 = vmatprep.subr.mxu0 0.0
        %1099 = vmatpush1.msra.mxu0 0.0
        %1100 = vmatprep.subr.mxu0 0.0
        %1101 = vmatpush1.msra.mxu0 0.0
        %1102 = vmatprep.subr.mxu0 0.0
        %1103 = vmatpush1.msra.mxu0 0.0
        %1104 = vmatprep.subr.mxu0 0.0
        %1105 = vmatpush1.msra.mxu0 0.0
        %1106 = vmatprep.subr.mxu0 0.0
        %1107 = vmatpush1.msra.mxu0 0.0
        %1108 = vmatprep.subr.mxu0 0.0
        %1109 = vmatpush1.msra.mxu0 0.0
        %1110 = vmatprep.subr.mxu0 0.0
        %1111 = vmatpush1.msra.mxu0 0.0
        %1112 = vmatprep.subr.mxu0 0.0
        %1113 = vmatpush1.msra.mxu0 0.0
        %1114 = vmatprep.subr.mxu0 0.0
        %1115 = vmatpush1.msra.mxu0 0.0
        %1116 = vmatprep.subr.mxu0 0.0
        %1117 = vmatpush1.msra.mxu0 0.0
        %1118 = vmatprep.subr.mxu0 0.0
        %1119 = vmatpush1.msra.mxu0 0.0
        %1120 = vmatprep.subr.mxu0 0.0
        %1121 = vmatpush1.msra.mxu0 0.0
        %1122 = vmatprep.subr.mxu0 0.0
        %1123 = vmatpush1.msra.mxu0 0.0
        %1124 = vmatprep.subr.mxu0 0.0
        %1125 = vmatpush1.msra.mxu0 0.0
        %1126 = vmatprep.subr.mxu0 0.0
        %1127 = vmatpush1.msra.mxu0 0.0
        %1128 = vmatprep.subr.mxu0 0.0
        %1129 = vmatpush1.msra.mxu0 0.0
        %1130 = vmatprep.subr.mxu0 0.0
        %1131 = vmatpush1.msra.mxu0 0.0
        %1132 = vmatprep.subr.mxu0 0.0
        %1133 = vmatpush1.msra.mxu0 0.0
        %1134 = vmatprep.subr.mxu0 0.0
        %1135 = vmatpush1.msra.mxu0 0.0
        %1136 = vmatprep.subr.mxu0 0.0
        %1137 = vmatpush1.msra.mxu0 0.0
        %1138 = vmatprep.subr.mxu0 0.0
        %1139 = vmatpush1.msra.mxu0 0.0
        %1140 = vmatprep.subr.mxu0 0.0
        %1141 = vmatpush1.msra.mxu0 0.0
        %1142 = vmatprep.subr.mxu0 0.0
        %1143 = vmatpush1.msra.mxu0 0.0
        %1144 = vmatprep.subr.mxu0 0.0
        %1145 = vmatpush1.msra.mxu0 0.0
        %1146 = vmatprep.subr.mxu0 0.0
        %1147 = vmatpush1.msra.mxu0 0.0
        %1148 = vmatprep.mubr.f32.mxu0 0.0
        %1149 = vmatmul.mubr.f32.gmra.mrb[0].mxu0 %v1082
        %v1150 = vpop.f32.mrb[0].mxu0
        %v1151 = vadd.f32 %v1078, %v1150
        %v1152 = vpop.f32.mrb[0].mxu0
        %1153 = vdwg.mxu0
        %v1154 = vld [vmem:[#allocation2] sm:$0xff]
        %vm1155 = vcmask 64512
        %v1157 = vsel %vm1155, %v1151, 0
        %v1160 = vsel %vm1155, %v1154, 0
        %1162 = vmatprep.subr.mxu0 0.0
        %1163 = vmatpush1.xpose.msra.mxu0 %v1160
        %1164 = vmatprep.subr.mxu0 0.0
        %1165 = vmatpush1.xpose.msra.mxu0 0.0
        %1166 = vmatprep.subr.mxu0 0.0
        %1167 = vmatpush1.xpose.msra.mxu0 0.0
        %1168 = vmatprep.subr.mxu0 0.0
        %1169 = vmatpush1.xpose.msra.mxu0 0.0
        %1170 = vmatprep.subr.mxu0 0.0
        %1171 = vmatpush1.xpose.msra.mxu0 0.0
        %1172 = vmatprep.subr.mxu0 0.0
        %1173 = vmatpush1.xpose.msra.mxu0 0.0
        %1174 = vmatprep.subr.mxu0 0.0
        %1175 = vmatpush1.xpose.msra.mxu0 0.0
        %1176 = vmatprep.subr.mxu0 0.0
        %1177 = vmatpush1.xpose.msra.mxu0 0.0
        %1178 = vmatprep.subr.mxu0 0.0
        %1179 = vmatpush1.xpose.msra.mxu0 0.0
        %1180 = vmatprep.subr.mxu0 0.0
        %1181 = vmatpush1.xpose.msra.mxu0 0.0
        %1182 = vmatprep.subr.mxu0 0.0
        %1183 = vmatpush1.xpose.msra.mxu0 0.0
        %1184 = vmatprep.subr.mxu0 0.0
        %1185 = vmatpush1.xpose.msra.mxu0 0.0
        %1186 = vmatprep.subr.mxu0 0.0
        %1187 = vmatpush1.xpose.msra.mxu0 0.0
        %1188 = vmatprep.subr.mxu0 0.0
        %1189 = vmatpush1.xpose.msra.mxu0 0.0
        %1190 = vmatprep.subr.mxu0 0.0
        %1191 = vmatpush1.xpose.msra.mxu0 0.0
        %1192 = vmatprep.subr.mxu0 0.0
        %1193 = vmatpush1.xpose.msra.mxu0 0.0
        %1194 = vmatprep.subr.mxu0 0.0
        %1195 = vmatpush1.xpose.msra.mxu0 0.0
        %1196 = vmatprep.subr.mxu0 0.0
        %1197 = vmatpush1.xpose.msra.mxu0 0.0
        %1198 = vmatprep.subr.mxu0 0.0
        %1199 = vmatpush1.xpose.msra.mxu0 0.0
        %1200 = vmatprep.subr.mxu0 0.0
        %1201 = vmatpush1.xpose.msra.mxu0 0.0
        %1202 = vmatprep.subr.mxu0 0.0
        %1203 = vmatpush1.xpose.msra.mxu0 0.0
        %1204 = vmatprep.subr.mxu0 0.0
        %1205 = vmatpush1.xpose.msra.mxu0 0.0
        %1206 = vmatprep.subr.mxu0 0.0
        %1207 = vmatpush1.xpose.msra.mxu0 0.0
        %1208 = vmatprep.subr.mxu0 0.0
        %1209 = vmatpush1.xpose.msra.mxu0 0.0
        %1210 = vmatprep.subr.mxu0 0.0
        %1211 = vmatpush1.xpose.msra.mxu0 0.0
        %1212 = vmatprep.subr.mxu0 0.0
        %1213 = vmatpush1.xpose.msra.mxu0 0.0
        %1214 = vmatprep.subr.mxu0 0.0
        %1215 = vmatpush1.xpose.msra.mxu0 0.0
        %1216 = vmatprep.subr.mxu0 0.0
        %1217 = vmatpush1.xpose.msra.mxu0 0.0
        %1218 = vmatprep.subr.mxu0 0.0
        %1219 = vmatpush1.xpose.msra.mxu0 0.0
        %1220 = vmatprep.subr.mxu0 0.0
        %1221 = vmatpush1.xpose.msra.mxu0 0.0
        %1222 = vmatprep.subr.mxu0 0.0
        %1223 = vmatpush1.xpose.msra.mxu0 0.0
        %1224 = vmatprep.subr.mxu0 0.0
        %1225 = vmatpush1.xpose.msra.mxu0 0.0
        %1226 = vmatprep.mubr.f32.mxu0 0.0
        %1227 = vmatmul.mubr.f32.gmra.mrb[0].mxu0 %v1157
        %v1228 = vpop.f32.mrb[0].mxu0
        %v1229 = vadd.f32 0.0, %v1228
        %v1230 = vpop.f32.mrb[0].mxu0
        %1231 = vdwg.mxu0
        %v1232 = vsel %vm1155, %v1229, -inf
        %1233 = vmax.xlane.f32.xlu0 %v1232
        %v1234 = vpop.xlane.xlu0 %1233
        %v1235 = vsub.f32 %v1229, %v1234
        %v1236 = vmul.f32 %v1235, 1.442695
        %v1237 = vpow.pop %v1236
        %v1238 = vsel %vm1155, %v1237, 0.0
        %1239 = vadd.xlane.f32.xlu0 %v1238
        %v1240 = vpop.xlane.xlu0 %1239
        %v1241 = vrcp.pop %v1240
        %v1242 = vmul.f32 %v1240, %v1241
        %v1243 = vsub.f32 2.0, %v1242
        %v1244 = vmul.f32 %v1241, %v1243
        %v1245 = vmul.f32 %v1237, %v1244
        %v1246 = vadd.f32 %v1245, 0.0
        %v1247 = vld [vmem:[#allocation3] sm:$0xff]
        %v1249 = vsel %vm1155, %v1245, 0
        %1251 = vmatprep.subr.mxu0 0.0
        %1252 = vmatpush1.msra.mxu0 %v1247
        %1253 = vmatprep.subr.mxu0 0.0
        %1254 = vmatpush1.msra.mxu0 0.0
        %1255 = vmatprep.subr.mxu0 0.0
        %1256 = vmatpush1.msra.mxu0 0.0
        %1257 = vmatprep.subr.mxu0 0.0
        %1258 = vmatpush1.msra.mxu0 0.0
        %1259 = vmatprep.subr.mxu0 0.0
        %1260 = vmatpush1.msra.mxu0 0.0
        %1261 = vmatprep.subr.mxu0 0.0
        %1262 = vmatpush1.msra.mxu0 0.0
        %1263 = vmatprep.subr.mxu0 0.0
        %1264 = vmatpush1.msra.mxu0 0.0
        %1265 = vmatprep.subr.mxu0 0.0
        %1266 = vmatpush1.msra.mxu0 0.0
        %1267 = vmatprep.subr.mxu0 0.0
        %1268 = vmatpush1.msra.mxu0 0.0
        %1269 = vmatprep.subr.mxu0 0.0
        %1270 = vmatpush1.msra.mxu0 0.0
        %1271 = vmatprep.subr.mxu0 0.0
        %1272 = vmatpush1.msra.mxu0 0.0
        %1273 = vmatprep.subr.mxu0 0.0
        %1274 = vmatpush1.msra.mxu0 0.0
        %1275 = vmatprep.subr.mxu0 0.0
        %1276 = vmatpush1.msra.mxu0 0.0
        %1277 = vmatprep.subr.mxu0 0.0
        %1278 = vmatpush1.msra.mxu0 0.0
        %1279 = vmatprep.subr.mxu0 0.0
        %1280 = vmatpush1.msra.mxu0 0.0
        %1281 = vmatprep.subr.mxu0 0.0
        %1282 = vmatpush1.msra.mxu0 0.0
        %1283 = vmatprep.subr.mxu0 0.0
        %1284 = vmatpush1.msra.mxu0 0.0
        %1285 = vmatprep.subr.mxu0 0.0
        %1286 = vmatpush1.msra.mxu0 0.0
        %1287 = vmatprep.subr.mxu0 0.0
        %1288 = vmatpush1.msra.mxu0 0.0
        %1289 = vmatprep.subr.mxu0 0.0
        %1290 = vmatpush1.msra.mxu0 0.0
        %1291 = vmatprep.subr.mxu0 0.0
        %1292 = vmatpush1.msra.mxu0 0.0
        %1293 = vmatprep.subr.mxu0 0.0
        %1294 = vmatpush1.msra.mxu0 0.0
        %1295 = vmatprep.subr.mxu0 0.0
        %1296 = vmatpush1.msra.mxu0 0.0
        %1297 = vmatprep.subr.mxu0 0.0
        %1298 = vmatpush1.msra.mxu0 0.0
        %1299 = vmatprep.subr.mxu0 0.0
        %1300 = vmatpush1.msra.mxu0 0.0
        %1301 = vmatprep.subr.mxu0 0.0
        %1302 = vmatpush1.msra.mxu0 0.0
        %1303 = vmatprep.subr.mxu0 0.0
        %1304 = vmatpush1.msra.mxu0 0.0
        %1305 = vmatprep.subr.mxu0 0.0
        %1306 = vmatpush1.msra.mxu0 0.0
        %1307 = vmatprep.subr.mxu0 0.0
        %1308 = vmatpush1.msra.mxu0 0.0
        %1309 = vmatprep.subr.mxu0 0.0
        %1310 = vmatpush1.msra.mxu0 0.0
        %1311 = vmatprep.subr.mxu0 0.0
        %1312 = vmatpush1.msra.mxu0 0.0
        %1313 = vmatprep.subr.mxu0 0.0
        %1314 = vmatpush1.msra.mxu0 0.0
        %1315 = vmatprep.mubr.f32.mxu0 0.0
        %1316 = vmatmul.mubr.f32.gmra.mrb[0].mxu0 %v1249
        %v1317 = vpop.f32.mrb[0].mxu0
        %v1318 = vadd.f32 0.0, %v1317
        %v1319 = vpop.f32.mrb[0].mxu0
        %1320 = vdwg.mxu0
        %v1321 = vld [vmem:[%s7] sm:$0xff]
        %s1322 = scalar_lea.vmem %s1, 32
        %v1323 = vld [vmem:[%s1322] sm:$0xff]
        %v1324 = vld [vmem:[%s1322 + $0x8] sm:$0xff]
        %v1325 = vld [vmem:[%s1322 + $0x10] sm:$0xff]
        %v1326 = vld [vmem:[%s1322 + $0x18] sm:$0xff]
        %s1327 = scalar_lea.vmem %s2, 1
        %v1328 = vld [vmem:[%s1327] sm:$0x1]
        %v1330 = vlaneseq
        %v1331 = vshrl.u32 %v1330, 7
        %v1332 = vsub.s32 0, %v1331
        %v1333 = vrot.slane %v1328, %v1332
        %1335 = vmatprep.subr.mxu0 0.0
        %1336 = vmatpush1.msra.mxu0 %v1323
        %1337 = vmatprep.subr.mxu0 0.0
        %1338 = vmatpush1.msra.mxu0 %v1324
        %1339 = vmatprep.subr.mxu0 0.0
        %1340 = vmatpush1.msra.mxu0 %v1325
        %1341 = vmatprep.subr.mxu0 0.0
        %1342 = vmatpush1.msra.mxu0 %v1326
        %1343 = vmatprep.subr.mxu0 0.0
        %1344 = vmatpush1.msra.mxu0 0.0
        %1345 = vmatprep.subr.mxu0 0.0
        %1346 = vmatpush1.msra.mxu0 0.0
        %1347 = vmatprep.subr.mxu0 0.0
        %1348 = vmatpush1.msra.mxu0 0.0
        %1349 = vmatprep.subr.mxu0 0.0
        %1350 = vmatpush1.msra.mxu0 0.0
        %1351 = vmatprep.subr.mxu0 0.0
        %1352 = vmatpush1.msra.mxu0 0.0
        %1353 = vmatprep.subr.mxu0 0.0
        %1354 = vmatpush1.msra.mxu0 0.0
        %1355 = vmatprep.subr.mxu0 0.0
        %1356 = vmatpush1.msra.mxu0 0.0
        %1357 = vmatprep.subr.mxu0 0.0
        %1358 = vmatpush1.msra.mxu0 0.0
        %1359 = vmatprep.subr.mxu0 0.0
        %1360 = vmatpush1.msra.mxu0 0.0
        %1361 = vmatprep.subr.mxu0 0.0
        %1362 = vmatpush1.msra.mxu0 0.0
        %1363 = vmatprep.subr.mxu0 0.0
        %1364 = vmatpush1.msra.mxu0 0.0
        %1365 = vmatprep.subr.mxu0 0.0
        %1366 = vmatpush1.msra.mxu0 0.0
        %1367 = vmatprep.subr.mxu0 0.0
        %1368 = vmatpush1.msra.mxu0 0.0
        %1369 = vmatprep.subr.mxu0 0.0
        %1370 = vmatpush1.msra.mxu0 0.0
        %1371 = vmatprep.subr.mxu0 0.0
        %1372 = vmatpush1.msra.mxu0 0.0
        %1373 = vmatprep.subr.mxu0 0.0
        %1374 = vmatpush1.msra.mxu0 0.0
        %1375 = vmatprep.subr.mxu0 0.0
        %1376 = vmatpush1.msra.mxu0 0.0
        %1377 = vmatprep.subr.mxu0 0.0
        %1378 = vmatpush1.msra.mxu0 0.0
        %1379 = vmatprep.subr.mxu0 0.0
        %1380 = vmatpush1.msra.mxu0 0.0
        %1381 = vmatprep.subr.mxu0 0.0
        %1382 = vmatpush1.msra.mxu0 0.0
        %1383 = vmatprep.subr.mxu0 0.0
        %1384 = vmatpush1.msra.mxu0 0.0
        %1385 = vmatprep.subr.mxu0 0.0
        %1386 = vmatpush1.msra.mxu0 0.0
        %1387 = vmatprep.subr.mxu0 0.0
        %1388 = vmatpush1.msra.mxu0 0.0
        %1389 = vmatprep.subr.mxu0 0.0
        %1390 = vmatpush1.msra.mxu0 0.0
        %1391 = vmatprep.subr.mxu0 0.0
        %1392 = vmatpush1.msra.mxu0 0.0
        %1393 = vmatprep.subr.mxu0 0.0
        %1394 = vmatpush1.msra.mxu0 0.0
        %1395 = vmatprep.subr.mxu0 0.0
        %1396 = vmatpush1.msra.mxu0 0.0
        %1397 = vmatprep.subr.mxu0 0.0
        %1398 = vmatpush1.msra.mxu0 0.0
        %1399 = vmatprep.mubr.f32.mxu0 0.0
        %1400 = vmatmul.mubr.f32.gmra.mrb[0].mxu0 %v1082
        %v1401 = vpop.f32.mrb[0].mxu0
        %v1402 = vadd.f32 %v1333, %v1401
        %v1403 = vpop.f32.mrb[0].mxu0
        %1404 = vdwg.mxu0
        %s1405 = scalar_lea.vmem [#allocation2], 8
        %v1406 = vld [vmem:[%s1405] sm:$0xff]
        %v1408 = vsel %vm1155, %v1402, 0
        %v1411 = vsel %vm1155, %v1406, 0
        %1413 = vmatprep.subr.mxu0 0.0
        %1414 = vmatpush1.xpose.msra.mxu0 %v1411
        %1415 = vmatprep.subr.mxu0 0.0
        %1416 = vmatpush1.xpose.msra.mxu0 0.0
        %1417 = vmatprep.subr.mxu0 0.0
        %1418 = vmatpush1.xpose.msra.mxu0 0.0
        %1419 = vmatprep.subr.mxu0 0.0
        %1420 = vmatpush1.xpose.msra.mxu0 0.0
        %1421 = vmatprep.subr.mxu0 0.0
        %1422 = vmatpush1.xpose.msra.mxu0 0.0
        %1423 = vmatprep.subr.mxu0 0.0
        %1424 = vmatpush1.xpose.msra.mxu0 0.0
        %1425 = vmatprep.subr.mxu0 0.0
        %1426 = vmatpush1.xpose.msra.mxu0 0.0
        %1427 = vmatprep.subr.mxu0 0.0
        %1428 = vmatpush1.xpose.msra.mxu0 0.0
        %1429 = vmatprep.subr.mxu0 0.0
        %1430 = vmatpush1.xpose.msra.mxu0 0.0
        %1431 = vmatprep.subr.mxu0 0.0
        %1432 = vmatpush1.xpose.msra.mxu0 0.0
        %1433 = vmatprep.subr.mxu0 0.0
        %1434 = vmatpush1.xpose.msra.mxu0 0.0
        %1435 = vmatprep.subr.mxu0 0.0
        %1436 = vmatpush1.xpose.msra.mxu0 0.0
        %1437 = vmatprep.subr.mxu0 0.0
        %1438 = vmatpush1.xpose.msra.mxu0 0.0
        %1439 = vmatprep.subr.mxu0 0.0
        %1440 = vmatpush1.xpose.msra.mxu0 0.0
        %1441 = vmatprep.subr.mxu0 0.0
        %1442 = vmatpush1.xpose.msra.mxu0 0.0
        %1443 = vmatprep.subr.mxu0 0.0
        %1444 = vmatpush1.xpose.msra.mxu0 0.0
        %1445 = vmatprep.subr.mxu0 0.0
        %1446 = vmatpush1.xpose.msra.mxu0 0.0
        %1447 = vmatprep.subr.mxu0 0.0
        %1448 = vmatpush1.xpose.msra.mxu0 0.0
        %1449 = vmatprep.subr.mxu0 0.0
        %1450 = vmatpush1.xpose.msra.mxu0 0.0
        %1451 = vmatprep.subr.mxu0 0.0
        %1452 = vmatpush1.xpose.msra.mxu0 0.0
        %1453 = vmatprep.subr.mxu0 0.0
        %1454 = vmatpush1.xpose.msra.mxu0 0.0
        %1455 = vmatprep.subr.mxu0 0.0
        %1456 = vmatpush1.xpose.msra.mxu0 0.0
        %1457 = vmatprep.subr.mxu0 0.0
        %1458 = vmatpush1.xpose.msra.mxu0 0.0
        %1459 = vmatprep.subr.mxu0 0.0
        %1460 = vmatpush1.xpose.msra.mxu0 0.0
        %1461 = vmatprep.subr.mxu0 0.0
        %1462 = vmatpush1.xpose.msra.mxu0 0.0
        %1463 = vmatprep.subr.mxu0 0.0
        %1464 = vmatpush1.xpose.msra.mxu0 0.0
        %1465 = vmatprep.subr.mxu0 0.0
        %1466 = vmatpush1.xpose.msra.mxu0 0.0
        %1467 = vmatprep.subr.mxu0 0.0
        %1468 = vmatpush1.xpose.msra.mxu0 0.0
        %1469 = vmatprep.subr.mxu0 0.0
        %1470 = vmatpush1.xpose.msra.mxu0 0.0
        %1471 = vmatprep.subr.mxu0 0.0
        %1472 = vmatpush1.xpose.msra.mxu0 0.0
        %1473 = vmatprep.subr.mxu0 0.0
        %1474 = vmatpush1.xpose.msra.mxu0 0.0
        %1475 = vmatprep.subr.mxu0 0.0
        %1476 = vmatpush1.xpose.msra.mxu0 0.0
        %1477 = vmatprep.mubr.f32.mxu0 0.0
        %1478 = vmatmul.mubr.f32.gmra.mrb[0].mxu0 %v1408
        %v1479 = vpop.f32.mrb[0].mxu0
        %v1480 = vadd.f32 0.0, %v1479
        %v1481 = vpop.f32.mrb[0].mxu0
        %1482 = vdwg.mxu0
        %v1483 = vsel %vm1155, %v1480, -inf
        %1484 = vmax.xlane.f32.xlu0 %v1483
        %v1485 = vpop.xlane.xlu0 %1484
        %v1486 = vsub.f32 %v1480, %v1485
        %v1487 = vmul.f32 %v1486, 1.442695
        %v1488 = vpow.pop %v1487
        %v1489 = vsel %vm1155, %v1488, 0.0
        %1490 = vadd.xlane.f32.xlu0 %v1489
        %v1491 = vpop.xlane.xlu0 %1490
        %v1492 = vrcp.pop %v1491
        %v1493 = vmul.f32 %v1491, %v1492
        %v1494 = vsub.f32 2.0, %v1493
        %v1495 = vmul.f32 %v1492, %v1494
        %v1496 = vmul.f32 %v1488, %v1495
        %v1497 = vadd.f32 %v1246, %v1496
        %s1498 = scalar_lea.vmem [#allocation3], 8
        %v1499 = vld [vmem:[%s1498] sm:$0xff]
        %v1501 = vsel %vm1155, %v1496, 0
        %1503 = vmatprep.subr.mxu0 0.0
        %1504 = vmatpush1.msra.mxu0 %v1499
        %1505 = vmatprep.subr.mxu0 0.0
        %1506 = vmatpush1.msra.mxu0 0.0
        %1507 = vmatprep.subr.mxu0 0.0
        %1508 = vmatpush1.msra.mxu0 0.0
        %1509 = vmatprep.subr.mxu0 0.0
        %1510 = vmatpush1.msra.mxu0 0.0
        %1511 = vmatprep.subr.mxu0 0.0
        %1512 = vmatpush1.msra.mxu0 0.0
        %1513 = vmatprep.subr.mxu0 0.0
        %1514 = vmatpush1.msra.mxu0 0.0
        %1515 = vmatprep.subr.mxu0 0.0
        %1516 = vmatpush1.msra.mxu0 0.0
        %1517 = vmatprep.subr.mxu0 0.0
        %1518 = vmatpush1.msra.mxu0 0.0
        %1519 = vmatprep.subr.mxu0 0.0
        %1520 = vmatpush1.msra.mxu0 0.0
        %1521 = vmatprep.subr.mxu0 0.0
        %1522 = vmatpush1.msra.mxu0 0.0
        %1523 = vmatprep.subr.mxu0 0.0
        %1524 = vmatpush1.msra.mxu0 0.0
        %1525 = vmatprep.subr.mxu0 0.0
        %1526 = vmatpush1.msra.mxu0 0.0
        %1527 = vmatprep.subr.mxu0 0.0
        %1528 = vmatpush1.msra.mxu0 0.0
        %1529 = vmatprep.subr.mxu0 0.0
        %1530 = vmatpush1.msra.mxu0 0.0
        %1531 = vmatprep.subr.mxu0 0.0
        %1532 = vmatpush1.msra.mxu0 0.0
        %1533 = vmatprep.subr.mxu0 0.0
        %1534 = vmatpush1.msra.mxu0 0.0
        %1535 = vmatprep.subr.mxu0 0.0
        %1536 = vmatpush1.msra.mxu0 0.0
        %1537 = vmatprep.subr.mxu0 0.0
        %1538 = vmatpush1.msra.mxu0 0.0
        %1539 = vmatprep.subr.mxu0 0.0
        %1540 = vmatpush1.msra.mxu0 0.0
        %1541 = vmatprep.subr.mxu0 0.0
        %1542 = vmatpush1.msra.mxu0 0.0
        %1543 = vmatprep.subr.mxu0 0.0
        %1544 = vmatpush1.msra.mxu0 0.0
        %1545 = vmatprep.subr.mxu0 0.0
        %1546 = vmatpush1.msra.mxu0 0.0
        %1547 = vmatprep.subr.mxu0 0.0
        %1548 = vmatpush1.msra.mxu0 0.0
        %1549 = vmatprep.subr.mxu0 0.0
        %1550 = vmatpush1.msra.mxu0 0.0
        %1551 = vmatprep.subr.mxu0 0.0
        %1552 = vmatpush1.msra.mxu0 0.0
        %1553 = vmatprep.subr.mxu0 0.0
        %1554 = vmatpush1.msra.mxu0 0.0
        %1555 = vmatprep.subr.mxu0 0.0
        %1556 = vmatpush1.msra.mxu0 0.0
        %1557 = vmatprep.subr.mxu0 0.0
        %1558 = vmatpush1.msra.mxu0 0.0
        %1559 = vmatprep.subr.mxu0 0.0
        %1560 = vmatpush1.msra.mxu0 0.0
        %1561 = vmatprep.subr.mxu0 0.0
        %1562 = vmatpush1.msra.mxu0 0.0
        %1563 = vmatprep.subr.mxu0 0.0
        %1564 = vmatpush1.msra.mxu0 0.0
        %1565 = vmatprep.subr.mxu0 0.0
        %1566 = vmatpush1.msra.mxu0 0.0
        %1567 = vmatprep.mubr.f32.mxu0 0.0
        %1568 = vmatmul.mubr.f32.gmra.mrb[0].mxu0 %v1501
        %v1569 = vpop.f32.mrb[0].mxu0
        %v1570 = vadd.f32 0.0, %v1569
        %v1571 = vpop.f32.mrb[0].mxu0
        %1572 = vdwg.mxu0
        %s1573 = scalar_lea.vmem %s7, 8
        %v1574 = vld [vmem:[%s1573] sm:$0xff]
        %v1576 = vsel %vm1155, %v1570, 0
        %1578 = vmatprep.subr.mxu0 0.0
        %1579 = vmatpush1.msra.mxu0 %v1574
        %1580 = vmatprep.subr.mxu0 0.0
        %1581 = vmatpush1.msra.mxu0 0.0
        %1582 = vmatprep.subr.mxu0 0.0
        %1583 = vmatpush1.msra.mxu0 0.0
        %1584 = vmatprep.subr.mxu0 0.0
        %1585 = vmatpush1.msra.mxu0 0.0
        %1586 = vmatprep.subr.mxu0 0.0
        %1587 = vmatpush1.msra.mxu0 0.0
        %1588 = vmatprep.subr.mxu0 0.0
        %1589 = vmatpush1.msra.mxu0 0.0
        %1590 = vmatprep.subr.mxu0 0.0
        %1591 = vmatpush1.msra.mxu0 0.0
        %1592 = vmatprep.subr.mxu0 0.0
        %1593 = vmatpush1.msra.mxu0 0.0
        %1594 = vmatprep.subr.mxu0 0.0
        %1595 = vmatpush1.msra.mxu0 0.0
        %1596 = vmatprep.subr.mxu0 0.0
        %1597 = vmatpush1.msra.mxu0 0.0
        %1598 = vmatprep.subr.mxu0 0.0
        %1599 = vmatpush1.msra.mxu0 0.0
        %1600 = vmatprep.subr.mxu0 0.0
        %1601 = vmatpush1.msra.mxu0 0.0
        %1602 = vmatprep.subr.mxu0 0.0
        %1603 = vmatpush1.msra.mxu0 0.0
        %1604 = vmatprep.subr.mxu0 0.0
        %1605 = vmatpush1.msra.mxu0 0.0
        %1606 = vmatprep.subr.mxu0 0.0
        %1607 = vmatpush1.msra.mxu0 0.0
        %1608 = vmatprep.subr.mxu0 0.0
        %1609 = vmatpush1.msra.mxu0 0.0
        %1610 = vmatprep.subr.mxu0 0.0
        %1611 = vmatpush1.msra.mxu0 0.0
        %1612 = vmatprep.subr.mxu0 0.0
        %1613 = vmatpush1.msra.mxu0 0.0
        %1614 = vmatprep.subr.mxu0 0.0
        %1615 = vmatpush1.msra.mxu0 0.0
        %1616 = vmatprep.subr.mxu0 0.0
        %1617 = vmatpush1.msra.mxu0 0.0
        %1618 = vmatprep.subr.mxu0 0.0
        %1619 = vmatpush1.msra.mxu0 0.0
        %1620 = vmatprep.subr.mxu0 0.0
        %1621 = vmatpush1.msra.mxu0 0.0
        %1622 = vmatprep.subr.mxu0 0.0
        %1623 = vmatpush1.msra.mxu0 0.0
        %1624 = vmatprep.subr.mxu0 0.0
        %1625 = vmatpush1.msra.mxu0 0.0
        %1626 = vmatprep.subr.mxu0 0.0
        %1627 = vmatpush1.msra.mxu0 0.0
        %1628 = vmatprep.subr.mxu0 0.0
        %1629 = vmatpush1.msra.mxu0 0.0
        %1630 = vmatprep.subr.mxu0 0.0
        %1631 = vmatpush1.msra.mxu0 0.0
        %1632 = vmatprep.subr.mxu0 0.0
        %1633 = vmatpush1.msra.mxu0 0.0
        %1634 = vmatprep.subr.mxu0 0.0
        %1635 = vmatpush1.msra.mxu0 0.0
        %1636 = vmatprep.subr.mxu0 0.0
        %1637 = vmatpush1.msra.mxu0 0.0
        %1638 = vmatprep.subr.mxu0 0.0
        %1639 = vmatpush1.msra.mxu0 0.0
        %1640 = vmatprep.subr.mxu0 0.0
        %1641 = vmatpush1.msra.mxu0 0.0
        %1642 = vmatprep.mubr.f32.mxu0 0.0
        %1643 = vmatmul.mubr.f32.gmra.mrb[0].mxu0 %v1576
        %v1644 = vpop.f32.mrb[0].mxu0
        %v1645 = vadd.f32 0.0, %v1644
        %v1646 = vpop.f32.mrb[0].mxu0
        %1647 = vdwg.mxu0
        %v1649 = vsel %vm1155, %v1318, 0
        %1651 = vmatprep.subr.mxu0 0.0
        %1652 = vmatpush1.msra.mxu0 %v1321
        %1653 = vmatprep.subr.mxu0 0.0
        %1654 = vmatpush1.msra.mxu0 0.0
        %1655 = vmatprep.subr.mxu0 0.0
        %1656 = vmatpush1.msra.mxu0 0.0
        %1657 = vmatprep.subr.mxu0 0.0
        %1658 = vmatpush1.msra.mxu0 0.0
        %1659 = vmatprep.subr.mxu0 0.0
        %1660 = vmatpush1.msra.mxu0 0.0
        %1661 = vmatprep.subr.mxu0 0.0
        %1662 = vmatpush1.msra.mxu0 0.0
        %1663 = vmatprep.subr.mxu0 0.0
        %1664 = vmatpush1.msra.mxu0 0.0
        %1665 = vmatprep.subr.mxu0 0.0
        %1666 = vmatpush1.msra.mxu0 0.0
        %1667 = vmatprep.subr.mxu0 0.0
        %1668 = vmatpush1.msra.mxu0 0.0
        %1669 = vmatprep.subr.mxu0 0.0
        %1670 = vmatpush1.msra.mxu0 0.0
        %1671 = vmatprep.subr.mxu0 0.0
        %1672 = vmatpush1.msra.mxu0 0.0
        %1673 = vmatprep.subr.mxu0 0.0
        %1674 = vmatpush1.msra.mxu0 0.0
        %1675 = vmatprep.subr.mxu0 0.0
        %1676 = vmatpush1.msra.mxu0 0.0
        %1677 = vmatprep.subr.mxu0 0.0
        %1678 = vmatpush1.msra.mxu0 0.0
        %1679 = vmatprep.subr.mxu0 0.0
        %1680 = vmatpush1.msra.mxu0 0.0
        %1681 = vmatprep.subr.mxu0 0.0
        %1682 = vmatpush1.msra.mxu0 0.0
        %1683 = vmatprep.subr.mxu0 0.0
        %1684 = vmatpush1.msra.mxu0 0.0
        %1685 = vmatprep.subr.mxu0 0.0
        %1686 = vmatpush1.msra.mxu0 0.0
        %1687 = vmatprep.subr.mxu0 0.0
        %1688 = vmatpush1.msra.mxu0 0.0
        %1689 = vmatprep.subr.mxu0 0.0
        %1690 = vmatpush1.msra.mxu0 0.0
        %1691 = vmatprep.subr.mxu0 0.0
        %1692 = vmatpush1.msra.mxu0 0.0
        %1693 = vmatprep.subr.mxu0 0.0
        %1694 = vmatpush1.msra.mxu0 0.0
        %1695 = vmatprep.subr.mxu0 0.0
        %1696 = vmatpush1.msra.mxu0 0.0
        %1697 = vmatprep.subr.mxu0 0.0
        %1698 = vmatpush1.msra.mxu0 0.0
        %1699 = vmatprep.subr.mxu0 0.0
        %1700 = vmatpush1.msra.mxu0 0.0
        %1701 = vmatprep.subr.mxu0 0.0
        %1702 = vmatpush1.msra.mxu0 0.0
        %1703 = vmatprep.subr.mxu0 0.0
        %1704 = vmatpush1.msra.mxu0 0.0
        %1705 = vmatprep.subr.mxu0 0.0
        %1706 = vmatpush1.msra.mxu0 0.0
        %1707 = vmatprep.subr.mxu0 0.0
        %1708 = vmatpush1.msra.mxu0 0.0
        %1709 = vmatprep.subr.mxu0 0.0
        %1710 = vmatpush1.msra.mxu0 0.0
        %1711 = vmatprep.subr.mxu0 0.0
        %1712 = vmatpush1.msra.mxu0 0.0
        %1713 = vmatprep.subr.mxu0 0.0
        %1714 = vmatpush1.msra.mxu0 0.0
        %1715 = vmatprep.mubr.f32.mxu0 0.0
        %1716 = vmatmul.mubr.f32.gmra.mrb[0].mxu0 %v1649
        %v1717 = vpop.f32.mrb[0].mxu0
        %v1718 = vadd.f32 %v1645, %v1717
        %v1719 = vpop.f32.mrb[0].mxu0
        %1720 = vdwg.mxu0
        %s1721 = scalar_lea.vmem %s1, 64
        %v1722 = vld [vmem:[%s1721] sm:$0xff]
        %v1723 = vld [vmem:[%s1721 + $0x8] sm:$0xff]
        %v1724 = vld [vmem:[%s1721 + $0x10] sm:$0xff]
        %v1725 = vld [vmem:[%s1721 + $0x18] sm:$0xff]
        %s1726 = scalar_lea.vmem %s2, 2
        %v1727 = vld [vmem:[%s1726] sm:$0x1]
        %v1729 = vlaneseq
        %v1730 = vshrl.u32 %v1729, 7
        %v1731 = vsub.s32 0, %v1730
        %v1732 = vrot.slane %v1727, %v1731
        %1734 = vmatprep.subr.mxu0 0.0
        %1735 = vmatpush1.msra.mxu0 %v1722
        %1736 = vmatprep.subr.mxu0 0.0
        %1737 = vmatpush1.msra.mxu0 %v1723
        %1738 = vmatprep.subr.mxu0 0.0
        %1739 = vmatpush1.msra.mxu0 %v1724
        %1740 = vmatprep.subr.mxu0 0.0
        %1741 = vmatpush1.msra.mxu0 %v1725
        %1742 = vmatprep.subr.mxu0 0.0
        %1743 = vmatpush1.msra.mxu0 0.0
        %1744 = vmatprep.subr.mxu0 0.0
        %1745 = vmatpush1.msra.mxu0 0.0
        %1746 = vmatprep.subr.mxu0 0.0
        %1747 = vmatpush1.msra.mxu0 0.0
        %1748 = vmatprep.subr.mxu0 0.0
        %1749 = vmatpush1.msra.mxu0 0.0
        %1750 = vmatprep.subr.mxu0 0.0
        %1751 = vmatpush1.msra.mxu0 0.0
        %1752 = vmatprep.subr.mxu0 0.0
        %1753 = vmatpush1.msra.mxu0 0.0
        %1754 = vmatprep.subr.mxu0 0.0
        %1755 = vmatpush1.msra.mxu0 0.0
        %1756 = vmatprep.subr.mxu0 0.0
        %1757 = vmatpush1.msra.mxu0 0.0
        %1758 = vmatprep.subr.mxu0 0.0
        %1759 = vmatpush1.msra.mxu0 0.0
        %1760 = vmatprep.subr.mxu0 0.0
        %1761 = vmatpush1.msra.mxu0 0.0
        %1762 = vmatprep.subr.mxu0 0.0
        %1763 = vmatpush1.msra.mxu0 0.0
        %1764 = vmatprep.subr.mxu0 0.0
        %1765 = vmatpush1.msra.mxu0 0.0
        %1766 = vmatprep.subr.mxu0 0.0
        %1767 = vmatpush1.msra.mxu0 0.0
        %1768 = vmatprep.subr.mxu0 0.0
        %1769 = vmatpush1.msra.mxu0 0.0
        %1770 = vmatprep.subr.mxu0 0.0
        %1771 = vmatpush1.msra.mxu0 0.0
        %1772 = vmatprep.subr.mxu0 0.0
        %1773 = vmatpush1.msra.mxu0 0.0
        %1774 = vmatprep.subr.mxu0 0.0
        %1775 = vmatpush1.msra.mxu0 0.0
        %1776 = vmatprep.subr.mxu0 0.0
        %1777 = vmatpush1.msra.mxu0 0.0
        %1778 = vmatprep.subr.mxu0 0.0
        %1779 = vmatpush1.msra.mxu0 0.0
        %1780 = vmatprep.subr.mxu0 0.0
        %1781 = vmatpush1.msra.mxu0 0.0
        %1782 = vmatprep.subr.mxu0 0.0
        %1783 = vmatpush1.msra.mxu0 0.0
        %1784 = vmatprep.subr.mxu0 0.0
        %1785 = vmatpush1.msra.mxu0 0.0
        %1786 = vmatprep.subr.mxu0 0.0
        %1787 = vmatpush1.msra.mxu0 0.0
        %1788 = vmatprep.subr.mxu0 0.0
        %1789 = vmatpush1.msra.mxu0 0.0
        %1790 = vmatprep.subr.mxu0 0.0
        %1791 = vmatpush1.msra.mxu0 0.0
        %1792 = vmatprep.subr.mxu0 0.0
        %1793 = vmatpush1.msra.mxu0 0.0
        %1794 = vmatprep.subr.mxu0 0.0
        %1795 = vmatpush1.msra.mxu0 0.0
        %1796 = vmatprep.subr.mxu0 0.0
        %1797 = vmatpush1.msra.mxu0 0.0
        %1798 = vmatprep.mubr.f32.mxu0 0.0
        %1799 = vmatmul.mubr.f32.gmra.mrb[0].mxu0 %v1082
        %v1800 = vpop.f32.mrb[0].mxu0
        %v1801 = vadd.f32 %v1732, %v1800
        %v1802 = vpop.f32.mrb[0].mxu0
        %1803 = vdwg.mxu0
        %s1804 = scalar_lea.vmem [#allocation2], 16
        %v1805 = vld [vmem:[%s1804] sm:$0xff]
        %v1807 = vsel %vm1155, %v1801, 0
        %v1810 = vsel %vm1155, %v1805, 0
        %1812 = vmatprep.subr.mxu0 0.0
        %1813 = vmatpush1.xpose.msra.mxu0 %v1810
        %1814 = vmatprep.subr.mxu0 0.0
        %1815 = vmatpush1.xpose.msra.mxu0 0.0
        %1816 = vmatprep.subr.mxu0 0.0
        %1817 = vmatpush1.xpose.msra.mxu0 0.0
        %1818 = vmatprep.subr.mxu0 0.0
        %1819 = vmatpush1.xpose.msra.mxu0 0.0
        %1820 = vmatprep.subr.mxu0 0.0
        %1821 = vmatpush1.xpose.msra.mxu0 0.0
        %1822 = vmatprep.subr.mxu0 0.0
        %1823 = vmatpush1.xpose.msra.mxu0 0.0
        %1824 = vmatprep.subr.mxu0 0.0
        %1825 = vmatpush1.xpose.msra.mxu0 0.0
        %1826 = vmatprep.subr.mxu0 0.0
        %1827 = vmatpush1.xpose.msra.mxu0 0.0
        %1828 = vmatprep.subr.mxu0 0.0
        %1829 = vmatpush1.xpose.msra.mxu0 0.0
        %1830 = vmatprep.subr.mxu0 0.0
        %1831 = vmatpush1.xpose.msra.mxu0 0.0
        %1832 = vmatprep.subr.mxu0 0.0
        %1833 = vmatpush1.xpose.msra.mxu0 0.0
        %1834 = vmatprep.subr.mxu0 0.0
        %1835 = vmatpush1.xpose.msra.mxu0 0.0
        %1836 = vmatprep.subr.mxu0 0.0
        %1837 = vmatpush1.xpose.msra.mxu0 0.0
        %1838 = vmatprep.subr.mxu0 0.0
        %1839 = vmatpush1.xpose.msra.mxu0 0.0
        %1840 = vmatprep.subr.mxu0 0.0
        %1841 = vmatpush1.xpose.msra.mxu0 0.0
        %1842 = vmatprep.subr.mxu0 0.0
        %1843 = vmatpush1.xpose.msra.mxu0 0.0
        %1844 = vmatprep.subr.mxu0 0.0
        %1845 = vmatpush1.xpose.msra.mxu0 0.0
        %1846 = vmatprep.subr.mxu0 0.0
        %1847 = vmatpush1.xpose.msra.mxu0 0.0
        %1848 = vmatprep.subr.mxu0 0.0
        %1849 = vmatpush1.xpose.msra.mxu0 0.0
        %1850 = vmatprep.subr.mxu0 0.0
        %1851 = vmatpush1.xpose.msra.mxu0 0.0
        %1852 = vmatprep.subr.mxu0 0.0
        %1853 = vmatpush1.xpose.msra.mxu0 0.0
        %1854 = vmatprep.subr.mxu0 0.0
        %1855 = vmatpush1.xpose.msra.mxu0 0.0
        %1856 = vmatprep.subr.mxu0 0.0
        %1857 = vmatpush1.xpose.msra.mxu0 0.0
        %1858 = vmatprep.subr.mxu0 0.0
        %1859 = vmatpush1.xpose.msra.mxu0 0.0
        %1860 = vmatprep.subr.mxu0 0.0
        %1861 = vmatpush1.xpose.msra.mxu0 0.0
        %1862 = vmatprep.subr.mxu0 0.0
        %1863 = vmatpush1.xpose.msra.mxu0 0.0
        %1864 = vmatprep.subr.mxu0 0.0
        %1865 = vmatpush1.xpose.msra.mxu0 0.0
        %1866 = vmatprep.subr.mxu0 0.0
        %1867 = vmatpush1.xpose.msra.mxu0 0.0
        %1868 = vmatprep.subr.mxu0 0.0
        %1869 = vmatpush1.xpose.msra.mxu0 0.0
        %1870 = vmatprep.subr.mxu0 0.0
        %1871 = vmatpush1.xpose.msra.mxu0 0.0
        %1872 = vmatprep.subr.mxu0 0.0
        %1873 = vmatpush1.xpose.msra.mxu0 0.0
        %1874 = vmatprep.subr.mxu0 0.0
        %1875 = vmatpush1.xpose.msra.mxu0 0.0
        %1876 = vmatprep.mubr.f32.mxu0 0.0
        %1877 = vmatmul.mubr.f32.gmra.mrb[0].mxu0 %v1807
        %v1878 = vpop.f32.mrb[0].mxu0
        %v1879 = vadd.f32 0.0, %v1878
        %v1880 = vpop.f32.mrb[0].mxu0
        %1881 = vdwg.mxu0
        %v1882 = vsel %vm1155, %v1879, -inf
        %1883 = vmax.xlane.f32.xlu0 %v1882
        %v1884 = vpop.xlane.xlu0 %1883
        %v1885 = vsub.f32 %v1879, %v1884
        %v1886 = vmul.f32 %v1885, 1.442695
        %v1887 = vpow.pop %v1886
        %v1888 = vsel %vm1155, %v1887, 0.0
        %1889 = vadd.xlane.f32.xlu0 %v1888
        %v1890 = vpop.xlane.xlu0 %1889
        %v1891 = vrcp.pop %v1890
        %v1892 = vmul.f32 %v1890, %v1891
        %v1893 = vsub.f32 2.0, %v1892
        %v1894 = vmul.f32 %v1891, %v1893
        %v1895 = vmul.f32 %v1887, %v1894
        %v1896 = vadd.f32 %v1497, %v1895
        %s1897 = scalar_lea.vmem [#allocation3], 16
        %v1898 = vld [vmem:[%s1897] sm:$0xff]
        %v1900 = vsel %vm1155, %v1895, 0
        %1902 = vmatprep.subr.mxu0 0.0
        %1903 = vmatpush1.msra.mxu0 %v1898
        %1904 = vmatprep.subr.mxu0 0.0
        %1905 = vmatpush1.msra.mxu0 0.0
        %1906 = vmatprep.subr.mxu0 0.0
        %1907 = vmatpush1.msra.mxu0 0.0
        %1908 = vmatprep.subr.mxu0 0.0
        %1909 = vmatpush1.msra.mxu0 0.0
        %1910 = vmatprep.subr.mxu0 0.0
        %1911 = vmatpush1.msra.mxu0 0.0
        %1912 = vmatprep.subr.mxu0 0.0
        %1913 = vmatpush1.msra.mxu0 0.0
        %1914 = vmatprep.subr.mxu0 0.0
        %1915 = vmatpush1.msra.mxu0 0.0
        %1916 = vmatprep.subr.mxu0 0.0
        %1917 = vmatpush1.msra.mxu0 0.0
        %1918 = vmatprep.subr.mxu0 0.0
        %1919 = vmatpush1.msra.mxu0 0.0
        %1920 = vmatprep.subr.mxu0 0.0
        %1921 = vmatpush1.msra.mxu0 0.0
        %1922 = vmatprep.subr.mxu0 0.0
        %1923 = vmatpush1.msra.mxu0 0.0
        %1924 = vmatprep.subr.mxu0 0.0
        %1925 = vmatpush1.msra.mxu0 0.0
        %1926 = vmatprep.subr.mxu0 0.0
        %1927 = vmatpush1.msra.mxu0 0.0
        %1928 = vmatprep.subr.mxu0 0.0
        %1929 = vmatpush1.msra.mxu0 0.0
        %1930 = vmatprep.subr.mxu0 0.0
        %1931 = vmatpush1.msra.mxu0 0.0
        %1932 = vmatprep.subr.mxu0 0.0
        %1933 = vmatpush1.msra.mxu0 0.0
        %1934 = vmatprep.subr.mxu0 0.0
        %1935 = vmatpush1.msra.mxu0 0.0
        %1936 = vmatprep.subr.mxu0 0.0
        %1937 = vmatpush1.msra.mxu0 0.0
        %1938 = vmatprep.subr.mxu0 0.0
        %1939 = vmatpush1.msra.mxu0 0.0
        %1940 = vmatprep.subr.mxu0 0.0
        %1941 = vmatpush1.msra.mxu0 0.0
        %1942 = vmatprep.subr.mxu0 0.0
        %1943 = vmatpush1.msra.mxu0 0.0
        %1944 = vmatprep.subr.mxu0 0.0
        %1945 = vmatpush1.msra.mxu0 0.0
        %1946 = vmatprep.subr.mxu0 0.0
        %1947 = vmatpush1.msra.mxu0 0.0
        %1948 = vmatprep.subr.mxu0 0.0
        %1949 = vmatpush1.msra.mxu0 0.0
        %1950 = vmatprep.subr.mxu0 0.0
        %1951 = vmatpush1.msra.mxu0 0.0
        %1952 = vmatprep.subr.mxu0 0.0
        %1953 = vmatpush1.msra.mxu0 0.0
        %1954 = vmatprep.subr.mxu0 0.0
        %1955 = vmatpush1.msra.mxu0 0.0
        %1956 = vmatprep.subr.mxu0 0.0
        %1957 = vmatpush1.msra.mxu0 0.0
        %1958 = vmatprep.subr.mxu0 0.0
        %1959 = vmatpush1.msra.mxu0 0.0
        %1960 = vmatprep.subr.mxu0 0.0
        %1961 = vmatpush1.msra.mxu0 0.0
        %1962 = vmatprep.subr.mxu0 0.0
        %1963 = vmatpush1.msra.mxu0 0.0
        %1964 = vmatprep.subr.mxu0 0.0
        %1965 = vmatpush1.msra.mxu0 0.0
        %1966 = vmatprep.mubr.f32.mxu0 0.0
        %1967 = vmatmul.mubr.f32.gmra.mrb[0].mxu0 %v1900
        %v1968 = vpop.f32.mrb[0].mxu0
        %v1969 = vadd.f32 0.0, %v1968
        %v1970 = vpop.f32.mrb[0].mxu0
        %1971 = vdwg.mxu0
        %s1972 = scalar_lea.vmem %s7, 16
        %v1973 = vld [vmem:[%s1972] sm:$0xff]
        %v1975 = vsel %vm1155, %v1969, 0
        %1977 = vmatprep.subr.mxu0 0.0
        %1978 = vmatpush1.msra.mxu0 %v1973
        %1979 = vmatprep.subr.mxu0 0.0
        %1980 = vmatpush1.msra.mxu0 0.0
        %1981 = vmatprep.subr.mxu0 0.0
        %1982 = vmatpush1.msra.mxu0 0.0
        %1983 = vmatprep.subr.mxu0 0.0
        %1984 = vmatpush1.msra.mxu0 0.0
        %1985 = vmatprep.subr.mxu0 0.0
        %1986 = vmatpush1.msra.mxu0 0.0
        %1987 = vmatprep.subr.mxu0 0.0
        %1988 = vmatpush1.msra.mxu0 0.0
        %1989 = vmatprep.subr.mxu0 0.0
        %1990 = vmatpush1.msra.mxu0 0.0
        %1991 = vmatprep.subr.mxu0 0.0
        %1992 = vmatpush1.msra.mxu0 0.0
        %1993 = vmatprep.subr.mxu0 0.0
        %1994 = vmatpush1.msra.mxu0 0.0
        %1995 = vmatprep.subr.mxu0 0.0
        %1996 = vmatpush1.msra.mxu0 0.0
        %1997 = vmatprep.subr.mxu0 0.0
        %1998 = vmatpush1.msra.mxu0 0.0
        %1999 = vmatprep.subr.mxu0 0.0
        %2000 = vmatpush1.msra.mxu0 0.0
        %2001 = vmatprep.subr.mxu0 0.0
        %2002 = vmatpush1.msra.mxu0 0.0
        %2003 = vmatprep.subr.mxu0 0.0
        %2004 = vmatpush1.msra.mxu0 0.0
        %2005 = vmatprep.subr.mxu0 0.0
        %2006 = vmatpush1.msra.mxu0 0.0
        %2007 = vmatprep.subr.mxu0 0.0
        %2008 = vmatpush1.msra.mxu0 0.0
        %2009 = vmatprep.subr.mxu0 0.0
        %2010 = vmatpush1.msra.mxu0 0.0
        %2011 = vmatprep.subr.mxu0 0.0
        %2012 = vmatpush1.msra.mxu0 0.0
        %2013 = vmatprep.subr.mxu0 0.0
        %2014 = vmatpush1.msra.mxu0 0.0
        %2015 = vmatprep.subr.mxu0 0.0
        %2016 = vmatpush1.msra.mxu0 0.0
        %2017 = vmatprep.subr.mxu0 0.0
        %2018 = vmatpush1.msra.mxu0 0.0
        %2019 = vmatprep.subr.mxu0 0.0
        %2020 = vmatpush1.msra.mxu0 0.0
        %2021 = vmatprep.subr.mxu0 0.0
        %2022 = vmatpush1.msra.mxu0 0.0
        %2023 = vmatprep.subr.mxu0 0.0
        %2024 = vmatpush1.msra.mxu0 0.0
        %2025 = vmatprep.subr.mxu0 0.0
        %2026 = vmatpush1.msra.mxu0 0.0
        %2027 = vmatprep.subr.mxu0 0.0
        %2028 = vmatpush1.msra.mxu0 0.0
        %2029 = vmatprep.subr.mxu0 0.0
        %2030 = vmatpush1.msra.mxu0 0.0
        %2031 = vmatprep.subr.mxu0 0.0
        %2032 = vmatpush1.msra.mxu0 0.0
        %2033 = vmatprep.subr.mxu0 0.0
        %2034 = vmatpush1.msra.mxu0 0.0
        %2035 = vmatprep.subr.mxu0 0.0
        %2036 = vmatpush1.msra.mxu0 0.0
        %2037 = vmatprep.subr.mxu0 0.0
        %2038 = vmatpush1.msra.mxu0 0.0
        %2039 = vmatprep.subr.mxu0 0.0
        %2040 = vmatpush1.msra.mxu0 0.0
        %2041 = vmatprep.mubr.f32.mxu0 0.0
        %2042 = vmatmul.mubr.f32.gmra.mrb[0].mxu0 %v1975
        %v2043 = vpop.f32.mrb[0].mxu0
        %v2044 = vadd.f32 0.0, %v2043
        %v2045 = vpop.f32.mrb[0].mxu0
        %2046 = vdwg.mxu0
        %v2047 = vadd.f32 %v1718, %v2044
        %s2048 = scalar_lea.vmem %s1, 96
        %v2049 = vld [vmem:[%s2048] sm:$0xff]
        %v2050 = vld [vmem:[%s2048 + $0x8] sm:$0xff]
        %v2051 = vld [vmem:[%s2048 + $0x10] sm:$0xff]
        %v2052 = vld [vmem:[%s2048 + $0x18] sm:$0xff]
        %s2053 = scalar_lea.vmem %s2, 3
        %v2054 = vld [vmem:[%s2053] sm:$0x1]
        %v2056 = vlaneseq
        %v2057 = vshrl.u32 %v2056, 7
        %v2058 = vsub.s32 0, %v2057
        %v2059 = vrot.slane %v2054, %v2058
        %2061 = vmatprep.subr.mxu0 0.0
        %2062 = vmatpush1.msra.mxu0 %v2049
        %2063 = vmatprep.subr.mxu0 0.0
        %2064 = vmatpush1.msra.mxu0 %v2050
        %2065 = vmatprep.subr.mxu0 0.0
        %2066 = vmatpush1.msra.mxu0 %v2051
        %2067 = vmatprep.subr.mxu0 0.0
        %2068 = vmatpush1.msra.mxu0 %v2052
        %2069 = vmatprep.subr.mxu0 0.0
        %2070 = vmatpush1.msra.mxu0 0.0
        %2071 = vmatprep.subr.mxu0 0.0
        %2072 = vmatpush1.msra.mxu0 0.0
        %2073 = vmatprep.subr.mxu0 0.0
        %2074 = vmatpush1.msra.mxu0 0.0
        %2075 = vmatprep.subr.mxu0 0.0
        %2076 = vmatpush1.msra.mxu0 0.0
        %2077 = vmatprep.subr.mxu0 0.0
        %2078 = vmatpush1.msra.mxu0 0.0
        %2079 = vmatprep.subr.mxu0 0.0
        %2080 = vmatpush1.msra.mxu0 0.0
        %2081 = vmatprep.subr.mxu0 0.0
        %2082 = vmatpush1.msra.mxu0 0.0
        %2083 = vmatprep.subr.mxu0 0.0
        %2084 = vmatpush1.msra.mxu0 0.0
        %2085 = vmatprep.subr.mxu0 0.0
        %2086 = vmatpush1.msra.mxu0 0.0
        %2087 = vmatprep.subr.mxu0 0.0
        %2088 = vmatpush1.msra.mxu0 0.0
        %2089 = vmatprep.subr.mxu0 0.0
        %2090 = vmatpush1.msra.mxu0 0.0
        %2091 = vmatprep.subr.mxu0 0.0
        %2092 = vmatpush1.msra.mxu0 0.0
        %2093 = vmatprep.subr.mxu0 0.0
        %2094 = vmatpush1.msra.mxu0 0.0
        %2095 = vmatprep.subr.mxu0 0.0
        %2096 = vmatpush1.msra.mxu0 0.0
        %2097 = vmatprep.subr.mxu0 0.0
        %2098 = vmatpush1.msra.mxu0 0.0
        %2099 = vmatprep.subr.mxu0 0.0
        %2100 = vmatpush1.msra.mxu0 0.0
        %2101 = vmatprep.subr.mxu0 0.0
        %2102 = vmatpush1.msra.mxu0 0.0
        %2103 = vmatprep.subr.mxu0 0.0
        %2104 = vmatpush1.msra.mxu0 0.0
        %2105 = vmatprep.subr.mxu0 0.0
        %2106 = vmatpush1.msra.mxu0 0.0
        %2107 = vmatprep.subr.mxu0 0.0
        %2108 = vmatpush1.msra.mxu0 0.0
        %2109 = vmatprep.subr.mxu0 0.0
        %2110 = vmatpush1.msra.mxu0 0.0
        %2111 = vmatprep.subr.mxu0 0.0
        %2112 = vmatpush1.msra.mxu0 0.0
        %2113 = vmatprep.subr.mxu0 0.0
        %2114 = vmatpush1.msra.mxu0 0.0
        %2115 = vmatprep.subr.mxu0 0.0
        %2116 = vmatpush1.msra.mxu0 0.0
        %2117 = vmatprep.subr.mxu0 0.0
        %2118 = vmatpush1.msra.mxu0 0.0
        %2119 = vmatprep.subr.mxu0 0.0
        %2120 = vmatpush1.msra.mxu0 0.0
        %2121 = vmatprep.subr.mxu0 0.0
        %2122 = vmatpush1.msra.mxu0 0.0
        %2123 = vmatprep.subr.mxu0 0.0
        %2124 = vmatpush1.msra.mxu0 0.0
        %2125 = vmatprep.mubr.f32.mxu0 0.0
        %2126 = vmatmul.mubr.f32.gmra.mrb[0].mxu0 %v1082
        %v2127 = vpop.f32.mrb[0].mxu0
        %v2128 = vadd.f32 %v2059, %v2127
        %v2129 = vpop.f32.mrb[0].mxu0
        %2130 = vdwg.mxu0
        %s2131 = scalar_lea.vmem [#allocation2], 24
        %v2132 = vld [vmem:[%s2131] sm:$0xff]
        %v2134 = vsel %vm1155, %v2128, 0
        %v2137 = vsel %vm1155, %v2132, 0
        %2139 = vmatprep.subr.mxu0 0.0
        %2140 = vmatpush1.xpose.msra.mxu0 %v2137
        %2141 = vmatprep.subr.mxu0 0.0
        %2142 = vmatpush1.xpose.msra.mxu0 0.0
        %2143 = vmatprep.subr.mxu0 0.0
        %2144 = vmatpush1.xpose.msra.mxu0 0.0
        %2145 = vmatprep.subr.mxu0 0.0
        %2146 = vmatpush1.xpose.msra.mxu0 0.0
        %2147 = vmatprep.subr.mxu0 0.0
        %2148 = vmatpush1.xpose.msra.mxu0 0.0
        %2149 = vmatprep.subr.mxu0 0.0
        %2150 = vmatpush1.xpose.msra.mxu0 0.0
        %2151 = vmatprep.subr.mxu0 0.0
        %2152 = vmatpush1.xpose.msra.mxu0 0.0
        %2153 = vmatprep.subr.mxu0 0.0
        %2154 = vmatpush1.xpose.msra.mxu0 0.0
        %2155 = vmatprep.subr.mxu0 0.0
        %2156 = vmatpush1.xpose.msra.mxu0 0.0
        %2157 = vmatprep.subr.mxu0 0.0
        %2158 = vmatpush1.xpose.msra.mxu0 0.0
        %2159 = vmatprep.subr.mxu0 0.0
        %2160 = vmatpush1.xpose.msra.mxu0 0.0
        %2161 = vmatprep.subr.mxu0 0.0
        %2162 = vmatpush1.xpose.msra.mxu0 0.0
        %2163 = vmatprep.subr.mxu0 0.0
        %2164 = vmatpush1.xpose.msra.mxu0 0.0
        %2165 = vmatprep.subr.mxu0 0.0
        %2166 = vmatpush1.xpose.msra.mxu0 0.0
        %2167 = vmatprep.subr.mxu0 0.0
        %2168 = vmatpush1.xpose.msra.mxu0 0.0
        %2169 = vmatprep.subr.mxu0 0.0
        %2170 = vmatpush1.xpose.msra.mxu0 0.0
        %2171 = vmatprep.subr.mxu0 0.0
        %2172 = vmatpush1.xpose.msra.mxu0 0.0
        %2173 = vmatprep.subr.mxu0 0.0
        %2174 = vmatpush1.xpose.msra.mxu0 0.0
        %2175 = vmatprep.subr.mxu0 0.0
        %2176 = vmatpush1.xpose.msra.mxu0 0.0
        %2177 = vmatprep.subr.mxu0 0.0
        %2178 = vmatpush1.xpose.msra.mxu0 0.0
        %2179 = vmatprep.subr.mxu0 0.0
        %2180 = vmatpush1.xpose.msra.mxu0 0.0
        %2181 = vmatprep.subr.mxu0 0.0
        %2182 = vmatpush1.xpose.msra.mxu0 0.0
        %2183 = vmatprep.subr.mxu0 0.0
        %2184 = vmatpush1.xpose.msra.mxu0 0.0
        %2185 = vmatprep.subr.mxu0 0.0
        %2186 = vmatpush1.xpose.msra.mxu0 0.0
        %2187 = vmatprep.subr.mxu0 0.0
        %2188 = vmatpush1.xpose.msra.mxu0 0.0
        %2189 = vmatprep.subr.mxu0 0.0
        %2190 = vmatpush1.xpose.msra.mxu0 0.0
        %2191 = vmatprep.subr.mxu0 0.0
        %2192 = vmatpush1.xpose.msra.mxu0 0.0
        %2193 = vmatprep.subr.mxu0 0.0
        %2194 = vmatpush1.xpose.msra.mxu0 0.0
        %2195 = vmatprep.subr.mxu0 0.0
        %2196 = vmatpush1.xpose.msra.mxu0 0.0
        %2197 = vmatprep.subr.mxu0 0.0
        %2198 = vmatpush1.xpose.msra.mxu0 0.0
        %2199 = vmatprep.subr.mxu0 0.0
        %2200 = vmatpush1.xpose.msra.mxu0 0.0
        %2201 = vmatprep.subr.mxu0 0.0
        %2202 = vmatpush1.xpose.msra.mxu0 0.0
        %2203 = vmatprep.mubr.f32.mxu0 0.0
        %2204 = vmatmul.mubr.f32.gmra.mrb[0].mxu0 %v2134
        %v2205 = vpop.f32.mrb[0].mxu0
        %v2206 = vadd.f32 0.0, %v2205
        %v2207 = vpop.f32.mrb[0].mxu0
        %2208 = vdwg.mxu0
        %v2209 = vsel %vm1155, %v2206, -inf
        %2210 = vmax.xlane.f32.xlu0 %v2209
        %v2211 = vpop.xlane.xlu0 %2210
        %v2212 = vsub.f32 %v2206, %v2211
        %v2213 = vmul.f32 %v2212, 1.442695
        %v2214 = vpow.pop %v2213
        %v2215 = vsel %vm1155, %v2214, 0.0
        %2216 = vadd.xlane.f32.xlu0 %v2215
        %v2217 = vpop.xlane.xlu0 %2216
        %v2218 = vrcp.pop %v2217
        %v2219 = vmul.f32 %v2217, %v2218
        %v2220 = vsub.f32 2.0, %v2219
        %v2221 = vmul.f32 %v2218, %v2220
        %v2222 = vmul.f32 %v2214, %v2221
        %v2223 = vadd.f32 %v1896, %v2222
        %s2224 = scalar_lea.vmem [#allocation3], 24
        %v2225 = vld [vmem:[%s2224] sm:$0xff]
        %v2227 = vsel %vm1155, %v2222, 0
        %2229 = vmatprep.subr.mxu0 0.0
        %2230 = vmatpush1.msra.mxu0 %v2225
        %2231 = vmatprep.subr.mxu0 0.0
        %2232 = vmatpush1.msra.mxu0 0.0
        %2233 = vmatprep.subr.mxu0 0.0
        %2234 = vmatpush1.msra.mxu0 0.0
        %2235 = vmatprep.subr.mxu0 0.0
        %2236 = vmatpush1.msra.mxu0 0.0
        %2237 = vmatprep.subr.mxu0 0.0
        %2238 = vmatpush1.msra.mxu0 0.0
        %2239 = vmatprep.subr.mxu0 0.0
        %2240 = vmatpush1.msra.mxu0 0.0
        %2241 = vmatprep.subr.mxu0 0.0
        %2242 = vmatpush1.msra.mxu0 0.0
        %2243 = vmatprep.subr.mxu0 0.0
        %2244 = vmatpush1.msra.mxu0 0.0
        %2245 = vmatprep.subr.mxu0 0.0
        %2246 = vmatpush1.msra.mxu0 0.0
        %2247 = vmatprep.subr.mxu0 0.0
        %2248 = vmatpush1.msra.mxu0 0.0
        %2249 = vmatprep.subr.mxu0 0.0
        %2250 = vmatpush1.msra.mxu0 0.0
        %2251 = vmatprep.subr.mxu0 0.0
        %2252 = vmatpush1.msra.mxu0 0.0
        %2253 = vmatprep.subr.mxu0 0.0
        %2254 = vmatpush1.msra.mxu0 0.0
        %2255 = vmatprep.subr.mxu0 0.0
        %2256 = vmatpush1.msra.mxu0 0.0
        %2257 = vmatprep.subr.mxu0 0.0
        %2258 = vmatpush1.msra.mxu0 0.0
        %2259 = vmatprep.subr.mxu0 0.0
        %2260 = vmatpush1.msra.mxu0 0.0
        %2261 = vmatprep.subr.mxu0 0.0
        %2262 = vmatpush1.msra.mxu0 0.0
        %2263 = vmatprep.subr.mxu0 0.0
        %2264 = vmatpush1.msra.mxu0 0.0
        %2265 = vmatprep.subr.mxu0 0.0
        %2266 = vmatpush1.msra.mxu0 0.0
        %2267 = vmatprep.subr.mxu0 0.0
        %2268 = vmatpush1.msra.mxu0 0.0
        %2269 = vmatprep.subr.mxu0 0.0
        %2270 = vmatpush1.msra.mxu0 0.0
        %2271 = vmatprep.subr.mxu0 0.0
        %2272 = vmatpush1.msra.mxu0 0.0
        %2273 = vmatprep.subr.mxu0 0.0
        %2274 = vmatpush1.msra.mxu0 0.0
        %2275 = vmatprep.subr.mxu0 0.0
        %2276 = vmatpush1.msra.mxu0 0.0
        %2277 = vmatprep.subr.mxu0 0.0
        %2278 = vmatpush1.msra.mxu0 0.0
        %2279 = vmatprep.subr.mxu0 0.0
        %2280 = vmatpush1.msra.mxu0 0.0
        %2281 = vmatprep.subr.mxu0 0.0
        %2282 = vmatpush1.msra.mxu0 0.0
        %2283 = vmatprep.subr.mxu0 0.0
        %2284 = vmatpush1.msra.mxu0 0.0
        %2285 = vmatprep.subr.mxu0 0.0
        %2286 = vmatpush1.msra.mxu0 0.0
        %2287 = vmatprep.subr.mxu0 0.0
        %2288 = vmatpush1.msra.mxu0 0.0
        %2289 = vmatprep.subr.mxu0 0.0
        %2290 = vmatpush1.msra.mxu0 0.0
        %2291 = vmatprep.subr.mxu0 0.0
        %2292 = vmatpush1.msra.mxu0 0.0
        %2293 = vmatprep.mubr.f32.mxu0 0.0
        %2294 = vmatmul.mubr.f32.gmra.mrb[0].mxu0 %v2227
        %v2295 = vpop.f32.mrb[0].mxu0
        %v2296 = vadd.f32 0.0, %v2295
        %v2297 = vpop.f32.mrb[0].mxu0
        %2298 = vdwg.mxu0
        %s2299 = scalar_lea.vmem %s7, 24
        %v2300 = vld [vmem:[%s2299] sm:$0xff]
        %v2302 = vsel %vm1155, %v2296, 0
        %2304 = vmatprep.subr.mxu0 0.0
        %2305 = vmatpush1.msra.mxu0 %v2300
        %2306 = vmatprep.subr.mxu0 0.0
        %2307 = vmatpush1.msra.mxu0 0.0
        %2308 = vmatprep.subr.mxu0 0.0
        %2309 = vmatpush1.msra.mxu0 0.0
        %2310 = vmatprep.subr.mxu0 0.0
        %2311 = vmatpush1.msra.mxu0 0.0
        %2312 = vmatprep.subr.mxu0 0.0
        %2313 = vmatpush1.msra.mxu0 0.0
        %2314 = vmatprep.subr.mxu0 0.0
        %2315 = vmatpush1.msra.mxu0 0.0
        %2316 = vmatprep.subr.mxu0 0.0
        %2317 = vmatpush1.msra.mxu0 0.0
        %2318 = vmatprep.subr.mxu0 0.0
        %2319 = vmatpush1.msra.mxu0 0.0
        %2320 = vmatprep.subr.mxu0 0.0
        %2321 = vmatpush1.msra.mxu0 0.0
        %2322 = vmatprep.subr.mxu0 0.0
        %2323 = vmatpush1.msra.mxu0 0.0
        %2324 = vmatprep.subr.mxu0 0.0
        %2325 = vmatpush1.msra.mxu0 0.0
        %2326 = vmatprep.subr.mxu0 0.0
        %2327 = vmatpush1.msra.mxu0 0.0
        %2328 = vmatprep.subr.mxu0 0.0
        %2329 = vmatpush1.msra.mxu0 0.0
        %2330 = vmatprep.subr.mxu0 0.0
        %2331 = vmatpush1.msra.mxu0 0.0
        %2332 = vmatprep.subr.mxu0 0.0
        %2333 = vmatpush1.msra.mxu0 0.0
        %2334 = vmatprep.subr.mxu0 0.0
        %2335 = vmatpush1.msra.mxu0 0.0
        %2336 = vmatprep.subr.mxu0 0.0
        %2337 = vmatpush1.msra.mxu0 0.0
        %2338 = vmatprep.subr.mxu0 0.0
        %2339 = vmatpush1.msra.mxu0 0.0
        %2340 = vmatprep.subr.mxu0 0.0
        %2341 = vmatpush1.msra.mxu0 0.0
        %2342 = vmatprep.subr.mxu0 0.0
        %2343 = vmatpush1.msra.mxu0 0.0
        %2344 = vmatprep.subr.mxu0 0.0
        %2345 = vmatpush1.msra.mxu0 0.0
        %2346 = vmatprep.subr.mxu0 0.0
        %2347 = vmatpush1.msra.mxu0 0.0
        %2348 = vmatprep.subr.mxu0 0.0
        %2349 = vmatpush1.msra.mxu0 0.0
        %2350 = vmatprep.subr.mxu0 0.0
        %2351 = vmatpush1.msra.mxu0 0.0
        %2352 = vmatprep.subr.mxu0 0.0
        %2353 = vmatpush1.msra.mxu0 0.0
        %2354 = vmatprep.subr.mxu0 0.0
        %2355 = vmatpush1.msra.mxu0 0.0
        %2356 = vmatprep.subr.mxu0 0.0
        %2357 = vmatpush1.msra.mxu0 0.0
        %2358 = vmatprep.subr.mxu0 0.0
        %2359 = vmatpush1.msra.mxu0 0.0
        %2360 = vmatprep.subr.mxu0 0.0
        %2361 = vmatpush1.msra.mxu0 0.0
        %2362 = vmatprep.subr.mxu0 0.0
        %2363 = vmatpush1.msra.mxu0 0.0
        %2364 = vmatprep.subr.mxu0 0.0
        %2365 = vmatpush1.msra.mxu0 0.0
        %2366 = vmatprep.subr.mxu0 0.0
        %2367 = vmatpush1.msra.mxu0 0.0
        %2368 = vmatprep.mubr.f32.mxu0 0.0
        %2369 = vmatmul.mubr.f32.gmra.mrb[0].mxu0 %v2302
        %v2370 = vpop.f32.mrb[0].mxu0
        %v2371 = vadd.f32 0.0, %v2370
        %v2372 = vpop.f32.mrb[0].mxu0
        %2373 = vdwg.mxu0
        %v2374 = vadd.f32 %v2047, %v2371
        %v2375 = vld [vmem:[%s8] sm:$0x1]
        %v2377 = vlaneseq
        %v2378 = vshrl.u32 %v2377, 7
        %v2379 = vsub.s32 0, %v2378
        %v2380 = vrot.slane %v2375, %v2379
        %v2382 = vadd.f32 %v2374, %v2380
        %2383 = vst.msk [vmem:[%s370] sm:$0xff] %vm1080, %v2382
        %v2384 = vmul.f32 %v2223, 0.25
        %2385 = vst.msk [vmem:[%s377] sm:$0xff] %vm1155, %v2384
        %s2386 = sand.u32 %s244, 1
        %s2387 = scalar_lea.sflag [#allocation5], %s2386
        %s2388 = sand.u32 %s244, 1
        %s2389 = smul.addr %s2388, 8
        %s2390 = scalar_lea.vmem [#allocation4], %s2389
        %s2391 = sand.u32 %s272, 1
        %s2392 = scalar_lea.sflag [#allocation7], %s2391
        %s2393 = sand.u32 %s272, 1
        %s2394 = smul.addr %s2393, 8
        %s2395 = scalar_lea.vmem [#allocation6], %s2394
        // Predicated region
        $region61: #{tpu_custom_call.1} parent=55 // pred_check
          %p2396 = pneg %p254
        $region62: #{tpu_custom_call.1} parent=55 // pred_check_branch
          %2398 = sbr.rel (%p2396) target = $region64
        $region63: #{tpu_custom_call.1} parent=55 // pred_region
          %s2400 = ssub.s32 128, 128
          %2401 = vsyncadd %s2387, %s2400
          %s2402 = sadd.s32 %s33, %s32
          %s2403 = smul.addr %s2402, 128
          %s2404 = scalar_lea.hbm %s9, %s2403
          %s2406 = sshll.u32 %s2390, 4
          %s2407 = int_to_ptr.vmem [resolvable:$true] %s2406
          %2409 = dma.vmem_to_hbm [thread:$0]  %s2407, 128, %s2404, %s2387
        $region64: #{tpu_custom_call.1} parent=55 // pred_fallthru
          _
        // Predicated region
        $region65: #{tpu_custom_call.1} parent=55 // pred_check
          %p2410 = pneg %p282
        $region66: #{tpu_custom_call.1} parent=55 // pred_check_branch
          %2412 = sbr.rel (%p2410) target = $region68
        $region67: #{tpu_custom_call.1} parent=55 // pred_region
          %s2414 = ssub.s32 128, 128
          %2415 = vsyncadd %s2392, %s2414
          %s2416 = sadd.s32 %s33, %s32
          %s2417 = smul.addr %s2416, 128
          %s2418 = scalar_lea.hbm %s10, %s2417
          %s2420 = sshll.u32 %s2395, 4
          %s2421 = int_to_ptr.vmem [resolvable:$true] %s2420
          %2423 = dma.vmem_to_hbm [thread:$0]  %s2421, 128, %s2418, %s2392
        $region68: #{tpu_custom_call.1} parent=55 // pred_fallthru
          _
      $region56: #{tpu_custom_call.1} parent=5 // pred_fallthru
        _
      %p2424 = scmp.le.s32.totalorder 2, %s23
      // Predicated region
      $region69: #{tpu_custom_call.1} parent=5 // pred_check
        %p2425 = pneg %p2424
      $region70: #{tpu_custom_call.1} parent=5 // pred_check_branch
        %2427 = sbr.rel (%p2425) target = $region72
      $region71: #{tpu_custom_call.1} parent=5 // pred_region
        %s2428 = ssub.s32 %s23, 2
        // Predicated region
        $region73: #{tpu_custom_call.1} parent=71 // pred_check
          %p2429 = pneg %p260
        $region74: #{tpu_custom_call.1} parent=71 // pred_check_branch
          %2431 = sbr.rel (%p2429) target = $region76
        $region75: #{tpu_custom_call.1} parent=71 // pred_region
          %s2432 = sand.u32 %s245, 1
          %s2433 = scalar_lea.sflag [#allocation5], %s2432
          %s2434 = sand.u32 %s245, 1
          %s2435 = smul.addr %s2434, 8
          %s2436 = scalar_lea.vmem [#allocation4], %s2435
          %2437 = dma.done %s2433, 128
        $region76: #{tpu_custom_call.1} parent=71 // pred_fallthru
          _
        // Predicated region
        $region77: #{tpu_custom_call.1} parent=71 // pred_check
          %p2438 = pneg %p288
        $region78: #{tpu_custom_call.1} parent=71 // pred_check_branch
          %2440 = sbr.rel (%p2438) target = $region80
        $region79: #{tpu_custom_call.1} parent=71 // pred_region
          %s2441 = sand.u32 %s273, 1
          %s2442 = scalar_lea.sflag [#allocation7], %s2441
          %s2443 = sand.u32 %s273, 1
          %s2444 = smul.addr %s2443, 8
          %s2445 = scalar_lea.vmem [#allocation6], %s2444
          %2446 = dma.done %s2442, 128
        $region80: #{tpu_custom_call.1} parent=71 // pred_fallthru
          _
      $region72: #{tpu_custom_call.1} parent=5 // pred_fallthru
        _
    $region6: #{tpu_custom_call.1} parent=1 // loop_footer
      %s27 = sadd.s32 1, %s23
    $region7: #{tpu_custom_call.1} parent=1 // loop_footer_branch
      %22 = sbr.rel target = $region3
    $region8: #{tpu_custom_call.1} parent=1 // loop_exit
      _
    %2447 = vsyncpa [#allocation5], 1
    %s2448 = scalar_lea.sflag [#allocation5], 1
    %2449 = vsyncpa %s2448, 1
    %2450 = vsyncpa [#allocation7], 1
    %s2451 = scalar_lea.sflag [#allocation7], 1
    %2452 = vsyncpa %s2451, 1

// kernel: tpu_custom_call.1
$region0: #{tpu_custom_call.1}
  #allocation0 [shape = 'u32[]', space=smem, size = 0x4, offset = 0x4, fixed_abs, tag = 'smem constant byte address 0x4 - core index']
  #allocation1 [shape = 'u32[144,128]{1,0:T(1,128)}', space=vmem, size = 0x12000, scoped, tag = 'internal scratch']
  #allocation2 [shape = 'f32[4,8,8]{2,1,0:T(8,128)}', space=vmem, size = 0x4000, scoped, tag = 'scratch operand']
  #allocation3 [shape = 'f32[4,8,8]{2,1,0:T(8,128)}', space=vmem, size = 0x4000, scoped, tag = 'scratch operand']
  %s0 = inlined_call_operand.vmem [shape: f32[2,8,32], index: 0, kind: input, shape index: {}]
  %s1 = inlined_call_operand.vmem [shape: f32[4,32,8], index: 1, kind: input, shape index: {}]
  %s2 = inlined_call_operand.vmem [shape: f32[4,1,8], index: 2, kind: input, shape index: {}]
  %s3 = inlined_call_operand.vmem [shape: f32[4,32,8], index: 3, kind: input, shape index: {}]
  %s4 = inlined_call_operand.vmem [shape: f32[4,1,8], index: 4, kind: input, shape index: {}]
  %s5 = inlined_call_operand.vmem [shape: f32[4,32,8], index: 5, kind: input, shape index: {}]
  %s6 = inlined_call_operand.vmem [shape: f32[4,1,8], index: 6, kind: input, shape index: {}]
  %s7 = inlined_call_operand.vmem [shape: f32[4,8,32], index: 7, kind: input, shape index: {}]
  %s8 = inlined_call_operand.vmem [shape: f32[1,32], index: 8, kind: input, shape index: {}]
  %s9 = inlined_call_operand.hbm [shape: f32[2,8,32], index: 9, kind: output, shape index: {0}]
  %s10 = inlined_call_operand.hbm [shape: f32[2,8,8], index: 10, kind: output, shape index: {1}]
  %11 = xla_tuple %s9, %s10
  %s12 = sld [smem:[#allocation0]]
  $region81: #{tpu_custom_call.1} parent=0
    _
  %s14 = ssub.s32 1, %s12
  %s15 = scalar_select 0, %s14, %s12
  $region1: #{tpu_custom_call.1} parent=0
    #allocation4 [shape = 'u8[8192]{0}', space=vmem, size = 0x2000, scoped, tag = 'output window, operand 0']
    #allocation5 [shape = 's32[2]{0}', space=sflag, size = 0x8, scoped, tag = 'scoped memory for tpu_custom_call.1']
    #allocation6 [shape = 'u8[8192]{0}', space=vmem, size = 0x2000, scoped, tag = 'output window, operand 1']
    #allocation7 [shape = 's32[2]{0}', space=sflag, size = 0x8, scoped, tag = 'scoped memory for tpu_custom_call.1']
    %16 = vsyncpa [#allocation5], 0
    %s17 = scalar_lea.sflag [#allocation5], 1
    %18 = vsyncpa %s17, 0
    %19 = vsyncpa [#allocation7], 0
    %s20 = scalar_lea.sflag [#allocation7], 1
    %21 = vsyncpa %s20, 0
    loop: start=0, step=1, limit=4
    $region2: #{tpu_custom_call.1} parent=1 // loop_pre_header
      _
    $region3: #{tpu_custom_call.1} parent=1 // loop_header
      %s23 = sphi 0, %s27
      %p24 = scmp.ge.s32.totalorder %s23, 4
      %s30 = sphi 0, %s42
      %s31 = sphi 0, %s38
      %s32 = sphi 0, %s30
      %s33 = sphi 0, %s31
      %s34 = sphi 0, %s32
      %s35 = sphi 0, %s33
      %s45 = sphi 0, %s47
      %s48 = sphi 0, %s45
      %s49 = sphi 0, %s48
      %s65 = sphi 0, %s49
      %s69 = sphi 0, %s69
      %s71 = sphi 0, %s69
      %s72 = sphi 0, %s71
      %s86 = sphi 0, %s72
      %s90 = sphi 0, %s90
      %s92 = sphi 0, %s90
      %s93 = sphi 0, %s92
      %s107 = sphi 0, %s93
      %s111 = sphi 0, %s111
      %s113 = sphi 0, %s111
      %s114 = sphi 0, %s113
      %s128 = sphi 0, %s114
      %s132 = sphi 0, %s132
      %s134 = sphi 0, %s132
      %s135 = sphi 0, %s134
      %s149 = sphi 0, %s135
      %s153 = sphi 0, %s153
      %s155 = sphi 0, %s153
      %s156 = sphi 0, %s155
      %s170 = sphi 0, %s156
      %s174 = sphi 0, %s174
      %s176 = sphi 0, %s174
      %s177 = sphi 0, %s176
      %s191 = sphi 0, %s177
      %s195 = sphi 0, %s195
      %s197 = sphi 0, %s195
      %s198 = sphi 0, %s197
      %s212 = sphi 0, %s198
      %s216 = sphi 0, %s216
      %s218 = sphi 0, %s216
      %s219 = sphi 0, %s218
      %s233 = sphi 0, %s219
      %s241 = sphi 0, %s243
      %s244 = sphi 0, %s241
      %s245 = sphi 0, %s244
      %s261 = sphi 0, %s245
      %s269 = sphi 0, %s271
      %s272 = sphi 0, %s269
      %s273 = sphi 0, %s272
      %s289 = sphi 0, %s273
    $region4: #{tpu_custom_call.1} parent=1 // loop_header_branch
      %26 = sbr.rel (%p24) target = $region8
    $region5: #{tpu_custom_call.1} parent=1 // loop_body
      %s28 = ssub.s32 %s23, 1
      %s29 = ssub.s32 %s23, 2
      %s36 = sadd.s32 1, %s31
      %p37 = scmp.ge.s32.totalorder %s36, 1
      %s38 = scalar_select %p37, 0, %s36
      %s39 = sadd.s32 1, %s30
      %s40 = scalar_select %p37, %s39, %s30
      %p41 = scmp.ge.s32.totalorder %s40, 2
      %s42 = scalar_select %p41, 0, %s40
      %s43 = ssub.s32 %s30, %s42
      %p44 = scmp.eq.s32.totalorder %s43, 0
      %s46 = sadd.s32 %s45, 1
      %s47 = scalar_select %p44, %s45, %s46
      %p50 = pneg %p44
      %p51 = scmp.eq.s32.totalorder %s23, 1
      %p52 = por %p50, %p51
      %p53 = scmp.ne.s32.totalorder %s45, %s48
      %p54 = scmp.eq.s32.totalorder %s23, 0
      %p55 = por %p53, %p54
      %p56 = scmp.ne.s32.totalorder %s45, %s48
      %p57 = scmp.eq.s32.totalorder %s28, 1
      %p58 = por %p56, %p57
      %p59 = scmp.ne.s32.totalorder %s48, %s49
      %p60 = scmp.eq.s32.totalorder %s28, 0
      %p61 = por %p59, %p60
      %p62 = scmp.ne.s32.totalorder %s48, %s49
      %p63 = scmp.eq.s32.totalorder %s29, 1
      %p64 = por %p62, %p63
      %p66 = scmp.ne.s32.totalorder %s49, %s65
      %p67 = scmp.eq.s32.totalorder %s29, 0
      %p68 = por %p66, %p67
      %s70 = sadd.s32 %s69, 1
      %p73 = scmp.eq.s32.totalorder %s23, 1
      %p74 = scmp.ne.s32.totalorder %s69, %s71
      %p75 = scmp.eq.s32.totalorder %s23, 0
      %p76 = por %p74, %p75
      %p77 = scmp.ne.s32.totalorder %s69, %s71
      %p78 = scmp.eq.s32.totalorder %s28, 1
      %p79 = por %p77, %p78
      %p80 = scmp.ne.s32.totalorder %s71, %s72
      %p81 = scmp.eq.s32.totalorder %s28, 0
      %p82 = por %p80, %p81
      %p83 = scmp.ne.s32.totalorder %s71, %s72
      %p84 = scmp.eq.s32.totalorder %s29, 1
      %p85 = por %p83, %p84
      %p87 = scmp.ne.s32.totalorder %s72, %s86
      %p88 = scmp.eq.s32.totalorder %s29, 0
      %p89 = por %p87, %p88
      %s91 = sadd.s32 %s90, 1
      %p94 = scmp.eq.s32.totalorder %s23, 1
      %p95 = scmp.ne.s32.totalorder %s90, %s92
      %p96 = scmp.eq.s32.totalorder %s23, 0
      %p97 = por %p95, %p96
      %p98 = scmp.ne.s32.totalorder %s90, %s92
      %p99 = scmp.eq.s32.totalorder %s28, 1
      %p100 = por %p98, %p99
      %p101 = scmp.ne.s32.totalorder %s92, %s93
      %p102 = scmp.eq.s32.totalorder %s28, 0
      %p103 = por %p101, %p102
      %p104 = scmp.ne.s32.totalorder %s92, %s93
      %p105 = scmp.eq.s32.totalorder %s29, 1
      %p106 = por %p104, %p105
      %p108 = scmp.ne.s32.totalorder %s93, %s107
      %p109 = scmp.eq.s32.totalorder %s29, 0
      %p110 = por %p108, %p109
      %s112 = sadd.s32 %s111, 1
      %p115 = scmp.eq.s32.totalorder %s23, 1
      %p116 = scmp.ne.s32.totalorder %s111, %s113
      %p117 = scmp.eq.s32.totalorder %s23, 0
      %p118 = por %p116, %p117
      %p119 = scmp.ne.s32.totalorder %s111, %s113
      %p120 = scmp.eq.s32.totalorder %s28, 1
      %p121 = por %p119, %p120
      %p122 = scmp.ne.s32.totalorder %s113, %s114
      %p123 = scmp.eq.s32.totalorder %s28, 0
      %p124 = por %p122, %p123
      %p125 = scmp.ne.s32.totalorder %s113, %s114
      %p126 = scmp.eq.s32.totalorder %s29, 1
      %p127 = por %p125, %p126
      %p129 = scmp.ne.s32.totalorder %s114, %s128
      %p130 = scmp.eq.s32.totalorder %s29, 0
      %p131 = por %p129, %p130
      %s133 = sadd.s32 %s132, 1
      %p136 = scmp.eq.s32.totalorder %s23, 1
      %p137 = scmp.ne.s32.totalorder %s132, %s134
      %p138 = scmp.eq.s32.totalorder %s23, 0
      %p139 = por %p137, %p138
      %p140 = scmp.ne.s32.totalorder %s132, %s134
      %p141 = scmp.eq.s32.totalorder %s28, 1
      %p142 = por %p140, %p141
      %p143 = scmp.ne.s32.totalorder %s134, %s135
      %p144 = scmp.eq.s32.totalorder %s28, 0
      %p145 = por %p143, %p144
      %p146 = scmp.ne.s32.totalorder %s134, %s135
      %p147 = scmp.eq.s32.totalorder %s29, 1
      %p148 = por %p146, %p147
      %p150 = scmp.ne.s32.totalorder %s135, %s149
      %p151 = scmp.eq.s32.totalorder %s29, 0
      %p152 = por %p150, %p151
      %s154 = sadd.s32 %s153, 1
      %p157 = scmp.eq.s32.totalorder %s23, 1
      %p158 = scmp.ne.s32.totalorder %s153, %s155
      %p159 = scmp.eq.s32.totalorder %s23, 0
      %p160 = por %p158, %p159
      %p161 = scmp.ne.s32.totalorder %s153, %s155
      %p162 = scmp.eq.s32.totalorder %s28, 1
      %p163 = por %p161, %p162
      %p164 = scmp.ne.s32.totalorder %s155, %s156
      %p165 = scmp.eq.s32.totalorder %s28, 0
      %p166 = por %p164, %p165
      %p167 = scmp.ne.s32.totalorder %s155, %s156
      %p168 = scmp.eq.s32.totalorder %s29, 1
      %p169 = por %p167, %p168
      %p171 = scmp.ne.s32.totalorder %s156, %s170
      %p172 = scmp.eq.s32.totalorder %s29, 0
      %p173 = por %p171, %p172
      %s175 = sadd.s32 %s174, 1
      %p178 = scmp.eq.s32.totalorder %s23, 1
      %p179 = scmp.ne.s32.totalorder %s174, %s176
      %p180 = scmp.eq.s32.totalorder %s23, 0
      %p181 = por %p179, %p180
      %p182 = scmp.ne.s32.totalorder %s174, %s176
      %p183 = scmp.eq.s32.totalorder %s28, 1
      %p184 = por %p182, %p183
      %p185 = scmp.ne.s32.totalorder %s176, %s177
      %p186 = scmp.eq.s32.totalorder %s28, 0
      %p187 = por %p185, %p186
      %p188 = scmp.ne.s32.totalorder %s176, %s177
      %p189 = scmp.eq.s32.totalorder %s29, 1
      %p190 = por %p188, %p189
      %p192 = scmp.ne.s32.totalorder %s177, %s191
      %p193 = scmp.eq.s32.totalorder %s29, 0
      %p194 = por %p192, %p193
      %s196 = sadd.s32 %s195, 1
      %p199 = scmp.eq.s32.totalorder %s23, 1
      %p200 = scmp.ne.s32.totalorder %s195, %s197
      %p201 = scmp.eq.s32.totalorder %s23, 0
      %p202 = por %p200, %p201
      %p203 = scmp.ne.s32.totalorder %s195, %s197
      %p204 = scmp.eq.s32.totalorder %s28, 1
      %p205 = por %p203, %p204
      %p206 = scmp.ne.s32.totalorder %s197, %s198
      %p207 = scmp.eq.s32.totalorder %s28, 0
      %p208 = por %p206, %p207
      %p209 = scmp.ne.s32.totalorder %s197, %s198
      %p210 = scmp.eq.s32.totalorder %s29, 1
      %p211 = por %p209, %p210
      %p213 = scmp.ne.s32.totalorder %s198, %s212
      %p214 = scmp.eq.s32.totalorder %s29, 0
      %p215 = por %p213, %p214
      %s217 = sadd.s32 %s216, 1
      %p220 = scmp.eq.s32.totalorder %s23, 1
      %p221 = scmp.ne.s32.totalorder %s216, %s218
      %p222 = scmp.eq.s32.totalorder %s23, 0
      %p223 = por %p221, %p222
      %p224 = scmp.ne.s32.totalorder %s216, %s218
      %p225 = scmp.eq.s32.totalorder %s28, 1
      %p226 = por %p224, %p225
      %p227 = scmp.ne.s32.totalorder %s218, %s219
      %p228 = scmp.eq.s32.totalorder %s28, 0
      %p229 = por %p227, %p228
      %p230 = scmp.ne.s32.totalorder %s218, %s219
      %p231 = scmp.eq.s32.totalorder %s29, 1
      %p232 = por %p230, %p231
      %p234 = scmp.ne.s32.totalorder %s219, %s233
      %p235 = scmp.eq.s32.totalorder %s29, 0
      %p236 = por %p234, %p235
      %s237 = ssub.s32 %s30, %s42
      %s238 = ssub.s32 %s31, %s38
      %s239 = sor.u32 %s237, %s238
      %p240 = scmp.eq.s32.totalorder %s239, 0
      %s242 = sadd.s32 %s241, 1
      %s243 = scalar_select %p240, %s241, %s242
      %p246 = pneg %p240
      %p247 = scmp.eq.s32.totalorder %s23, 1
      %p248 = por %p246, %p247
      %p249 = scmp.ne.s32.totalorder %s241, %s244
      %p250 = scmp.eq.s32.totalorder %s23, 0
      %p251 = por %p249, %p250
      %p252 = scmp.ne.s32.totalorder %s241, %s244
      %p253 = scmp.eq.s32.totalorder %s28, 1
      %p254 = por %p252, %p253
      %p255 = scmp.ne.s32.totalorder %s244, %s245
      %p256 = scmp.eq.s32.totalorder %s28, 0
      %p257 = por %p255, %p256
      %p258 = scmp.ne.s32.totalorder %s244, %s245
      %p259 = scmp.eq.s32.totalorder %s29, 1
      %p260 = por %p258, %p259
      %p262 = scmp.ne.s32.totalorder %s245, %s261
      %p263 = scmp.eq.s32.totalorder %s29, 0
      %p264 = por %p262, %p263
      %s265 = ssub.s32 %s30, %s42
      %s266 = ssub.s32 %s31, %s38
      %s267 = sor.u32 %s265, %s266
      %p268 = scmp.eq.s32.totalorder %s267, 0
      %s270 = sadd.s32 %s269, 1
      %s271 = scalar_select %p268, %s269, %s270
      %p274 = pneg %p268
      %p275 = scmp.eq.s32.totalorder %s23, 1
      %p276 = por %p274, %p275
      %p277 = scmp.ne.s32.totalorder %s269, %s272
      %p278 = scmp.eq.s32.totalorder %s23, 0
      %p279 = por %p277, %p278
      %p280 = scmp.ne.s32.totalorder %s269, %s272
      %p281 = scmp.eq.s32.totalorder %s28, 1
      %p282 = por %p280, %p281
      %p283 = scmp.ne.s32.totalorder %s272, %s273
      %p284 = scmp.eq.s32.totalorder %s28, 0
      %p285 = por %p283, %p284
      %p286 = scmp.ne.s32.totalorder %s272, %s273
      %p287 = scmp.eq.s32.totalorder %s29, 1
      %p288 = por %p286, %p287
      %p290 = scmp.ne.s32.totalorder %s273, %s289
      %p291 = scmp.eq.s32.totalorder %s29, 0
      %p292 = por %p290, %p291
      %p293 = scmp.le.s32.totalorder 1, %s23
      %p294 = scmp.lt.s32.totalorder %s23, 3
      %p295 = pnand %p293, %p294
      %p296 = pneg %p295
      // Predicated region
      $region9: #{tpu_custom_call.1} parent=5 // pred_check
        _
      $region10: #{tpu_custom_call.1} parent=5 // pred_check_branch
        %298 = sbr.rel (%p295) target = $region12
      $region11: #{tpu_custom_call.1} parent=5 // pred_region
        %s299 = ssub.s32 %s23, 1
        // Predicated region
        $region13: #{tpu_custom_call.1} parent=11 // pred_check
          %p300 = pneg %p82
        $region14: #{tpu_custom_call.1} parent=11 // pred_check_branch
          %302 = sbr.rel (%p300) target = $region16
        $region15: #{tpu_custom_call.1} parent=11 // pred_region
          _
        $region16: #{tpu_custom_call.1} parent=11 // pred_fallthru
          _
        // Predicated region
        $region17: #{tpu_custom_call.1} parent=11 // pred_check
          %p303 = pneg %p103
        $region18: #{tpu_custom_call.1} parent=11 // pred_check_branch
          %305 = sbr.rel (%p303) target = $region20
        $region19: #{tpu_custom_call.1} parent=11 // pred_region
          _
        $region20: #{tpu_custom_call.1} parent=11 // pred_fallthru
          _
        // Predicated region
        $region21: #{tpu_custom_call.1} parent=11 // pred_check
          %p306 = pneg %p124
        $region22: #{tpu_custom_call.1} parent=11 // pred_check_branch
          %308 = sbr.rel (%p306) target = $region24
        $region23: #{tpu_custom_call.1} parent=11 // pred_region
          _
        $region24: #{tpu_custom_call.1} parent=11 // pred_fallthru
          _
        // Predicated region
        $region25: #{tpu_custom_call.1} parent=11 // pred_check
          %p309 = pneg %p145
        $region26: #{tpu_custom_call.1} parent=11 // pred_check_branch
          %311 = sbr.rel (%p309) target = $region28
        $region27: #{tpu_custom_call.1} parent=11 // pred_region
          _
        $region28: #{tpu_custom_call.1} parent=11 // pred_fallthru
          _
        // Predicated region
        $region29: #{tpu_custom_call.1} parent=11 // pred_check
          %p312 = pneg %p166
        $region30: #{tpu_custom_call.1} parent=11 // pred_check_branch
          %314 = sbr.rel (%p312) target = $region32
        $region31: #{tpu_custom_call.1} parent=11 // pred_region
          _
        $region32: #{tpu_custom_call.1} parent=11 // pred_fallthru
          _
        // Predicated region
        $region33: #{tpu_custom_call.1} parent=11 // pred_check
          %p315 = pneg %p187
        $region34: #{tpu_custom_call.1} parent=11 // pred_check_branch
          %317 = sbr.rel (%p315) target = $region36
        $region35: #{tpu_custom_call.1} parent=11 // pred_region
          _
        $region36: #{tpu_custom_call.1} parent=11 // pred_fallthru
          _
        // Predicated region
        $region37: #{tpu_custom_call.1} parent=11 // pred_check
          %p318 = pneg %p208
        $region38: #{tpu_custom_call.1} parent=11 // pred_check_branch
          %320 = sbr.rel (%p318) target = $region40
        $region39: #{tpu_custom_call.1} parent=11 // pred_region
          _
        $region40: #{tpu_custom_call.1} parent=11 // pred_fallthru
          _
        // Predicated region
        $region41: #{tpu_custom_call.1} parent=11 // pred_check
          %p321 = pneg %p229
        $region42: #{tpu_custom_call.1} parent=11 // pred_check_branch
          %323 = sbr.rel (%p321) target = $region44
        $region43: #{tpu_custom_call.1} parent=11 // pred_region
          _
        $region44: #{tpu_custom_call.1} parent=11 // pred_fallthru
          _
      $region12: #{tpu_custom_call.1} parent=5 // pred_fallthru
        _
      %p324 = scmp.lt.s32.totalorder %s23, 2
      // Predicated region
      $region45: #{tpu_custom_call.1} parent=5 // pred_check
        %p325 = pneg %p324
      $region46: #{tpu_custom_call.1} parent=5 // pred_check_branch
        %327 = sbr.rel (%p325) target = $region48
      $region47: #{tpu_custom_call.1} parent=5 // pred_region
        // Predicated region
        $region49: #{tpu_custom_call.1} parent=47 // pred_check
          %p328 = pneg %p55
        $region50: #{tpu_custom_call.1} parent=47 // pred_check_branch
          %330 = sbr.rel (%p328) target = $region52
        $region51: #{tpu_custom_call.1} parent=47 // pred_region
          %p331 = scmp.lt.s32.totalorder %s30, 1
          %s332 = scalar_select %p331, %s30, 1
          %s333 = smul.addr %s332, 8
          %s334 = scalar_lea.vmem %s0, %s333
        $region52: #{tpu_custom_call.1} parent=47 // pred_fallthru
          _
      $region48: #{tpu_custom_call.1} parent=5 // pred_fallthru
        _
      %p335 = scmp.le.s32.totalorder 1, %s23
      %p336 = scmp.lt.s32.totalorder %s23, 3
      %p337 = pnand %p335, %p336
      %p338 = pneg %p337
      // Predicated region
      $region53: #{tpu_custom_call.1} parent=5 // pred_check
        _
      $region54: #{tpu_custom_call.1} parent=5 // pred_check_branch
        %340 = sbr.rel (%p337) target = $region56
      $region55: #{tpu_custom_call.1} parent=5 // pred_region
        %s341 = ssub.s32 %s23, 1
        %p342 = scmp.lt.s32.totalorder %s32, 1
        %s343 = scalar_select %p342, %s32, 1
        %s344 = smul.addr %s343, 8
        %s345 = scalar_lea.vmem %s0, %s344
        %p346 = pneg %p61
        %p347 = pneg %p58
        %p348 = pneg %p82
        %p349 = pneg %p79
        %p350 = pneg %p103
        %p351 = pneg %p100
        %p352 = pneg %p124
        %p353 = pneg %p121
        %p354 = pneg %p145
        %p355 = pneg %p142
        %p356 = pneg %p166
        %p357 = pneg %p163
        %p358 = pneg %p187
        %p359 = pneg %p184
        %p360 = pneg %p208
        %p361 = pneg %p205
        %p362 = pneg %p229
        %p363 = pneg %p226
        %p364 = pneg %p257
        %p365 = pneg %p254
        %s366 = sand.u32 %s244, 1
        %s367 = scalar_lea.sflag [#allocation5], %s366
        %s368 = sand.u32 %s244, 1
        %s369 = smul.addr %s368, 8
        %s370 = scalar_lea.vmem [#allocation4], %s369
        %p371 = pneg %p285
        %p372 = pneg %p282
        %s373 = sand.u32 %s272, 1
        %s374 = scalar_lea.sflag [#allocation7], %s373
        %s375 = sand.u32 %s272, 1
        %s376 = smul.addr %s375, 8
        %s377 = scalar_lea.vmem [#allocation6], %s376
        %p378 = scmp.lt.s32.totalorder %s32, 1
        %s379 = scalar_select %p378, %s32, 1
        %s380 = smul.addr %s379, 8
        %s381 = scalar_lea.vmem %s0, %s380
        %p382 = scmp.eq.s32.totalorder %s33, 0
        // Predicated region
        $region57: #{tpu_custom_call.1} parent=55 // pred_check
          %p383 = pneg %p382
        $region58: #{tpu_custom_call.1} parent=55 // pred_check_branch
          %385 = sbr.rel (%p383) target = $region60
        $region59: #{tpu_custom_call.1} parent=55 // pred_region
          %v386 = vld [vmem:[%s381] sm:$0xff]
          %v387 = vld [vmem:[%s3] sm:$0xff]
          %v388 = vld [vmem:[%s3 + $0x8] sm:$0xff]
          %v389 = vld [vmem:[%s3 + $0x10] sm:$0xff]
          %v390 = vld [vmem:[%s3 + $0x18] sm:$0xff]
          %v391 = vld [vmem:[%s4] sm:$0x1]
          %v393 = vlaneseq
          %v394 = vshrl.u32 %v393, 7
          %v395 = vsub.s32 0, %v394
          %v396 = vrot.slane %v391, %v395
          %vm398 = vcmask 261120
          %v400 = vsel %vm398, %v386, 0
          %402 = vmatprep.subr.mxu0 0.0
          %403 = vmatpush1.msra.mxu0 %v387
          %404 = vmatprep.subr.mxu0 0.0
          %405 = vmatpush1.msra.mxu0 %v388
          %406 = vmatprep.subr.mxu0 0.0
          %407 = vmatpush1.msra.mxu0 %v389
          %408 = vmatprep.subr.mxu0 0.0
          %409 = vmatpush1.msra.mxu0 %v390
          %410 = vmatprep.subr.mxu0 0.0
          %411 = vmatpush1.msra.mxu0 0.0
          %412 = vmatprep.subr.mxu0 0.0
          %413 = vmatpush1.msra.mxu0 0.0
          %414 = vmatprep.subr.mxu0 0.0
          %415 = vmatpush1.msra.mxu0 0.0
          %416 = vmatprep.subr.mxu0 0.0
          %417 = vmatpush1.msra.mxu0 0.0
          %418 = vmatprep.subr.mxu0 0.0
          %419 = vmatpush1.msra.mxu0 0.0
          %420 = vmatprep.subr.mxu0 0.0
          %421 = vmatpush1.msra.mxu0 0.0
          %422 = vmatprep.subr.mxu0 0.0
          %423 = vmatpush1.msra.mxu0 0.0
          %424 = vmatprep.subr.mxu0 0.0
          %425 = vmatpush1.msra.mxu0 0.0
          %426 = vmatprep.subr.mxu0 0.0
          %427 = vmatpush1.msra.mxu0 0.0
          %428 = vmatprep.subr.mxu0 0.0
          %429 = vmatpush1.msra.mxu0 0.0
          %430 = vmatprep.subr.mxu0 0.0
          %431 = vmatpush1.msra.mxu0 0.0
          %432 = vmatprep.subr.mxu0 0.0
          %433 = vmatpush1.msra.mxu0 0.0
          %434 = vmatprep.subr.mxu0 0.0
          %435 = vmatpush1.msra.mxu0 0.0
          %436 = vmatprep.subr.mxu0 0.0
          %437 = vmatpush1.msra.mxu0 0.0
          %438 = vmatprep.subr.mxu0 0.0
          %439 = vmatpush1.msra.mxu0 0.0
          %440 = vmatprep.subr.mxu0 0.0
          %441 = vmatpush1.msra.mxu0 0.0
          %442 = vmatprep.subr.mxu0 0.0
          %443 = vmatpush1.msra.mxu0 0.0
          %444 = vmatprep.subr.mxu0 0.0
          %445 = vmatpush1.msra.mxu0 0.0
          %446 = vmatprep.subr.mxu0 0.0
          %447 = vmatpush1.msra.mxu0 0.0
          %448 = vmatprep.subr.mxu0 0.0
          %449 = vmatpush1.msra.mxu0 0.0
          %450 = vmatprep.subr.mxu0 0.0
          %451 = vmatpush1.msra.mxu0 0.0
          %452 = vmatprep.subr.mxu0 0.0
          %453 = vmatpush1.msra.mxu0 0.0
          %454 = vmatprep.subr.mxu0 0.0
          %455 = vmatpush1.msra.mxu0 0.0
          %456 = vmatprep.subr.mxu0 0.0
          %457 = vmatpush1.msra.mxu0 0.0
          %458 = vmatprep.subr.mxu0 0.0
          %459 = vmatpush1.msra.mxu0 0.0
          %460 = vmatprep.subr.mxu0 0.0
          %461 = vmatpush1.msra.mxu0 0.0
          %462 = vmatprep.subr.mxu0 0.0
          %463 = vmatpush1.msra.mxu0 0.0
          %464 = vmatprep.subr.mxu0 0.0
          %465 = vmatpush1.msra.mxu0 0.0
          %466 = vmatprep.mubr.f32.mxu0 0.0
          %467 = vmatmul.mubr.f32.gmra.mrb[0].mxu0 %v400
          %v468 = vpop.f32.mrb[0].mxu0
          %v469 = vadd.f32 %v396, %v468
          %v470 = vpop.f32.mrb[0].mxu0
          %471 = vdwg.mxu0
          %v472 = vld [vmem:[%s5] sm:$0xff]
          %v473 = vld [vmem:[%s5 + $0x8] sm:$0xff]
          %v474 = vld [vmem:[%s5 + $0x10] sm:$0xff]
          %v475 = vld [vmem:[%s5 + $0x18] sm:$0xff]
          %v476 = vld [vmem:[%s6] sm:$0x1]
          %v478 = vlaneseq
          %v479 = vshrl.u32 %v478, 7
          %v480 = vsub.s32 0, %v479
          %v481 = vrot.slane %v476, %v480
          %483 = vmatprep.subr.mxu0 0.0
          %484 = vmatpush1.msra.mxu0 %v472
          %485 = vmatprep.subr.mxu0 0.0
          %486 = vmatpush1.msra.mxu0 %v473
          %487 = vmatprep.subr.mxu0 0.0
          %488 = vmatpush1.msra.mxu0 %v474
          %489 = vmatprep.subr.mxu0 0.0
          %490 = vmatpush1.msra.mxu0 %v475
          %491 = vmatprep.subr.mxu0 0.0
          %492 = vmatpush1.msra.mxu0 0.0
          %493 = vmatprep.subr.mxu0 0.0
          %494 = vmatpush1.msra.mxu0 0.0
          %495 = vmatprep.subr.mxu0 0.0
          %496 = vmatpush1.msra.mxu0 0.0
          %497 = vmatprep.subr.mxu0 0.0
          %498 = vmatpush1.msra.mxu0 0.0
          %499 = vmatprep.subr.mxu0 0.0
          %500 = vmatpush1.msra.mxu0 0.0
          %501 = vmatprep.subr.mxu0 0.0
          %502 = vmatpush1.msra.mxu0 0.0
          %503 = vmatprep.subr.mxu0 0.0
          %504 = vmatpush1.msra.mxu0 0.0
          %505 = vmatprep.subr.mxu0 0.0
          %506 = vmatpush1.msra.mxu0 0.0
          %507 = vmatprep.subr.mxu0 0.0
          %508 = vmatpush1.msra.mxu0 0.0
          %509 = vmatprep.subr.mxu0 0.0
          %510 = vmatpush1.msra.mxu0 0.0
          %511 = vmatprep.subr.mxu0 0.0
          %512 = vmatpush1.msra.mxu0 0.0
          %513 = vmatprep.subr.mxu0 0.0
          %514 = vmatpush1.msra.mxu0 0.0
          %515 = vmatprep.subr.mxu0 0.0
          %516 = vmatpush1.msra.mxu0 0.0
          %517 = vmatprep.subr.mxu0 0.0
          %518 = vmatpush1.msra.mxu0 0.0
          %519 = vmatprep.subr.mxu0 0.0
          %520 = vmatpush1.msra.mxu0 0.0
          %521 = vmatprep.subr.mxu0 0.0
          %522 = vmatpush1.msra.mxu0 0.0
          %523 = vmatprep.subr.mxu0 0.0
          %524 = vmatpush1.msra.mxu0 0.0
          %525 = vmatprep.subr.mxu0 0.0
          %526 = vmatpush1.msra.mxu0 0.0
          %527 = vmatprep.subr.mxu0 0.0
          %528 = vmatpush1.msra.mxu0 0.0
          %529 = vmatprep.subr.mxu0 0.0
          %530 = vmatpush1.msra.mxu0 0.0
          %531 = vmatprep.subr.mxu0 0.0
          %532 = vmatpush1.msra.mxu0 0.0
          %533 = vmatprep.subr.mxu0 0.0
          %534 = vmatpush1.msra.mxu0 0.0
          %535 = vmatprep.subr.mxu0 0.0
          %536 = vmatpush1.msra.mxu0 0.0
          %537 = vmatprep.subr.mxu0 0.0
          %538 = vmatpush1.msra.mxu0 0.0
          %539 = vmatprep.subr.mxu0 0.0
          %540 = vmatpush1.msra.mxu0 0.0
          %541 = vmatprep.subr.mxu0 0.0
          %542 = vmatpush1.msra.mxu0 0.0
          %543 = vmatprep.subr.mxu0 0.0
          %544 = vmatpush1.msra.mxu0 0.0
          %545 = vmatprep.subr.mxu0 0.0
          %546 = vmatpush1.msra.mxu0 0.0
          %547 = vmatprep.mubr.f32.mxu0 0.0
          %548 = vmatmul.mubr.f32.gmra.mrb[0].mxu0 %v400
          %v549 = vpop.f32.mrb[0].mxu0
          %v550 = vadd.f32 %v481, %v549
          %v551 = vpop.f32.mrb[0].mxu0
          %552 = vdwg.mxu0
          %vm553 = vcmask 64512
          %554 = vst.msk [vmem:[#allocation2] sm:$0xff] %vm553, %v469
          %555 = vst.msk [vmem:[#allocation3] sm:$0xff] %vm553, %v550
          %s556 = scalar_lea.vmem %s3, 32
          %v557 = vld [vmem:[%s556] sm:$0xff]
          %v558 = vld [vmem:[%s556 + $0x8] sm:$0xff]
          %v559 = vld [vmem:[%s556 + $0x10] sm:$0xff]
          %v560 = vld [vmem:[%s556 + $0x18] sm:$0xff]
          %s561 = scalar_lea.vmem %s4, 1
          %v562 = vld [vmem:[%s561] sm:$0x1]
          %v564 = vlaneseq
          %v565 = vshrl.u32 %v564, 7
          %v566 = vsub.s32 0, %v565
          %v567 = vrot.slane %v562, %v566
          %569 = vmatprep.subr.mxu0 0.0
          %570 = vmatpush1.msra.mxu0 %v557
          %571 = vmatprep.subr.mxu0 0.0
          %572 = vmatpush1.msra.mxu0 %v558
          %573 = vmatprep.subr.mxu0 0.0
          %574 = vmatpush1.msra.mxu0 %v559
          %575 = vmatprep.subr.mxu0 0.0
          %576 = vmatpush1.msra.mxu0 %v560
          %577 = vmatprep.subr.mxu0 0.0
          %578 = vmatpush1.msra.mxu0 0.0
          %579 = vmatprep.subr.mxu0 0.0
          %580 = vmatpush1.msra.mxu0 0.0
          %581 = vmatprep.subr.mxu0 0.0
          %582 = vmatpush1.msra.mxu0 0.0
          %583 = vmatprep.subr.mxu0 0.0
          %584 = vmatpush1.msra.mxu0 0.0
          %585 = vmatprep.subr.mxu0 0.0
          %586 = vmatpush1.msra.mxu0 0.0
          %587 = vmatprep.subr.mxu0 0.0
          %588 = vmatpush1.msra.mxu0 0.0
          %589 = vmatprep.subr.mxu0 0.0
          %590 = vmatpush1.msra.mxu0 0.0
          %591 = vmatprep.subr.mxu0 0.0
          %592 = vmatpush1.msra.mxu0 0.0
          %593 = vmatprep.subr.mxu0 0.0
          %594 = vmatpush1.msra.mxu0 0.0
          %595 = vmatprep.subr.mxu0 0.0
          %596 = vmatpush1.msra.mxu0 0.0
          %597 = vmatprep.subr.mxu0 0.0
          %598 = vmatpush1.msra.mxu0 0.0
          %599 = vmatprep.subr.mxu0 0.0
          %600 = vmatpush1.msra.mxu0 0.0
          %601 = vmatprep.subr.mxu0 0.0
          %602 = vmatpush1.msra.mxu0 0.0
          %603 = vmatprep.subr.mxu0 0.0
          %604 = vmatpush1.msra.mxu0 0.0
          %605 = vmatprep.subr.mxu0 0.0
          %606 = vmatpush1.msra.mxu0 0.0
          %607 = vmatprep.subr.mxu0 0.0
          %608 = vmatpush1.msra.mxu0 0.0
          %609 = vmatprep.subr.mxu0 0.0
          %610 = vmatpush1.msra.mxu0 0.0
          %611 = vmatprep.subr.mxu0 0.0
          %612 = vmatpush1.msra.mxu0 0.0
          %613 = vmatprep.subr.mxu0 0.0
          %614 = vmatpush1.msra.mxu0 0.0
          %615 = vmatprep.subr.mxu0 0.0
          %616 = vmatpush1.msra.mxu0 0.0
          %617 = vmatprep.subr.mxu0 0.0
          %618 = vmatpush1.msra.mxu0 0.0
          %619 = vmatprep.subr.mxu0 0.0
          %620 = vmatpush1.msra.mxu0 0.0
          %621 = vmatprep.subr.mxu0 0.0
          %622 = vmatpush1.msra.mxu0 0.0
          %623 = vmatprep.subr.mxu0 0.0
          %624 = vmatpush1.msra.mxu0 0.0
          %625 = vmatprep.subr.mxu0 0.0
          %626 = vmatpush1.msra.mxu0 0.0
          %627 = vmatprep.subr.mxu0 0.0
          %628 = vmatpush1.msra.mxu0 0.0
          %629 = vmatprep.subr.mxu0 0.0
          %630 = vmatpush1.msra.mxu0 0.0
          %631 = vmatprep.subr.mxu0 0.0
          %632 = vmatpush1.msra.mxu0 0.0
          %633 = vmatprep.mubr.f32.mxu0 0.0
          %634 = vmatmul.mubr.f32.gmra.mrb[0].mxu0 %v400
          %v635 = vpop.f32.mrb[0].mxu0
          %v636 = vadd.f32 %v567, %v635
          %v637 = vpop.f32.mrb[0].mxu0
          %638 = vdwg.mxu0
          %s639 = scalar_lea.vmem %s5, 32
          %v640 = vld [vmem:[%s639] sm:$0xff]
          %v641 = vld [vmem:[%s639 + $0x8] sm:$0xff]
          %v642 = vld [vmem:[%s639 + $0x10] sm:$0xff]
          %v643 = vld [vmem:[%s639 + $0x18] sm:$0xff]
          %s644 = scalar_lea.vmem %s6, 1
          %v645 = vld [vmem:[%s644] sm:$0x1]
          %v647 = vlaneseq
          %v648 = vshrl.u32 %v647, 7
          %v649 = vsub.s32 0, %v648
          %v650 = vrot.slane %v645, %v649
          %652 = vmatprep.subr.mxu0 0.0
          %653 = vmatpush1.msra.mxu0 %v640
          %654 = vmatprep.subr.mxu0 0.0
          %655 = vmatpush1.msra.mxu0 %v641
          %656 = vmatprep.subr.mxu0 0.0
          %657 = vmatpush1.msra.mxu0 %v642
          %658 = vmatprep.subr.mxu0 0.0
          %659 = vmatpush1.msra.mxu0 %v643
          %660 = vmatprep.subr.mxu0 0.0
          %661 = vmatpush1.msra.mxu0 0.0
          %662 = vmatprep.subr.mxu0 0.0
          %663 = vmatpush1.msra.mxu0 0.0
          %664 = vmatprep.subr.mxu0 0.0
          %665 = vmatpush1.msra.mxu0 0.0
          %666 = vmatprep.subr.mxu0 0.0
          %667 = vmatpush1.msra.mxu0 0.0
          %668 = vmatprep.subr.mxu0 0.0
          %669 = vmatpush1.msra.mxu0 0.0
          %670 = vmatprep.subr.mxu0 0.0
          %671 = vmatpush1.msra.mxu0 0.0
          %672 = vmatprep.subr.mxu0 0.0
          %673 = vmatpush1.msra.mxu0 0.0
          %674 = vmatprep.subr.mxu0 0.0
          %675 = vmatpush1.msra.mxu0 0.0
          %676 = vmatprep.subr.mxu0 0.0
          %677 = vmatpush1.msra.mxu0 0.0
          %678 = vmatprep.subr.mxu0 0.0
          %679 = vmatpush1.msra.mxu0 0.0
          %680 = vmatprep.subr.mxu0 0.0
          %681 = vmatpush1.msra.mxu0 0.0
          %682 = vmatprep.subr.mxu0 0.0
          %683 = vmatpush1.msra.mxu0 0.0
          %684 = vmatprep.subr.mxu0 0.0
          %685 = vmatpush1.msra.mxu0 0.0
          %686 = vmatprep.subr.mxu0 0.0
          %687 = vmatpush1.msra.mxu0 0.0
          %688 = vmatprep.subr.mxu0 0.0
          %689 = vmatpush1.msra.mxu0 0.0
          %690 = vmatprep.subr.mxu0 0.0
          %691 = vmatpush1.msra.mxu0 0.0
          %692 = vmatprep.subr.mxu0 0.0
          %693 = vmatpush1.msra.mxu0 0.0
          %694 = vmatprep.subr.mxu0 0.0
          %695 = vmatpush1.msra.mxu0 0.0
          %696 = vmatprep.subr.mxu0 0.0
          %697 = vmatpush1.msra.mxu0 0.0
          %698 = vmatprep.subr.mxu0 0.0
          %699 = vmatpush1.msra.mxu0 0.0
          %700 = vmatprep.subr.mxu0 0.0
          %701 = vmatpush1.msra.mxu0 0.0
          %702 = vmatprep.subr.mxu0 0.0
          %703 = vmatpush1.msra.mxu0 0.0
          %704 = vmatprep.subr.mxu0 0.0
          %705 = vmatpush1.msra.mxu0 0.0
          %706 = vmatprep.subr.mxu0 0.0
          %707 = vmatpush1.msra.mxu0 0.0
          %708 = vmatprep.subr.mxu0 0.0
          %709 = vmatpush1.msra.mxu0 0.0
          %710 = vmatprep.subr.mxu0 0.0
          %711 = vmatpush1.msra.mxu0 0.0
          %712 = vmatprep.subr.mxu0 0.0
          %713 = vmatpush1.msra.mxu0 0.0
          %714 = vmatprep.subr.mxu0 0.0
          %715 = vmatpush1.msra.mxu0 0.0
          %716 = vmatprep.mubr.f32.mxu0 0.0
          %717 = vmatmul.mubr.f32.gmra.mrb[0].mxu0 %v400
          %v718 = vpop.f32.mrb[0].mxu0
          %v719 = vadd.f32 %v650, %v718
          %v720 = vpop.f32.mrb[0].mxu0
          %721 = vdwg.mxu0
          %s722 = scalar_lea.vmem [#allocation2], 8
          %723 = vst.msk [vmem:[%s722] sm:$0xff] %vm553, %v636
          %s724 = scalar_lea.vmem [#allocation3], 8
          %725 = vst.msk [vmem:[%s724] sm:$0xff] %vm553, %v719
          %s726 = scalar_lea.vmem %s3, 64
          %v727 = vld [vmem:[%s726] sm:$0xff]
          %v728 = vld [vmem:[%s726 + $0x8] sm:$0xff]
          %v729 = vld [vmem:[%s726 + $0x10] sm:$0xff]
          %v730 = vld [vmem:[%s726 + $0x18] sm:$0xff]
          %s731 = scalar_lea.vmem %s4, 2
          %v732 = vld [vmem:[%s731] sm:$0x1]
          %v734 = vlaneseq
          %v735 = vshrl.u32 %v734, 7
          %v736 = vsub.s32 0, %v735
          %v737 = vrot.slane %v732, %v736
          %739 = vmatprep.subr.mxu0 0.0
          %740 = vmatpush1.msra.mxu0 %v727
          %741 = vmatprep.subr.mxu0 0.0
          %742 = vmatpush1.msra.mxu0 %v728
          %743 = vmatprep.subr.mxu0 0.0
          %744 = vmatpush1.msra.mxu0 %v729
          %745 = vmatprep.subr.mxu0 0.0
          %746 = vmatpush1.msra.mxu0 %v730
          %747 = vmatprep.subr.mxu0 0.0
          %748 = vmatpush1.msra.mxu0 0.0
          %749 = vmatprep.subr.mxu0 0.0
          %750 = vmatpush1.msra.mxu0 0.0
          %751 = vmatprep.subr.mxu0 0.0
          %752 = vmatpush1.msra.mxu0 0.0
          %753 = vmatprep.subr.mxu0 0.0
          %754 = vmatpush1.msra.mxu0 0.0
          %755 = vmatprep.subr.mxu0 0.0
          %756 = vmatpush1.msra.mxu0 0.0
          %757 = vmatprep.subr.mxu0 0.0
          %758 = vmatpush1.msra.mxu0 0.0
          %759 = vmatprep.subr.mxu0 0.0
          %760 = vmatpush1.msra.mxu0 0.0
          %761 = vmatprep.subr.mxu0 0.0
          %762 = vmatpush1.msra.mxu0 0.0
          %763 = vmatprep.subr.mxu0 0.0
          %764 = vmatpush1.msra.mxu0 0.0
          %765 = vmatprep.subr.mxu0 0.0
          %766 = vmatpush1.msra.mxu0 0.0
          %767 = vmatprep.subr.mxu0 0.0
          %768 = vmatpush1.msra.mxu0 0.0
          %769 = vmatprep.subr.mxu0 0.0
          %770 = vmatpush1.msra.mxu0 0.0
          %771 = vmatprep.subr.mxu0 0.0
          %772 = vmatpush1.msra.mxu0 0.0
          %773 = vmatprep.subr.mxu0 0.0
          %774 = vmatpush1.msra.mxu0 0.0
          %775 = vmatprep.subr.mxu0 0.0
          %776 = vmatpush1.msra.mxu0 0.0
          %777 = vmatprep.subr.mxu0 0.0
          %778 = vmatpush1.msra.mxu0 0.0
          %779 = vmatprep.subr.mxu0 0.0
          %780 = vmatpush1.msra.mxu0 0.0
          %781 = vmatprep.subr.mxu0 0.0
          %782 = vmatpush1.msra.mxu0 0.0
          %783 = vmatprep.subr.mxu0 0.0
          %784 = vmatpush1.msra.mxu0 0.0
          %785 = vmatprep.subr.mxu0 0.0
          %786 = vmatpush1.msra.mxu0 0.0
          %787 = vmatprep.subr.mxu0 0.0
          %788 = vmatpush1.msra.mxu0 0.0
          %789 = vmatprep.subr.mxu0 0.0
          %790 = vmatpush1.msra.mxu0 0.0
          %791 = vmatprep.subr.mxu0 0.0
          %792 = vmatpush1.msra.mxu0 0.0
          %793 = vmatprep.subr.mxu0 0.0
          %794 = vmatpush1.msra.mxu0 0.0
          %795 = vmatprep.subr.mxu0 0.0
          %796 = vmatpush1.msra.mxu0 0.0
          %797 = vmatprep.subr.mxu0 0.0
          %798 = vmatpush1.msra.mxu0 0.0
          %799 = vmatprep.subr.mxu0 0.0
          %800 = vmatpush1.msra.mxu0 0.0
          %801 = vmatprep.subr.mxu0 0.0
          %802 = vmatpush1.msra.mxu0 0.0
          %803 = vmatprep.mubr.f32.mxu0 0.0
          %804 = vmatmul.mubr.f32.gmra.mrb[0].mxu0 %v400
          %v805 = vpop.f32.mrb[0].mxu0
          %v806 = vadd.f32 %v737, %v805
          %v807 = vpop.f32.mrb[0].mxu0
          %808 = vdwg.mxu0
          %s809 = scalar_lea.vmem %s5, 64
          %v810 = vld [vmem:[%s809] sm:$0xff]
          %v811 = vld [vmem:[%s809 + $0x8] sm:$0xff]
          %v812 = vld [vmem:[%s809 + $0x10] sm:$0xff]
          %v813 = vld [vmem:[%s809 + $0x18] sm:$0xff]
          %s814 = scalar_lea.vmem %s6, 2
          %v815 = vld [vmem:[%s814] sm:$0x1]
          %v817 = vlaneseq
          %v818 = vshrl.u32 %v817, 7
          %v819 = vsub.s32 0, %v818
          %v820 = vrot.slane %v815, %v819
          %822 = vmatprep.subr.mxu0 0.0
          %823 = vmatpush1.msra.mxu0 %v810
          %824 = vmatprep.subr.mxu0 0.0
          %825 = vmatpush1.msra.mxu0 %v811
          %826 = vmatprep.subr.mxu0 0.0
          %827 = vmatpush1.msra.mxu0 %v812
          %828 = vmatprep.subr.mxu0 0.0
          %829 = vmatpush1.msra.mxu0 %v813
          %830 = vmatprep.subr.mxu0 0.0
          %831 = vmatpush1.msra.mxu0 0.0
          %832 = vmatprep.subr.mxu0 0.0
          %833 = vmatpush1.msra.mxu0 0.0
          %834 = vmatprep.subr.mxu0 0.0
          %835 = vmatpush1.msra.mxu0 0.0
          %836 = vmatprep.subr.mxu0 0.0
          %837 = vmatpush1.msra.mxu0 0.0
          %838 = vmatprep.subr.mxu0 0.0
          %839 = vmatpush1.msra.mxu0 0.0
          %840 = vmatprep.subr.mxu0 0.0
          %841 = vmatpush1.msra.mxu0 0.0
          %842 = vmatprep.subr.mxu0 0.0
          %843 = vmatpush1.msra.mxu0 0.0
          %844 = vmatprep.subr.mxu0 0.0
          %845 = vmatpush1.msra.mxu0 0.0
          %846 = vmatprep.subr.mxu0 0.0
          %847 = vmatpush1.msra.mxu0 0.0
          %848 = vmatprep.subr.mxu0 0.0
          %849 = vmatpush1.msra.mxu0 0.0
          %850 = vmatprep.subr.mxu0 0.0
          %851 = vmatpush1.msra.mxu0 0.0
          %852 = vmatprep.subr.mxu0 0.0
          %853 = vmatpush1.msra.mxu0 0.0
          %854 = vmatprep.subr.mxu0 0.0
          %855 = vmatpush1.msra.mxu0 0.0
          %856 = vmatprep.subr.mxu0 0.0
          %857 = vmatpush1.msra.mxu0 0.0
          %858 = vmatprep.subr.mxu0 0.0
          %859 = vmatpush1.msra.mxu0 0.0
          %860 = vmatprep.subr.mxu0 0.0
          %861 = vmatpush1.msra.mxu0 0.0
          %862 = vmatprep.subr.mxu0 0.0
          %863 = vmatpush1.msra.mxu0 0.0
          %864 = vmatprep.subr.mxu0 0.0
          %865 = vmatpush1.msra.mxu0 0.0
          %866 = vmatprep.subr.mxu0 0.0
          %867 = vmatpush1.msra.mxu0 0.0
          %868 = vmatprep.subr.mxu0 0.0
          %869 = vmatpush1.msra.mxu0 0.0
          %870 = vmatprep.subr.mxu0 0.0
          %871 = vmatpush1.msra.mxu0 0.0
          %872 = vmatprep.subr.mxu0 0.0
          %873 = vmatpush1.msra.mxu0 0.0
          %874 = vmatprep.subr.mxu0 0.0
          %875 = vmatpush1.msra.mxu0 0.0
          %876 = vmatprep.subr.mxu0 0.0
          %877 = vmatpush1.msra.mxu0 0.0
          %878 = vmatprep.subr.mxu0 0.0
          %879 = vmatpush1.msra.mxu0 0.0
          %880 = vmatprep.subr.mxu0 0.0
          %881 = vmatpush1.msra.mxu0 0.0
          %882 = vmatprep.subr.mxu0 0.0
          %883 = vmatpush1.msra.mxu0 0.0
          %884 = vmatprep.subr.mxu0 0.0
          %885 = vmatpush1.msra.mxu0 0.0
          %886 = vmatprep.mubr.f32.mxu0 0.0
          %887 = vmatmul.mubr.f32.gmra.mrb[0].mxu0 %v400
          %v888 = vpop.f32.mrb[0].mxu0
          %v889 = vadd.f32 %v820, %v888
          %v890 = vpop.f32.mrb[0].mxu0
          %891 = vdwg.mxu0
          %s892 = scalar_lea.vmem [#allocation2], 16
          %893 = vst.msk [vmem:[%s892] sm:$0xff] %vm553, %v806
          %s894 = scalar_lea.vmem [#allocation3], 16
          %895 = vst.msk [vmem:[%s894] sm:$0xff] %vm553, %v889
          %s896 = scalar_lea.vmem %s3, 96
          %v897 = vld [vmem:[%s896] sm:$0xff]
          %v898 = vld [vmem:[%s896 + $0x8] sm:$0xff]
          %v899 = vld [vmem:[%s896 + $0x10] sm:$0xff]
          %v900 = vld [vmem:[%s896 + $0x18] sm:$0xff]
          %s901 = scalar_lea.vmem %s4, 3
          %v902 = vld [vmem:[%s901] sm:$0x1]
          %v904 = vlaneseq
          %v905 = vshrl.u32 %v904, 7
          %v906 = vsub.s32 0, %v905
          %v907 = vrot.slane %v902, %v906
          %909 = vmatprep.subr.mxu0 0.0
          %910 = vmatpush1.msra.mxu0 %v897
          %911 = vmatprep.subr.mxu0 0.0
          %912 = vmatpush1.msra.mxu0 %v898
          %913 = vmatprep.subr.mxu0 0.0
          %914 = vmatpush1.msra.mxu0 %v899
          %915 = vmatprep.subr.mxu0 0.0
          %916 = vmatpush1.msra.mxu0 %v900
          %917 = vmatprep.subr.mxu0 0.0
          %918 = vmatpush1.msra.mxu0 0.0
          %919 = vmatprep.subr.mxu0 0.0
          %920 = vmatpush1.msra.mxu0 0.0
          %921 = vmatprep.subr.mxu0 0.0
          %922 = vmatpush1.msra.mxu0 0.0
          %923 = vmatprep.subr.mxu0 0.0
          %924 = vmatpush1.msra.mxu0 0.0
          %925 = vmatprep.subr.mxu0 0.0
          %926 = vmatpush1.msra.mxu0 0.0
          %927 = vmatprep.subr.mxu0 0.0
          %928 = vmatpush1.msra.mxu0 0.0
          %929 = vmatprep.subr.mxu0 0.0
          %930 = vmatpush1.msra.mxu0 0.0
          %931 = vmatprep.subr.mxu0 0.0
          %932 = vmatpush1.msra.mxu0 0.0
          %933 = vmatprep.subr.mxu0 0.0
          %934 = vmatpush1.msra.mxu0 0.0
          %935 = vmatprep.subr.mxu0 0.0
          %936 = vmatpush1.msra.mxu0 0.0
          %937 = vmatprep.subr.mxu0 0.0
          %938 = vmatpush1.msra.mxu0 0.0
          %939 = vmatprep.subr.mxu0 0.0
          %940 = vmatpush1.msra.mxu0 0.0
          %941 = vmatprep.subr.mxu0 0.0
          %942 = vmatpush1.msra.mxu0 0.0
          %943 = vmatprep.subr.mxu0 0.0
          %944 = vmatpush1.msra.mxu0 0.0
          %945 = vmatprep.subr.mxu0 0.0
          %946 = vmatpush1.msra.mxu0 0.0
          %947 = vmatprep.subr.mxu0 0.0
          %948 = vmatpush1.msra.mxu0 0.0
          %949 = vmatprep.subr.mxu0 0.0
          %950 = vmatpush1.msra.mxu0 0.0
          %951 = vmatprep.subr.mxu0 0.0
          %952 = vmatpush1.msra.mxu0 0.0
          %953 = vmatprep.subr.mxu0 0.0
          %954 = vmatpush1.msra.mxu0 0.0
          %955 = vmatprep.subr.mxu0 0.0
          %956 = vmatpush1.msra.mxu0 0.0
          %957 = vmatprep.subr.mxu0 0.0
          %958 = vmatpush1.msra.mxu0 0.0
          %959 = vmatprep.subr.mxu0 0.0
          %960 = vmatpush1.msra.mxu0 0.0
          %961 = vmatprep.subr.mxu0 0.0
          %962 = vmatpush1.msra.mxu0 0.0
          %963 = vmatprep.subr.mxu0 0.0
          %964 = vmatpush1.msra.mxu0 0.0
          %965 = vmatprep.subr.mxu0 0.0
          %966 = vmatpush1.msra.mxu0 0.0
          %967 = vmatprep.subr.mxu0 0.0
          %968 = vmatpush1.msra.mxu0 0.0
          %969 = vmatprep.subr.mxu0 0.0
          %970 = vmatpush1.msra.mxu0 0.0
          %971 = vmatprep.subr.mxu0 0.0
          %972 = vmatpush1.msra.mxu0 0.0
          %973 = vmatprep.mubr.f32.mxu0 0.0
          %974 = vmatmul.mubr.f32.gmra.mrb[0].mxu0 %v400
          %v975 = vpop.f32.mrb[0].mxu0
          %v976 = vadd.f32 %v907, %v975
          %v977 = vpop.f32.mrb[0].mxu0
          %978 = vdwg.mxu0
          %s979 = scalar_lea.vmem %s5, 96
          %v980 = vld [vmem:[%s979] sm:$0xff]
          %v981 = vld [vmem:[%s979 + $0x8] sm:$0xff]
          %v982 = vld [vmem:[%s979 + $0x10] sm:$0xff]
          %v983 = vld [vmem:[%s979 + $0x18] sm:$0xff]
          %s984 = scalar_lea.vmem %s6, 3
          %v985 = vld [vmem:[%s984] sm:$0x1]
          %v987 = vlaneseq
          %v988 = vshrl.u32 %v987, 7
          %v989 = vsub.s32 0, %v988
          %v990 = vrot.slane %v985, %v989
          %992 = vmatprep.subr.mxu0 0.0
          %993 = vmatpush1.msra.mxu0 %v980
          %994 = vmatprep.subr.mxu0 0.0
          %995 = vmatpush1.msra.mxu0 %v981
          %996 = vmatprep.subr.mxu0 0.0
          %997 = vmatpush1.msra.mxu0 %v982
          %998 = vmatprep.subr.mxu0 0.0
          %999 = vmatpush1.msra.mxu0 %v983
          %1000 = vmatprep.subr.mxu0 0.0
          %1001 = vmatpush1.msra.mxu0 0.0
          %1002 = vmatprep.subr.mxu0 0.0
          %1003 = vmatpush1.msra.mxu0 0.0
          %1004 = vmatprep.subr.mxu0 0.0
          %1005 = vmatpush1.msra.mxu0 0.0
          %1006 = vmatprep.subr.mxu0 0.0
          %1007 = vmatpush1.msra.mxu0 0.0
          %1008 = vmatprep.subr.mxu0 0.0
          %1009 = vmatpush1.msra.mxu0 0.0
          %1010 = vmatprep.subr.mxu0 0.0
          %1011 = vmatpush1.msra.mxu0 0.0
          %1012 = vmatprep.subr.mxu0 0.0
          %1013 = vmatpush1.msra.mxu0 0.0
          %1014 = vmatprep.subr.mxu0 0.0
          %1015 = vmatpush1.msra.mxu0 0.0
          %1016 = vmatprep.subr.mxu0 0.0
          %1017 = vmatpush1.msra.mxu0 0.0
          %1018 = vmatprep.subr.mxu0 0.0
          %1019 = vmatpush1.msra.mxu0 0.0
          %1020 = vmatprep.subr.mxu0 0.0
          %1021 = vmatpush1.msra.mxu0 0.0
          %1022 = vmatprep.subr.mxu0 0.0
          %1023 = vmatpush1.msra.mxu0 0.0
          %1024 = vmatprep.subr.mxu0 0.0
          %1025 = vmatpush1.msra.mxu0 0.0
          %1026 = vmatprep.subr.mxu0 0.0
          %1027 = vmatpush1.msra.mxu0 0.0
          %1028 = vmatprep.subr.mxu0 0.0
          %1029 = vmatpush1.msra.mxu0 0.0
          %1030 = vmatprep.subr.mxu0 0.0
          %1031 = vmatpush1.msra.mxu0 0.0
          %1032 = vmatprep.subr.mxu0 0.0
          %1033 = vmatpush1.msra.mxu0 0.0
          %1034 = vmatprep.subr.mxu0 0.0
          %1035 = vmatpush1.msra.mxu0 0.0
          %1036 = vmatprep.subr.mxu0 0.0
          %1037 = vmatpush1.msra.mxu0 0.0
          %1038 = vmatprep.subr.mxu0 0.0
          %1039 = vmatpush1.msra.mxu0 0.0
          %1040 = vmatprep.subr.mxu0 0.0
          %1041 = vmatpush1.msra.mxu0 0.0
          %1042 = vmatprep.subr.mxu0 0.0
          %1043 = vmatpush1.msra.mxu0 0.0
          %1044 = vmatprep.subr.mxu0 0.0
          %1045 = vmatpush1.msra.mxu0 0.0
          %1046 = vmatprep.subr.mxu0 0.0
          %1047 = vmatpush1.msra.mxu0 0.0
          %1048 = vmatprep.subr.mxu0 0.0
          %1049 = vmatpush1.msra.mxu0 0.0
          %1050 = vmatprep.subr.mxu0 0.0
          %1051 = vmatpush1.msra.mxu0 0.0
          %1052 = vmatprep.subr.mxu0 0.0
          %1053 = vmatpush1.msra.mxu0 0.0
          %1054 = vmatprep.subr.mxu0 0.0
          %1055 = vmatpush1.msra.mxu0 0.0
          %1056 = vmatprep.mubr.f32.mxu0 0.0
          %1057 = vmatmul.mubr.f32.gmra.mrb[0].mxu0 %v400
          %v1058 = vpop.f32.mrb[0].mxu0
          %v1059 = vadd.f32 %v990, %v1058
          %v1060 = vpop.f32.mrb[0].mxu0
          %1061 = vdwg.mxu0
          %s1062 = scalar_lea.vmem [#allocation2], 24
          %1063 = vst.msk [vmem:[%s1062] sm:$0xff] %vm553, %v976
          %s1064 = scalar_lea.vmem [#allocation3], 24
          %1065 = vst.msk [vmem:[%s1064] sm:$0xff] %vm553, %v1059
        $region60: #{tpu_custom_call.1} parent=55 // pred_fallthru
          _
        %s1066 = smul.u32 %s33, 8
        %s1067 = scalar_lea.vmem %s381, %s1066
        %v1068 = vld [vmem:[%s1067] sm:$0xff]
        %v1069 = vld [vmem:[%s1] sm:$0xff]
        %v1070 = vld [vmem:[%s1 + $0x8] sm:$0xff]
        %v1071 = vld [vmem:[%s1 + $0x10] sm:$0xff]
        %v1072 = vld [vmem:[%s1 + $0x18] sm:$0xff]
        %v1073 = vld [vmem:[%s2] sm:$0x1]
        %v1075 = vlaneseq
        %v1076 = vshrl.u32 %v1075, 7
        %v1077 = vsub.s32 0, %v1076
        %v1078 = vrot.slane %v1073, %v1077
        %vm1080 = vcmask 261120
        %v1082 = vsel %vm1080, %v1068, 0
        %1084 = vmatprep.subr.mxu0 0.0
        %1085 = vmatpush1.msra.mxu0 %v1069
        %1086 = vmatprep.subr.mxu0 0.0
        %1087 = vmatpush1.msra.mxu0 %v1070
        %1088 = vmatprep.subr.mxu0 0.0
        %1089 = vmatpush1.msra.mxu0 %v1071
        %1090 = vmatprep.subr.mxu0 0.0
        %1091 = vmatpush1.msra.mxu0 %v1072
        %1092 = vmatprep.subr.mxu0 0.0
        %1093 = vmatpush1.msra.mxu0 0.0
        %1094 = vmatprep.subr.mxu0 0.0
        %1095 = vmatpush1.msra.mxu0 0.0
        %1096 = vmatprep.subr.mxu0 0.0
        %1097 = vmatpush1.msra.mxu0 0.0
        %1098 = vmatprep.subr.mxu0 0.0
        %1099 = vmatpush1.msra.mxu0 0.0
        %1100 = vmatprep.subr.mxu0 0.0
        %1101 = vmatpush1.msra.mxu0 0.0
        %1102 = vmatprep.subr.mxu0 0.0
        %1103 = vmatpush1.msra.mxu0 0.0
        %1104 = vmatprep.subr.mxu0 0.0
        %1105 = vmatpush1.msra.mxu0 0.0
        %1106 = vmatprep.subr.mxu0 0.0
        %1107 = vmatpush1.msra.mxu0 0.0
        %1108 = vmatprep.subr.mxu0 0.0
        %1109 = vmatpush1.msra.mxu0 0.0
        %1110 = vmatprep.subr.mxu0 0.0
        %1111 = vmatpush1.msra.mxu0 0.0
        %1112 = vmatprep.subr.mxu0 0.0
        %1113 = vmatpush1.msra.mxu0 0.0
        %1114 = vmatprep.subr.mxu0 0.0
        %1115 = vmatpush1.msra.mxu0 0.0
        %1116 = vmatprep.subr.mxu0 0.0
        %1117 = vmatpush1.msra.mxu0 0.0
        %1118 = vmatprep.subr.mxu0 0.0
        %1119 = vmatpush1.msra.mxu0 0.0
        %1120 = vmatprep.subr.mxu0 0.0
        %1121 = vmatpush1.msra.mxu0 0.0
        %1122 = vmatprep.subr.mxu0 0.0
        %1123 = vmatpush1.msra.mxu0 0.0
        %1124 = vmatprep.subr.mxu0 0.0
        %1125 = vmatpush1.msra.mxu0 0.0
        %1126 = vmatprep.subr.mxu0 0.0
        %1127 = vmatpush1.msra.mxu0 0.0
        %1128 = vmatprep.subr.mxu0 0.0
        %1129 = vmatpush1.msra.mxu0 0.0
        %1130 = vmatprep.subr.mxu0 0.0
        %1131 = vmatpush1.msra.mxu0 0.0
        %1132 = vmatprep.subr.mxu0 0.0
        %1133 = vmatpush1.msra.mxu0 0.0
        %1134 = vmatprep.subr.mxu0 0.0
        %1135 = vmatpush1.msra.mxu0 0.0
        %1136 = vmatprep.subr.mxu0 0.0
        %1137 = vmatpush1.msra.mxu0 0.0
        %1138 = vmatprep.subr.mxu0 0.0
        %1139 = vmatpush1.msra.mxu0 0.0
        %1140 = vmatprep.subr.mxu0 0.0
        %1141 = vmatpush1.msra.mxu0 0.0
        %1142 = vmatprep.subr.mxu0 0.0
        %1143 = vmatpush1.msra.mxu0 0.0
        %1144 = vmatprep.subr.mxu0 0.0
        %1145 = vmatpush1.msra.mxu0 0.0
        %1146 = vmatprep.subr.mxu0 0.0
        %1147 = vmatpush1.msra.mxu0 0.0
        %1148 = vmatprep.mubr.f32.mxu0 0.0
        %1149 = vmatmul.mubr.f32.gmra.mrb[0].mxu0 %v1082
        %v1150 = vpop.f32.mrb[0].mxu0
        %v1151 = vadd.f32 %v1078, %v1150
        %v1152 = vpop.f32.mrb[0].mxu0
        %1153 = vdwg.mxu0
        %v1154 = vld [vmem:[#allocation2] sm:$0xff]
        %vm1155 = vcmask 64512
        %v1157 = vsel %vm1155, %v1151, 0
        %v1160 = vsel %vm1155, %v1154, 0
        %1162 = vmatprep.subr.mxu0 0.0
        %1163 = vmatpush1.xpose.msra.mxu0 %v1160
        %1164 = vmatprep.subr.mxu0 0.0
        %1165 = vmatpush1.xpose.msra.mxu0 0.0
        %1166 = vmatprep.subr.mxu0 0.0
        %1167 = vmatpush1.xpose.msra.mxu0 0.0
        %1168 = vmatprep.subr.mxu0 0.0
        %1169 = vmatpush1.xpose.msra.mxu0 0.0
        %1170 = vmatprep.subr.mxu0 0.0
        %1171 = vmatpush1.xpose.msra.mxu0 0.0
        %1172 = vmatprep.subr.mxu0 0.0
        %1173 = vmatpush1.xpose.msra.mxu0 0.0
        %1174 = vmatprep.subr.mxu0 0.0
        %1175 = vmatpush1.xpose.msra.mxu0 0.0
        %1176 = vmatprep.subr.mxu0 0.0
        %1177 = vmatpush1.xpose.msra.mxu0 0.0
        %1178 = vmatprep.subr.mxu0 0.0
        %1179 = vmatpush1.xpose.msra.mxu0 0.0
        %1180 = vmatprep.subr.mxu0 0.0
        %1181 = vmatpush1.xpose.msra.mxu0 0.0
        %1182 = vmatprep.subr.mxu0 0.0
        %1183 = vmatpush1.xpose.msra.mxu0 0.0
        %1184 = vmatprep.subr.mxu0 0.0
        %1185 = vmatpush1.xpose.msra.mxu0 0.0
        %1186 = vmatprep.subr.mxu0 0.0
        %1187 = vmatpush1.xpose.msra.mxu0 0.0
        %1188 = vmatprep.subr.mxu0 0.0
        %1189 = vmatpush1.xpose.msra.mxu0 0.0
        %1190 = vmatprep.subr.mxu0 0.0
        %1191 = vmatpush1.xpose.msra.mxu0 0.0
        %1192 = vmatprep.subr.mxu0 0.0
        %1193 = vmatpush1.xpose.msra.mxu0 0.0
        %1194 = vmatprep.subr.mxu0 0.0
        %1195 = vmatpush1.xpose.msra.mxu0 0.0
        %1196 = vmatprep.subr.mxu0 0.0
        %1197 = vmatpush1.xpose.msra.mxu0 0.0
        %1198 = vmatprep.subr.mxu0 0.0
        %1199 = vmatpush1.xpose.msra.mxu0 0.0
        %1200 = vmatprep.subr.mxu0 0.0
        %1201 = vmatpush1.xpose.msra.mxu0 0.0
        %1202 = vmatprep.subr.mxu0 0.0
        %1203 = vmatpush1.xpose.msra.mxu0 0.0
        %1204 = vmatprep.subr.mxu0 0.0
        %1205 = vmatpush1.xpose.msra.mxu0 0.0
        %1206 = vmatprep.subr.mxu0 0.0
        %1207 = vmatpush1.xpose.msra.mxu0 0.0
        %1208 = vmatprep.subr.mxu0 0.0
        %1209 = vmatpush1.xpose.msra.mxu0 0.0
        %1210 = vmatprep.subr.mxu0 0.0
        %1211 = vmatpush1.xpose.msra.mxu0 0.0
        %1212 = vmatprep.subr.mxu0 0.0
        %1213 = vmatpush1.xpose.msra.mxu0 0.0
        %1214 = vmatprep.subr.mxu0 0.0
        %1215 = vmatpush1.xpose.msra.mxu0 0.0
        %1216 = vmatprep.subr.mxu0 0.0
        %1217 = vmatpush1.xpose.msra.mxu0 0.0
        %1218 = vmatprep.subr.mxu0 0.0
        %1219 = vmatpush1.xpose.msra.mxu0 0.0
        %1220 = vmatprep.subr.mxu0 0.0
        %1221 = vmatpush1.xpose.msra.mxu0 0.0
        %1222 = vmatprep.subr.mxu0 0.0
        %1223 = vmatpush1.xpose.msra.mxu0 0.0
        %1224 = vmatprep.subr.mxu0 0.0
        %1225 = vmatpush1.xpose.msra.mxu0 0.0
        %1226 = vmatprep.mubr.f32.mxu0 0.0
        %1227 = vmatmul.mubr.f32.gmra.mrb[0].mxu0 %v1157
        %v1228 = vpop.f32.mrb[0].mxu0
        %v1229 = vadd.f32 0.0, %v1228
        %v1230 = vpop.f32.mrb[0].mxu0
        %1231 = vdwg.mxu0
        %v1232 = vsel %vm1155, %v1229, -inf
        %1233 = vmax.xlane.f32.xlu0 %v1232
        %v1234 = vpop.xlane.xlu0 %1233
        %v1235 = vsub.f32 %v1229, %v1234
        %v1236 = vmul.f32 %v1235, 1.442695
        %v1237 = vpow.pop %v1236
        %v1238 = vsel %vm1155, %v1237, 0.0
        %1239 = vadd.xlane.f32.xlu0 %v1238
        %v1240 = vpop.xlane.xlu0 %1239
        %v1241 = vrcp.pop %v1240
        %v1242 = vmul.f32 %v1240, %v1241
        %v1243 = vsub.f32 2.0, %v1242
        %v1244 = vmul.f32 %v1241, %v1243
        %v1245 = vmul.f32 %v1237, %v1244
        %v1246 = vadd.f32 %v1245, 0.0
        %v1247 = vld [vmem:[#allocation3] sm:$0xff]
        %v1249 = vsel %vm1155, %v1245, 0
        %1251 = vmatprep.subr.mxu0 0.0
        %1252 = vmatpush1.msra.mxu0 %v1247
        %1253 = vmatprep.subr.mxu0 0.0
        %1254 = vmatpush1.msra.mxu0 0.0
        %1255 = vmatprep.subr.mxu0 0.0
        %1256 = vmatpush1.msra.mxu0 0.0
        %1257 = vmatprep.subr.mxu0 0.0
        %1258 = vmatpush1.msra.mxu0 0.0
        %1259 = vmatprep.subr.mxu0 0.0
        %1260 = vmatpush1.msra.mxu0 0.0
        %1261 = vmatprep.subr.mxu0 0.0
        %1262 = vmatpush1.msra.mxu0 0.0
        %1263 = vmatprep.subr.mxu0 0.0
        %1264 = vmatpush1.msra.mxu0 0.0
        %1265 = vmatprep.subr.mxu0 0.0
        %1266 = vmatpush1.msra.mxu0 0.0
        %1267 = vmatprep.subr.mxu0 0.0
        %1268 = vmatpush1.msra.mxu0 0.0
        %1269 = vmatprep.subr.mxu0 0.0
        %1270 = vmatpush1.msra.mxu0 0.0
        %1271 = vmatprep.subr.mxu0 0.0
        %1272 = vmatpush1.msra.mxu0 0.0
        %1273 = vmatprep.subr.mxu0 0.0
        %1274 = vmatpush1.msra.mxu0 0.0
        %1275 = vmatprep.subr.mxu0 0.0
        %1276 = vmatpush1.msra.mxu0 0.0
        %1277 = vmatprep.subr.mxu0 0.0
        %1278 = vmatpush1.msra.mxu0 0.0
        %1279 = vmatprep.subr.mxu0 0.0
        %1280 = vmatpush1.msra.mxu0 0.0
        %1281 = vmatprep.subr.mxu0 0.0
        %1282 = vmatpush1.msra.mxu0 0.0
        %1283 = vmatprep.subr.mxu0 0.0
        %1284 = vmatpush1.msra.mxu0 0.0
        %1285 = vmatprep.subr.mxu0 0.0
        %1286 = vmatpush1.msra.mxu0 0.0
        %1287 = vmatprep.subr.mxu0 0.0
        %1288 = vmatpush1.msra.mxu0 0.0
        %1289 = vmatprep.subr.mxu0 0.0
        %1290 = vmatpush1.msra.mxu0 0.0
        %1291 = vmatprep.subr.mxu0 0.0
        %1292 = vmatpush1.msra.mxu0 0.0
        %1293 = vmatprep.subr.mxu0 0.0
        %1294 = vmatpush1.msra.mxu0 0.0
        %1295 = vmatprep.subr.mxu0 0.0
        %1296 = vmatpush1.msra.mxu0 0.0
        %1297 = vmatprep.subr.mxu0 0.0
        %1298 = vmatpush1.msra.mxu0 0.0
        %1299 = vmatprep.subr.mxu0 0.0
        %1300 = vmatpush1.msra.mxu0 0.0
        %1301 = vmatprep.subr.mxu0 0.0
        %1302 = vmatpush1.msra.mxu0 0.0
        %1303 = vmatprep.subr.mxu0 0.0
        %1304 = vmatpush1.msra.mxu0 0.0
        %1305 = vmatprep.subr.mxu0 0.0
        %1306 = vmatpush1.msra.mxu0 0.0
        %1307 = vmatprep.subr.mxu0 0.0
        %1308 = vmatpush1.msra.mxu0 0.0
        %1309 = vmatprep.subr.mxu0 0.0
        %1310 = vmatpush1.msra.mxu0 0.0
        %1311 = vmatprep.subr.mxu0 0.0
        %1312 = vmatpush1.msra.mxu0 0.0
        %1313 = vmatprep.subr.mxu0 0.0
        %1314 = vmatpush1.msra.mxu0 0.0
        %1315 = vmatprep.mubr.f32.mxu0 0.0
        %1316 = vmatmul.mubr.f32.gmra.mrb[0].mxu0 %v1249
        %v1317 = vpop.f32.mrb[0].mxu0
        %v1318 = vadd.f32 0.0, %v1317
        %v1319 = vpop.f32.mrb[0].mxu0
        %1320 = vdwg.mxu0
        %v1321 = vld [vmem:[%s7] sm:$0xff]
        %s1322 = scalar_lea.vmem %s1, 32
        %v1323 = vld [vmem:[%s1322] sm:$0xff]
        %v1324 = vld [vmem:[%s1322 + $0x8] sm:$0xff]
        %v1325 = vld [vmem:[%s1322 + $0x10] sm:$0xff]
        %v1326 = vld [vmem:[%s1322 + $0x18] sm:$0xff]
        %s1327 = scalar_lea.vmem %s2, 1
        %v1328 = vld [vmem:[%s1327] sm:$0x1]
        %v1330 = vlaneseq
        %v1331 = vshrl.u32 %v1330, 7
        %v1332 = vsub.s32 0, %v1331
        %v1333 = vrot.slane %v1328, %v1332
        %1335 = vmatprep.subr.mxu0 0.0
        %1336 = vmatpush1.msra.mxu0 %v1323
        %1337 = vmatprep.subr.mxu0 0.0
        %1338 = vmatpush1.msra.mxu0 %v1324
        %1339 = vmatprep.subr.mxu0 0.0
        %1340 = vmatpush1.msra.mxu0 %v1325
        %1341 = vmatprep.subr.mxu0 0.0
        %1342 = vmatpush1.msra.mxu0 %v1326
        %1343 = vmatprep.subr.mxu0 0.0
        %1344 = vmatpush1.msra.mxu0 0.0
        %1345 = vmatprep.subr.mxu0 0.0
        %1346 = vmatpush1.msra.mxu0 0.0
        %1347 = vmatprep.subr.mxu0 0.0
        %1348 = vmatpush1.msra.mxu0 0.0
        %1349 = vmatprep.subr.mxu0 0.0
        %1350 = vmatpush1.msra.mxu0 0.0
        %1351 = vmatprep.subr.mxu0 0.0
        %1352 = vmatpush1.msra.mxu0 0.0
        %1353 = vmatprep.subr.mxu0 0.0
        %1354 = vmatpush1.msra.mxu0 0.0
        %1355 = vmatprep.subr.mxu0 0.0
        %1356 = vmatpush1.msra.mxu0 0.0
        %1357 = vmatprep.subr.mxu0 0.0
        %1358 = vmatpush1.msra.mxu0 0.0
        %1359 = vmatprep.subr.mxu0 0.0
        %1360 = vmatpush1.msra.mxu0 0.0
        %1361 = vmatprep.subr.mxu0 0.0
        %1362 = vmatpush1.msra.mxu0 0.0
        %1363 = vmatprep.subr.mxu0 0.0
        %1364 = vmatpush1.msra.mxu0 0.0
        %1365 = vmatprep.subr.mxu0 0.0
        %1366 = vmatpush1.msra.mxu0 0.0
        %1367 = vmatprep.subr.mxu0 0.0
        %1368 = vmatpush1.msra.mxu0 0.0
        %1369 = vmatprep.subr.mxu0 0.0
        %1370 = vmatpush1.msra.mxu0 0.0
        %1371 = vmatprep.subr.mxu0 0.0
        %1372 = vmatpush1.msra.mxu0 0.0
        %1373 = vmatprep.subr.mxu0 0.0
        %1374 = vmatpush1.msra.mxu0 0.0
        %1375 = vmatprep.subr.mxu0 0.0
        %1376 = vmatpush1.msra.mxu0 0.0
        %1377 = vmatprep.subr.mxu0 0.0
        %1378 = vmatpush1.msra.mxu0 0.0
        %1379 = vmatprep.subr.mxu0 0.0
        %1380 = vmatpush1.msra.mxu0 0.0
        %1381 = vmatprep.subr.mxu0 0.0
        %1382 = vmatpush1.msra.mxu0 0.0
        %1383 = vmatprep.subr.mxu0 0.0
        %1384 = vmatpush1.msra.mxu0 0.0
        %1385 = vmatprep.subr.mxu0 0.0
        %1386 = vmatpush1.msra.mxu0 0.0
        %1387 = vmatprep.subr.mxu0 0.0
        %1388 = vmatpush1.msra.mxu0 0.0
        %1389 = vmatprep.subr.mxu0 0.0
        %1390 = vmatpush1.msra.mxu0 0.0
        %1391 = vmatprep.subr.mxu0 0.0
        %1392 = vmatpush1.msra.mxu0 0.0
        %1393 = vmatprep.subr.mxu0 0.0
        %1394 = vmatpush1.msra.mxu0 0.0
        %1395 = vmatprep.subr.mxu0 0.0
        %1396 = vmatpush1.msra.mxu0 0.0
        %1397 = vmatprep.subr.mxu0 0.0
        %1398 = vmatpush1.msra.mxu0 0.0
        %1399 = vmatprep.mubr.f32.mxu0 0.0
        %1400 = vmatmul.mubr.f32.gmra.mrb[0].mxu0 %v1082
        %v1401 = vpop.f32.mrb[0].mxu0
        %v1402 = vadd.f32 %v1333, %v1401
        %v1403 = vpop.f32.mrb[0].mxu0
        %1404 = vdwg.mxu0
        %s1405 = scalar_lea.vmem [#allocation2], 8
        %v1406 = vld [vmem:[%s1405] sm:$0xff]
        %v1408 = vsel %vm1155, %v1402, 0
        %v1411 = vsel %vm1155, %v1406, 0
        %1413 = vmatprep.subr.mxu0 0.0
        %1414 = vmatpush1.xpose.msra.mxu0 %v1411
        %1415 = vmatprep.subr.mxu0 0.0
        %1416 = vmatpush1.xpose.msra.mxu0 0.0
        %1417 = vmatprep.subr.mxu0 0.0
        %1418 = vmatpush1.xpose.msra.mxu0 0.0
        %1419 = vmatprep.subr.mxu0 0.0
        %1420 = vmatpush1.xpose.msra.mxu0 0.0
        %1421 = vmatprep.subr.mxu0 0.0
        %1422 = vmatpush1.xpose.msra.mxu0 0.0
        %1423 = vmatprep.subr.mxu0 0.0
        %1424 = vmatpush1.xpose.msra.mxu0 0.0
        %1425 = vmatprep.subr.mxu0 0.0
        %1426 = vmatpush1.xpose.msra.mxu0 0.0
        %1427 = vmatprep.subr.mxu0 0.0
        %1428 = vmatpush1.xpose.msra.mxu0 0.0
        %1429 = vmatprep.subr.mxu0 0.0
        %1430 = vmatpush1.xpose.msra.mxu0 0.0
        %1431 = vmatprep.subr.mxu0 0.0
        %1432 = vmatpush1.xpose.msra.mxu0 0.0
        %1433 = vmatprep.subr.mxu0 0.0
        %1434 = vmatpush1.xpose.msra.mxu0 0.0
        %1435 = vmatprep.subr.mxu0 0.0
        %1436 = vmatpush1.xpose.msra.mxu0 0.0
        %1437 = vmatprep.subr.mxu0 0.0
        %1438 = vmatpush1.xpose.msra.mxu0 0.0
        %1439 = vmatprep.subr.mxu0 0.0
        %1440 = vmatpush1.xpose.msra.mxu0 0.0
        %1441 = vmatprep.subr.mxu0 0.0
        %1442 = vmatpush1.xpose.msra.mxu0 0.0
        %1443 = vmatprep.subr.mxu0 0.0
        %1444 = vmatpush1.xpose.msra.mxu0 0.0
        %1445 = vmatprep.subr.mxu0 0.0
        %1446 = vmatpush1.xpose.msra.mxu0 0.0
        %1447 = vmatprep.subr.mxu0 0.0
        %1448 = vmatpush1.xpose.msra.mxu0 0.0
        %1449 = vmatprep.subr.mxu0 0.0
        %1450 = vmatpush1.xpose.msra.mxu0 0.0
        %1451 = vmatprep.subr.mxu0 0.0
        %1452 = vmatpush1.xpose.msra.mxu0 0.0
        %1453 = vmatprep.subr.mxu0 0.0
        %1454 = vmatpush1.xpose.msra.mxu0 0.0
        %1455 = vmatprep.subr.mxu0 0.0
        %1456 = vmatpush1.xpose.msra.mxu0 0.0
        %1457 = vmatprep.subr.mxu0 0.0
        %1458 = vmatpush1.xpose.msra.mxu0 0.0
        %1459 = vmatprep.subr.mxu0 0.0
        %1460 = vmatpush1.xpose.msra.mxu0 0.0
        %1461 = vmatprep.subr.mxu0 0.0
        %1462 = vmatpush1.xpose.msra.mxu0 0.0
        %1463 = vmatprep.subr.mxu0 0.0
        %1464 = vmatpush1.xpose.msra.mxu0 0.0
        %1465 = vmatprep.subr.mxu0 0.0
        %1466 = vmatpush1.xpose.msra.mxu0 0.0
        %1467 = vmatprep.subr.mxu0 0.0
        %1468 = vmatpush1.xpose.msra.mxu0 0.0
        %1469 = vmatprep.subr.mxu0 0.0
        %1470 = vmatpush1.xpose.msra.mxu0 0.0
        %1471 = vmatprep.subr.mxu0 0.0
        %1472 = vmatpush1.xpose.msra.mxu0 0.0
        %1473 = vmatprep.subr.mxu0 0.0
        %1474 = vmatpush1.xpose.msra.mxu0 0.0
        %1475 = vmatprep.subr.mxu0 0.0
        %1476 = vmatpush1.xpose.msra.mxu0 0.0
        %1477 = vmatprep.mubr.f32.mxu0 0.0
        %1478 = vmatmul.mubr.f32.gmra.mrb[0].mxu0 %v1408
        %v1479 = vpop.f32.mrb[0].mxu0
        %v1480 = vadd.f32 0.0, %v1479
        %v1481 = vpop.f32.mrb[0].mxu0
        %1482 = vdwg.mxu0
        %v1483 = vsel %vm1155, %v1480, -inf
        %1484 = vmax.xlane.f32.xlu0 %v1483
        %v1485 = vpop.xlane.xlu0 %1484
        %v1486 = vsub.f32 %v1480, %v1485
        %v1487 = vmul.f32 %v1486, 1.442695
        %v1488 = vpow.pop %v1487
        %v1489 = vsel %vm1155, %v1488, 0.0
        %1490 = vadd.xlane.f32.xlu0 %v1489
        %v1491 = vpop.xlane.xlu0 %1490
        %v1492 = vrcp.pop %v1491
        %v1493 = vmul.f32 %v1491, %v1492
        %v1494 = vsub.f32 2.0, %v1493
        %v1495 = vmul.f32 %v1492, %v1494
        %v1496 = vmul.f32 %v1488, %v1495
        %v1497 = vadd.f32 %v1246, %v1496
        %s1498 = scalar_lea.vmem [#allocation3], 8
        %v1499 = vld [vmem:[%s1498] sm:$0xff]
        %v1501 = vsel %vm1155, %v1496, 0
        %1503 = vmatprep.subr.mxu0 0.0
        %1504 = vmatpush1.msra.mxu0 %v1499
        %1505 = vmatprep.subr.mxu0 0.0
        %1506 = vmatpush1.msra.mxu0 0.0
        %1507 = vmatprep.subr.mxu0 0.0
        %1508 = vmatpush1.msra.mxu0 0.0
        %1509 = vmatprep.subr.mxu0 0.0
        %1510 = vmatpush1.msra.mxu0 0.0
        %1511 = vmatprep.subr.mxu0 0.0
        %1512 = vmatpush1.msra.mxu0 0.0
        %1513 = vmatprep.subr.mxu0 0.0
        %1514 = vmatpush1.msra.mxu0 0.0
        %1515 = vmatprep.subr.mxu0 0.0
        %1516 = vmatpush1.msra.mxu0 0.0
        %1517 = vmatprep.subr.mxu0 0.0
        %1518 = vmatpush1.msra.mxu0 0.0
        %1519 = vmatprep.subr.mxu0 0.0
        %1520 = vmatpush1.msra.mxu0 0.0
        %1521 = vmatprep.subr.mxu0 0.0
        %1522 = vmatpush1.msra.mxu0 0.0
        %1523 = vmatprep.subr.mxu0 0.0
        %1524 = vmatpush1.msra.mxu0 0.0
        %1525 = vmatprep.subr.mxu0 0.0
        %1526 = vmatpush1.msra.mxu0 0.0
        %1527 = vmatprep.subr.mxu0 0.0
        %1528 = vmatpush1.msra.mxu0 0.0
        %1529 = vmatprep.subr.mxu0 0.0
        %1530 = vmatpush1.msra.mxu0 0.0
        %1531 = vmatprep.subr.mxu0 0.0
        %1532 = vmatpush1.msra.mxu0 0.0
        %1533 = vmatprep.subr.mxu0 0.0
        %1534 = vmatpush1.msra.mxu0 0.0
        %1535 = vmatprep.subr.mxu0 0.0
        %1536 = vmatpush1.msra.mxu0 0.0
        %1537 = vmatprep.subr.mxu0 0.0
        %1538 = vmatpush1.msra.mxu0 0.0
        %1539 = vmatprep.subr.mxu0 0.0
        %1540 = vmatpush1.msra.mxu0 0.0
        %1541 = vmatprep.subr.mxu0 0.0
        %1542 = vmatpush1.msra.mxu0 0.0
        %1543 = vmatprep.subr.mxu0 0.0
        %1544 = vmatpush1.msra.mxu0 0.0
        %1545 = vmatprep.subr.mxu0 0.0
        %1546 = vmatpush1.msra.mxu0 0.0
        %1547 = vmatprep.subr.mxu0 0.0
        %1548 = vmatpush1.msra.mxu0 0.0
        %1549 = vmatprep.subr.mxu0 0.0
        %1550 = vmatpush1.msra.mxu0 0.0
        %1551 = vmatprep.subr.mxu0 0.0
        %1552 = vmatpush1.msra.mxu0 0.0
        %1553 = vmatprep.subr.mxu0 0.0
        %1554 = vmatpush1.msra.mxu0 0.0
        %1555 = vmatprep.subr.mxu0 0.0
        %1556 = vmatpush1.msra.mxu0 0.0
        %1557 = vmatprep.subr.mxu0 0.0
        %1558 = vmatpush1.msra.mxu0 0.0
        %1559 = vmatprep.subr.mxu0 0.0
        %1560 = vmatpush1.msra.mxu0 0.0
        %1561 = vmatprep.subr.mxu0 0.0
        %1562 = vmatpush1.msra.mxu0 0.0
        %1563 = vmatprep.subr.mxu0 0.0
        %1564 = vmatpush1.msra.mxu0 0.0
        %1565 = vmatprep.subr.mxu0 0.0
        %1566 = vmatpush1.msra.mxu0 0.0
        %1567 = vmatprep.mubr.f32.mxu0 0.0
        %1568 = vmatmul.mubr.f32.gmra.mrb[0].mxu0 %v1501
        %v1569 = vpop.f32.mrb[0].mxu0
        %v1570 = vadd.f32 0.0, %v1569
        %v1571 = vpop.f32.mrb[0].mxu0
        %1572 = vdwg.mxu0
        %s1573 = scalar_lea.vmem %s7, 8
        %v1574 = vld [vmem:[%s1573] sm:$0xff]
        %v1576 = vsel %vm1155, %v1570, 0
        %1578 = vmatprep.subr.mxu0 0.0
        %1579 = vmatpush1.msra.mxu0 %v1574
        %1580 = vmatprep.subr.mxu0 0.0
        %1581 = vmatpush1.msra.mxu0 0.0
        %1582 = vmatprep.subr.mxu0 0.0
        %1583 = vmatpush1.msra.mxu0 0.0
        %1584 = vmatprep.subr.mxu0 0.0
        %1585 = vmatpush1.msra.mxu0 0.0
        %1586 = vmatprep.subr.mxu0 0.0
        %1587 = vmatpush1.msra.mxu0 0.0
        %1588 = vmatprep.subr.mxu0 0.0
        %1589 = vmatpush1.msra.mxu0 0.0
        %1590 = vmatprep.subr.mxu0 0.0
        %1591 = vmatpush1.msra.mxu0 0.0
        %1592 = vmatprep.subr.mxu0 0.0
        %1593 = vmatpush1.msra.mxu0 0.0
        %1594 = vmatprep.subr.mxu0 0.0
        %1595 = vmatpush1.msra.mxu0 0.0
        %1596 = vmatprep.subr.mxu0 0.0
        %1597 = vmatpush1.msra.mxu0 0.0
        %1598 = vmatprep.subr.mxu0 0.0
        %1599 = vmatpush1.msra.mxu0 0.0
        %1600 = vmatprep.subr.mxu0 0.0
        %1601 = vmatpush1.msra.mxu0 0.0
        %1602 = vmatprep.subr.mxu0 0.0
        %1603 = vmatpush1.msra.mxu0 0.0
        %1604 = vmatprep.subr.mxu0 0.0
        %1605 = vmatpush1.msra.mxu0 0.0
        %1606 = vmatprep.subr.mxu0 0.0
        %1607 = vmatpush1.msra.mxu0 0.0
        %1608 = vmatprep.subr.mxu0 0.0
        %1609 = vmatpush1.msra.mxu0 0.0
        %1610 = vmatprep.subr.mxu0 0.0
        %1611 = vmatpush1.msra.mxu0 0.0
        %1612 = vmatprep.subr.mxu0 0.0
        %1613 = vmatpush1.msra.mxu0 0.0
        %1614 = vmatprep.subr.mxu0 0.0
        %1615 = vmatpush1.msra.mxu0 0.0
        %1616 = vmatprep.subr.mxu0 0.0
        %1617 = vmatpush1.msra.mxu0 0.0
        %1618 = vmatprep.subr.mxu0 0.0
        %1619 = vmatpush1.msra.mxu0 0.0
        %1620 = vmatprep.subr.mxu0 0.0
        %1621 = vmatpush1.msra.mxu0 0.0
        %1622 = vmatprep.subr.mxu0 0.0
        %1623 = vmatpush1.msra.mxu0 0.0
        %1624 = vmatprep.subr.mxu0 0.0
        %1625 = vmatpush1.msra.mxu0 0.0
        %1626 = vmatprep.subr.mxu0 0.0
        %1627 = vmatpush1.msra.mxu0 0.0
        %1628 = vmatprep.subr.mxu0 0.0
        %1629 = vmatpush1.msra.mxu0 0.0
        %1630 = vmatprep.subr.mxu0 0.0
        %1631 = vmatpush1.msra.mxu0 0.0
        %1632 = vmatprep.subr.mxu0 0.0
        %1633 = vmatpush1.msra.mxu0 0.0
        %1634 = vmatprep.subr.mxu0 0.0
        %1635 = vmatpush1.msra.mxu0 0.0
        %1636 = vmatprep.subr.mxu0 0.0
        %1637 = vmatpush1.msra.mxu0 0.0
        %1638 = vmatprep.subr.mxu0 0.0
        %1639 = vmatpush1.msra.mxu0 0.0
        %1640 = vmatprep.subr.mxu0 0.0
        %1641 = vmatpush1.msra.mxu0 0.0
        %1642 = vmatprep.mubr.f32.mxu0 0.0
        %1643 = vmatmul.mubr.f32.gmra.mrb[0].mxu0 %v1576
        %v1644 = vpop.f32.mrb[0].mxu0
        %v1645 = vadd.f32 0.0, %v1644
        %v1646 = vpop.f32.mrb[0].mxu0
        %1647 = vdwg.mxu0
        %v1649 = vsel %vm1155, %v1318, 0
        %1651 = vmatprep.subr.mxu0 0.0
        %1652 = vmatpush1.msra.mxu0 %v1321
        %1653 = vmatprep.subr.mxu0 0.0
        %1654 = vmatpush1.msra.mxu0 0.0
        %1655 = vmatprep.subr.mxu0 0.0
        %1656 = vmatpush1.msra.mxu0 0.0
        %1657 = vmatprep.subr.mxu0 0.0
        %1658 = vmatpush1.msra.mxu0 0.0
        %1659 = vmatprep.subr.mxu0 0.0
        %1660 = vmatpush1.msra.mxu0 0.0
        %1661 = vmatprep.subr.mxu0 0.0
        %1662 = vmatpush1.msra.mxu0 0.0
        %1663 = vmatprep.subr.mxu0 0.0
        %1664 = vmatpush1.msra.mxu0 0.0
        %1665 = vmatprep.subr.mxu0 0.0
        %1666 = vmatpush1.msra.mxu0 0.0
        %1667 = vmatprep.subr.mxu0 0.0
        %1668 = vmatpush1.msra.mxu0 0.0
        %1669 = vmatprep.subr.mxu0 0.0
        %1670 = vmatpush1.msra.mxu0 0.0
        %1671 = vmatprep.subr.mxu0 0.0
        %1672 = vmatpush1.msra.mxu0 0.0
        %1673 = vmatprep.subr.mxu0 0.0
        %1674 = vmatpush1.msra.mxu0 0.0
        %1675 = vmatprep.subr.mxu0 0.0
        %1676 = vmatpush1.msra.mxu0 0.0
        %1677 = vmatprep.subr.mxu0 0.0
        %1678 = vmatpush1.msra.mxu0 0.0
        %1679 = vmatprep.subr.mxu0 0.0
        %1680 = vmatpush1.msra.mxu0 0.0
        %1681 = vmatprep.subr.mxu0 0.0
        %1682 = vmatpush1.msra.mxu0 0.0
        %1683 = vmatprep.subr.mxu0 0.0
        %1684 = vmatpush1.msra.mxu0 0.0
        %1685 = vmatprep.subr.mxu0 0.0
        %1686 = vmatpush1.msra.mxu0 0.0
        %1687 = vmatprep.subr.mxu0 0.0
        %1688 = vmatpush1.msra.mxu0 0.0
        %1689 = vmatprep.subr.mxu0 0.0
        %1690 = vmatpush1.msra.mxu0 0.0
        %1691 = vmatprep.subr.mxu0 0.0
        %1692 = vmatpush1.msra.mxu0 0.0
        %1693 = vmatprep.subr.mxu0 0.0
        %1694 = vmatpush1.msra.mxu0 0.0
        %1695 = vmatprep.subr.mxu0 0.0
        %1696 = vmatpush1.msra.mxu0 0.0
        %1697 = vmatprep.subr.mxu0 0.0
        %1698 = vmatpush1.msra.mxu0 0.0
        %1699 = vmatprep.subr.mxu0 0.0
        %1700 = vmatpush1.msra.mxu0 0.0
        %1701 = vmatprep.subr.mxu0 0.0
        %1702 = vmatpush1.msra.mxu0 0.0
        %1703 = vmatprep.subr.mxu0 0.0
        %1704 = vmatpush1.msra.mxu0 0.0
        %1705 = vmatprep.subr.mxu0 0.0
        %1706 = vmatpush1.msra.mxu0 0.0
        %1707 = vmatprep.subr.mxu0 0.0
        %1708 = vmatpush1.msra.mxu0 0.0
        %1709 = vmatprep.subr.mxu0 0.0
        %1710 = vmatpush1.msra.mxu0 0.0
        %1711 = vmatprep.subr.mxu0 0.0
        %1712 = vmatpush1.msra.mxu0 0.0
        %1713 = vmatprep.subr.mxu0 0.0
        %1714 = vmatpush1.msra.mxu0 0.0
        %1715 = vmatprep.mubr.f32.mxu0 0.0
        %1716 = vmatmul.mubr.f32.gmra.mrb[0].mxu0 %v1649
        %v1717 = vpop.f32.mrb[0].mxu0
        %v1718 = vadd.f32 %v1645, %v1717
        %v1719 = vpop.f32.mrb[0].mxu0
        %1720 = vdwg.mxu0
        %s1721 = scalar_lea.vmem %s1, 64
        %v1722 = vld [vmem:[%s1721] sm:$0xff]
        %v1723 = vld [vmem:[%s1721 + $0x8] sm:$0xff]
        %v1724 = vld [vmem:[%s1721 + $0x10] sm:$0xff]
        %v1725 = vld [vmem:[%s1721 + $0x18] sm:$0xff]
        %s1726 = scalar_lea.vmem %s2, 2
        %v1727 = vld [vmem:[%s1726] sm:$0x1]
        %v1729 = vlaneseq
        %v1730 = vshrl.u32 %v1729, 7
        %v1731 = vsub.s32 0, %v1730
        %v1732 = vrot.slane %v1727, %v1731
        %1734 = vmatprep.subr.mxu0 0.0
        %1735 = vmatpush1.msra.mxu0 %v1722
        %1736 = vmatprep.subr.mxu0 0.0
        %1737 = vmatpush1.msra.mxu0 %v1723
        %1738 = vmatprep.subr.mxu0 0.0
        %1739 = vmatpush1.msra.mxu0 %v1724
        %1740 = vmatprep.subr.mxu0 0.0
        %1741 = vmatpush1.msra.mxu0 %v1725
        %1742 = vmatprep.subr.mxu0 0.0
        %1743 = vmatpush1.msra.mxu0 0.0
        %1744 = vmatprep.subr.mxu0 0.0
        %1745 = vmatpush1.msra.mxu0 0.0
        %1746 = vmatprep.subr.mxu0 0.0
        %1747 = vmatpush1.msra.mxu0 0.0
        %1748 = vmatprep.subr.mxu0 0.0
        %1749 = vmatpush1.msra.mxu0 0.0
        %1750 = vmatprep.subr.mxu0 0.0
        %1751 = vmatpush1.msra.mxu0 0.0
        %1752 = vmatprep.subr.mxu0 0.0
        %1753 = vmatpush1.msra.mxu0 0.0
        %1754 = vmatprep.subr.mxu0 0.0
        %1755 = vmatpush1.msra.mxu0 0.0
        %1756 = vmatprep.subr.mxu0 0.0
        %1757 = vmatpush1.msra.mxu0 0.0
        %1758 = vmatprep.subr.mxu0 0.0
        %1759 = vmatpush1.msra.mxu0 0.0
        %1760 = vmatprep.subr.mxu0 0.0
        %1761 = vmatpush1.msra.mxu0 0.0
        %1762 = vmatprep.subr.mxu0 0.0
        %1763 = vmatpush1.msra.mxu0 0.0
        %1764 = vmatprep.subr.mxu0 0.0
        %1765 = vmatpush1.msra.mxu0 0.0
        %1766 = vmatprep.subr.mxu0 0.0
        %1767 = vmatpush1.msra.mxu0 0.0
        %1768 = vmatprep.subr.mxu0 0.0
        %1769 = vmatpush1.msra.mxu0 0.0
        %1770 = vmatprep.subr.mxu0 0.0
        %1771 = vmatpush1.msra.mxu0 0.0
        %1772 = vmatprep.subr.mxu0 0.0
        %1773 = vmatpush1.msra.mxu0 0.0
        %1774 = vmatprep.subr.mxu0 0.0
        %1775 = vmatpush1.msra.mxu0 0.0
        %1776 = vmatprep.subr.mxu0 0.0
        %1777 = vmatpush1.msra.mxu0 0.0
        %1778 = vmatprep.subr.mxu0 0.0
        %1779 = vmatpush1.msra.mxu0 0.0
        %1780 = vmatprep.subr.mxu0 0.0
        %1781 = vmatpush1.msra.mxu0 0.0
        %1782 = vmatprep.subr.mxu0 0.0
        %1783 = vmatpush1.msra.mxu0 0.0
        %1784 = vmatprep.subr.mxu0 0.0
        %1785 = vmatpush1.msra.mxu0 0.0
        %1786 = vmatprep.subr.mxu0 0.0
        %1787 = vmatpush1.msra.mxu0 0.0
        %1788 = vmatprep.subr.mxu0 0.0
        %1789 = vmatpush1.msra.mxu0 0.0
        %1790 = vmatprep.subr.mxu0 0.0
        %1791 = vmatpush1.msra.mxu0 0.0
        %1792 = vmatprep.subr.mxu0 0.0
        %1793 = vmatpush1.msra.mxu0 0.0
        %1794 = vmatprep.subr.mxu0 0.0
        %1795 = vmatpush1.msra.mxu0 0.0
        %1796 = vmatprep.subr.mxu0 0.0
        %1797 = vmatpush1.msra.mxu0 0.0
        %1798 = vmatprep.mubr.f32.mxu0 0.0
        %1799 = vmatmul.mubr.f32.gmra.mrb[0].mxu0 %v1082
        %v1800 = vpop.f32.mrb[0].mxu0
        %v1801 = vadd.f32 %v1732, %v1800
        %v1802 = vpop.f32.mrb[0].mxu0
        %1803 = vdwg.mxu0
        %s1804 = scalar_lea.vmem [#allocation2], 16
        %v1805 = vld [vmem:[%s1804] sm:$0xff]
        %v1807 = vsel %vm1155, %v1801, 0
        %v1810 = vsel %vm1155, %v1805, 0
        %1812 = vmatprep.subr.mxu0 0.0
        %1813 = vmatpush1.xpose.msra.mxu0 %v1810
        %1814 = vmatprep.subr.mxu0 0.0
        %1815 = vmatpush1.xpose.msra.mxu0 0.0
        %1816 = vmatprep.subr.mxu0 0.0
        %1817 = vmatpush1.xpose.msra.mxu0 0.0
        %1818 = vmatprep.subr.mxu0 0.0
        %1819 = vmatpush1.xpose.msra.mxu0 0.0
        %1820 = vmatprep.subr.mxu0 0.0
        %1821 = vmatpush1.xpose.msra.mxu0 0.0
        %1822 = vmatprep.subr.mxu0 0.0
        %1823 = vmatpush1.xpose.msra.mxu0 0.0
        %1824 = vmatprep.subr.mxu0 0.0
        %1825 = vmatpush1.xpose.msra.mxu0 0.0
        %1826 = vmatprep.subr.mxu0 0.0
        %1827 = vmatpush1.xpose.msra.mxu0 0.0
        %1828 = vmatprep.subr.mxu0 0.0
        %1829 = vmatpush1.xpose.msra.mxu0 0.0
        %1830 = vmatprep.subr.mxu0 0.0
        %1831 = vmatpush1.xpose.msra.mxu0 0.0
        %1832 = vmatprep.subr.mxu0 0.0
        %1833 = vmatpush1.xpose.msra.mxu0 0.0
        %1834 = vmatprep.subr.mxu0 0.0
        %1835 = vmatpush1.xpose.msra.mxu0 0.0
        %1836 = vmatprep.subr.mxu0 0.0
        %1837 = vmatpush1.xpose.msra.mxu0 0.0
        %1838 = vmatprep.subr.mxu0 0.0
        %1839 = vmatpush1.xpose.msra.mxu0 0.0
        %1840 = vmatprep.subr.mxu0 0.0
        %1841 = vmatpush1.xpose.msra.mxu0 0.0
        %1842 = vmatprep.subr.mxu0 0.0
        %1843 = vmatpush1.xpose.msra.mxu0 0.0
        %1844 = vmatprep.subr.mxu0 0.0
        %1845 = vmatpush1.xpose.msra.mxu0 0.0
        %1846 = vmatprep.subr.mxu0 0.0
        %1847 = vmatpush1.xpose.msra.mxu0 0.0
        %1848 = vmatprep.subr.mxu0 0.0
        %1849 = vmatpush1.xpose.msra.mxu0 0.0
        %1850 = vmatprep.subr.mxu0 0.0
        %1851 = vmatpush1.xpose.msra.mxu0 0.0
        %1852 = vmatprep.subr.mxu0 0.0
        %1853 = vmatpush1.xpose.msra.mxu0 0.0
        %1854 = vmatprep.subr.mxu0 0.0
        %1855 = vmatpush1.xpose.msra.mxu0 0.0
        %1856 = vmatprep.subr.mxu0 0.0
        %1857 = vmatpush1.xpose.msra.mxu0 0.0
        %1858 = vmatprep.subr.mxu0 0.0
        %1859 = vmatpush1.xpose.msra.mxu0 0.0
        %1860 = vmatprep.subr.mxu0 0.0
        %1861 = vmatpush1.xpose.msra.mxu0 0.0
        %1862 = vmatprep.subr.mxu0 0.0
        %1863 = vmatpush1.xpose.msra.mxu0 0.0
        %1864 = vmatprep.subr.mxu0 0.0
        %1865 = vmatpush1.xpose.msra.mxu0 0.0
        %1866 = vmatprep.subr.mxu0 0.0
        %1867 = vmatpush1.xpose.msra.mxu0 0.0
        %1868 = vmatprep.subr.mxu0 0.0
        %1869 = vmatpush1.xpose.msra.mxu0 0.0
        %1870 = vmatprep.subr.mxu0 0.0
        %1871 = vmatpush1.xpose.msra.mxu0 0.0
        %1872 = vmatprep.subr.mxu0 0.0
        %1873 = vmatpush1.xpose.msra.mxu0 0.0
        %1874 = vmatprep.subr.mxu0 0.0
        %1875 = vmatpush1.xpose.msra.mxu0 0.0
        %1876 = vmatprep.mubr.f32.mxu0 0.0
        %1877 = vmatmul.mubr.f32.gmra.mrb[0].mxu0 %v1807
        %v1878 = vpop.f32.mrb[0].mxu0
        %v1879 = vadd.f32 0.0, %v1878
        %v1880 = vpop.f32.mrb[0].mxu0
        %1881 = vdwg.mxu0
        %v1882 = vsel %vm1155, %v1879, -inf
        %1883 = vmax.xlane.f32.xlu0 %v1882
        %v1884 = vpop.xlane.xlu0 %1883
        %v1885 = vsub.f32 %v1879, %v1884
        %v1886 = vmul.f32 %v1885, 1.442695
        %v1887 = vpow.pop %v1886
        %v1888 = vsel %vm1155, %v1887, 0.0
        %1889 = vadd.xlane.f32.xlu0 %v1888
        %v1890 = vpop.xlane.xlu0 %1889
        %v1891 = vrcp.pop %v1890
        %v1892 = vmul.f32 %v1890, %v1891
        %v1893 = vsub.f32 2.0, %v1892
        %v1894 = vmul.f32 %v1891, %v1893
        %v1895 = vmul.f32 %v1887, %v1894
        %v1896 = vadd.f32 %v1497, %v1895
        %s1897 = scalar_lea.vmem [#allocation3], 16
        %v1898 = vld [vmem:[%s1897] sm:$0xff]
        %v1900 = vsel %vm1155, %v1895, 0
        %1902 = vmatprep.subr.mxu0 0.0
        %1903 = vmatpush1.msra.mxu0 %v1898
        %1904 = vmatprep.subr.mxu0 0.0
        %1905 = vmatpush1.msra.mxu0 0.0
        %1906 = vmatprep.subr.mxu0 0.0
        %1907 = vmatpush1.msra.mxu0 0.0
        %1908 = vmatprep.subr.mxu0 0.0
        %1909 = vmatpush1.msra.mxu0 0.0
        %1910 = vmatprep.subr.mxu0 0.0
        %1911 = vmatpush1.msra.mxu0 0.0
        %1912 = vmatprep.subr.mxu0 0.0
        %1913 = vmatpush1.msra.mxu0 0.0
        %1914 = vmatprep.subr.mxu0 0.0
        %1915 = vmatpush1.msra.mxu0 0.0
        %1916 = vmatprep.subr.mxu0 0.0
        %1917 = vmatpush1.msra.mxu0 0.0
        %1918 = vmatprep.subr.mxu0 0.0
        %1919 = vmatpush1.msra.mxu0 0.0
        %1920 = vmatprep.subr.mxu0 0.0
        %1921 = vmatpush1.msra.mxu0 0.0
        %1922 = vmatprep.subr.mxu0 0.0
        %1923 = vmatpush1.msra.mxu0 0.0
        %1924 = vmatprep.subr.mxu0 0.0
        %1925 = vmatpush1.msra.mxu0 0.0
        %1926 = vmatprep.subr.mxu0 0.0
        %1927 = vmatpush1.msra.mxu0 0.0
        %1928 = vmatprep.subr.mxu0 0.0
        %1929 = vmatpush1.msra.mxu0 0.0
        %1930 = vmatprep.subr.mxu0 0.0
        %1931 = vmatpush1.msra.mxu0 0.0
        %1932 = vmatprep.subr.mxu0 0.0
        %1933 = vmatpush1.msra.mxu0 0.0
        %1934 = vmatprep.subr.mxu0 0.0
        %1935 = vmatpush1.msra.mxu0 0.0
        %1936 = vmatprep.subr.mxu0 0.0
        %1937 = vmatpush1.msra.mxu0 0.0
        %1938 = vmatprep.subr.mxu0 0.0
        %1939 = vmatpush1.msra.mxu0 0.0
        %1940 = vmatprep.subr.mxu0 0.0
        %1941 = vmatpush1.msra.mxu0 0.0
        %1942 = vmatprep.subr.mxu0 0.0
        %1943 = vmatpush1.msra.mxu0 0.0
        %1944 = vmatprep.subr.mxu0 0.0
        %1945 = vmatpush1.msra.mxu0 0.0
        %1946 = vmatprep.subr.mxu0 0.0
        %1947 = vmatpush1.msra.mxu0 0.0
        %1948 = vmatprep.subr.mxu0 0.0
        %1949 = vmatpush1.msra.mxu0 0.0
        %1950 = vmatprep.subr.mxu0 0.0
        %1951 = vmatpush1.msra.mxu0 0.0
        %1952 = vmatprep.subr.mxu0 0.0
        %1953 = vmatpush1.msra.mxu0 0.0
        %1954 = vmatprep.subr.mxu0 0.0
        %1955 = vmatpush1.msra.mxu0 0.0
        %1956 = vmatprep.subr.mxu0 0.0
        %1957 = vmatpush1.msra.mxu0 0.0
        %1958 = vmatprep.subr.mxu0 0.0
        %1959 = vmatpush1.msra.mxu0 0.0
        %1960 = vmatprep.subr.mxu0 0.0
        %1961 = vmatpush1.msra.mxu0 0.0
        %1962 = vmatprep.subr.mxu0 0.0
        %1963 = vmatpush1.msra.mxu0 0.0
        %1964 = vmatprep.subr.mxu0 0.0
        %1965 = vmatpush1.msra.mxu0 0.0
        %1966 = vmatprep.mubr.f32.mxu0 0.0
        %1967 = vmatmul.mubr.f32.gmra.mrb[0].mxu0 %v1900
        %v1968 = vpop.f32.mrb[0].mxu0
        %v1969 = vadd.f32 0.0, %v1968
        %v1970 = vpop.f32.mrb[0].mxu0
        %1971 = vdwg.mxu0
        %s1972 = scalar_lea.vmem %s7, 16
        %v1973 = vld [vmem:[%s1972] sm:$0xff]
        %v1975 = vsel %vm1155, %v1969, 0
        %1977 = vmatprep.subr.mxu0 0.0
        %1978 = vmatpush1.msra.mxu0 %v1973
        %1979 = vmatprep.subr.mxu0 0.0
        %1980 = vmatpush1.msra.mxu0 0.0
        %1981 = vmatprep.subr.mxu0 0.0
        %1982 = vmatpush1.msra.mxu0 0.0
        %1983 = vmatprep.subr.mxu0 0.0
        %1984 = vmatpush1.msra.mxu0 0.0
        %1985 = vmatprep.subr.mxu0 0.0
        %1986 = vmatpush1.msra.mxu0 0.0
        %1987 = vmatprep.subr.mxu0 0.0
        %1988 = vmatpush1.msra.mxu0 0.0
        %1989 = vmatprep.subr.mxu0 0.0
        %1990 = vmatpush1.msra.mxu0 0.0
        %1991 = vmatprep.subr.mxu0 0.0
        %1992 = vmatpush1.msra.mxu0 0.0
        %1993 = vmatprep.subr.mxu0 0.0
        %1994 = vmatpush1.msra.mxu0 0.0
        %1995 = vmatprep.subr.mxu0 0.0
        %1996 = vmatpush1.msra.mxu0 0.0
        %1997 = vmatprep.subr.mxu0 0.0
        %1998 = vmatpush1.msra.mxu0 0.0
        %1999 = vmatprep.subr.mxu0 0.0
        %2000 = vmatpush1.msra.mxu0 0.0
        %2001 = vmatprep.subr.mxu0 0.0
        %2002 = vmatpush1.msra.mxu0 0.0
        %2003 = vmatprep.subr.mxu0 0.0
        %2004 = vmatpush1.msra.mxu0 0.0
        %2005 = vmatprep.subr.mxu0 0.0
        %2006 = vmatpush1.msra.mxu0 0.0
        %2007 = vmatprep.subr.mxu0 0.0
        %2008 = vmatpush1.msra.mxu0 0.0
        %2009 = vmatprep.subr.mxu0 0.0
        %2010 = vmatpush1.msra.mxu0 0.0
        %2011 = vmatprep.subr.mxu0 0.0
        %2012 = vmatpush1.msra.mxu0 0.0
        %2013 = vmatprep.subr.mxu0 0.0
        %2014 = vmatpush1.msra.mxu0 0.0
        %2015 = vmatprep.subr.mxu0 0.0
        %2016 = vmatpush1.msra.mxu0 0.0
        %2017 = vmatprep.subr.mxu0 0.0
        %2018 = vmatpush1.msra.mxu0 0.0
        %2019 = vmatprep.subr.mxu0 0.0
        %2020 = vmatpush1.msra.mxu0 0.0
        %2021 = vmatprep.subr.mxu0 0.0
        %2022 = vmatpush1.msra.mxu0 0.0
        %2023 = vmatprep.subr.mxu0 0.0
        %2024 = vmatpush1.msra.mxu0 0.0
        %2025 = vmatprep.subr.mxu0 0.0
        %2026 = vmatpush1.msra.mxu0 0.0
        %2027 = vmatprep.subr.mxu0 0.0
        %2028 = vmatpush1.msra.mxu0 0.0
        %2029 = vmatprep.subr.mxu0 0.0
        %2030 = vmatpush1.msra.mxu0 0.0
        %2031 = vmatprep.subr.mxu0 0.0
        %2032 = vmatpush1.msra.mxu0 0.0
        %2033 = vmatprep.subr.mxu0 0.0
        %2034 = vmatpush1.msra.mxu0 0.0
        %2035 = vmatprep.subr.mxu0 0.0
        %2036 = vmatpush1.msra.mxu0 0.0
        %2037 = vmatprep.subr.mxu0 0.0
        %2038 = vmatpush1.msra.mxu0 0.0
        %2039 = vmatprep.subr.mxu0 0.0
        %2040 = vmatpush1.msra.mxu0 0.0
        %2041 = vmatprep.mubr.f32.mxu0 0.0
        %2042 = vmatmul.mubr.f32.gmra.mrb[0].mxu0 %v1975
        %v2043 = vpop.f32.mrb[0].mxu0
        %v2044 = vadd.f32 0.0, %v2043
        %v2045 = vpop.f32.mrb[0].mxu0
        %2046 = vdwg.mxu0
        %v2047 = vadd.f32 %v1718, %v2044
        %s2048 = scalar_lea.vmem %s1, 96
        %v2049 = vld [vmem:[%s2048] sm:$0xff]
        %v2050 = vld [vmem:[%s2048 + $0x8] sm:$0xff]
        %v2051 = vld [vmem:[%s2048 + $0x10] sm:$0xff]
        %v2052 = vld [vmem:[%s2048 + $0x18] sm:$0xff]
        %s2053 = scalar_lea.vmem %s2, 3
        %v2054 = vld [vmem:[%s2053] sm:$0x1]
        %v2056 = vlaneseq
        %v2057 = vshrl.u32 %v2056, 7
        %v2058 = vsub.s32 0, %v2057
        %v2059 = vrot.slane %v2054, %v2058
        %2061 = vmatprep.subr.mxu0 0.0
        %2062 = vmatpush1.msra.mxu0 %v2049
        %2063 = vmatprep.subr.mxu0 0.0
        %2064 = vmatpush1.msra.mxu0 %v2050
        %2065 = vmatprep.subr.mxu0 0.0
        %2066 = vmatpush1.msra.mxu0 %v2051
        %2067 = vmatprep.subr.mxu0 0.0
        %2068 = vmatpush1.msra.mxu0 %v2052
        %2069 = vmatprep.subr.mxu0 0.0
        %2070 = vmatpush1.msra.mxu0 0.0
        %2071 = vmatprep.subr.mxu0 0.0
        %2072 = vmatpush1.msra.mxu0 0.0
        %2073 = vmatprep.subr.mxu0 0.0
        %2074 = vmatpush1.msra.mxu0 0.0
        %2075 = vmatprep.subr.mxu0 0.0
        %2076 = vmatpush1.msra.mxu0 0.0
        %2077 = vmatprep.subr.mxu0 0.0
        %2078 = vmatpush1.msra.mxu0 0.0
        %2079 = vmatprep.subr.mxu0 0.0
        %2080 = vmatpush1.msra.mxu0 0.0
        %2081 = vmatprep.subr.mxu0 0.0
        %2082 = vmatpush1.msra.mxu0 0.0
        %2083 = vmatprep.subr.mxu0 0.0
        %2084 = vmatpush1.msra.mxu0 0.0
        %2085 = vmatprep.subr.mxu0 0.0
        %2086 = vmatpush1.msra.mxu0 0.0
        %2087 = vmatprep.subr.mxu0 0.0
        %2088 = vmatpush1.msra.mxu0 0.0
        %2089 = vmatprep.subr.mxu0 0.0
        %2090 = vmatpush1.msra.mxu0 0.0
        %2091 = vmatprep.subr.mxu0 0.0
        %2092 = vmatpush1.msra.mxu0 0.0
        %2093 = vmatprep.subr.mxu0 0.0
        %2094 = vmatpush1.msra.mxu0 0.0
        %2095 = vmatprep.subr.mxu0 0.0
        %2096 = vmatpush1.msra.mxu0 0.0
        %2097 = vmatprep.subr.mxu0 0.0
        %2098 = vmatpush1.msra.mxu0 0.0
        %2099 = vmatprep.subr.mxu0 0.0
        %2100 = vmatpush1.msra.mxu0 0.0
        %2101 = vmatprep.subr.mxu0 0.0
        %2102 = vmatpush1.msra.mxu0 0.0
        %2103 = vmatprep.subr.mxu0 0.0
        %2104 = vmatpush1.msra.mxu0 0.0
        %2105 = vmatprep.subr.mxu0 0.0
        %2106 = vmatpush1.msra.mxu0 0.0
        %2107 = vmatprep.subr.mxu0 0.0
        %2108 = vmatpush1.msra.mxu0 0.0
        %2109 = vmatprep.subr.mxu0 0.0
        %2110 = vmatpush1.msra.mxu0 0.0
        %2111 = vmatprep.subr.mxu0 0.0
        %2112 = vmatpush1.msra.mxu0 0.0
        %2113 = vmatprep.subr.mxu0 0.0
        %2114 = vmatpush1.msra.mxu0 0.0
        %2115 = vmatprep.subr.mxu0 0.0
        %2116 = vmatpush1.msra.mxu0 0.0
        %2117 = vmatprep.subr.mxu0 0.0
        %2118 = vmatpush1.msra.mxu0 0.0
        %2119 = vmatprep.subr.mxu0 0.0
        %2120 = vmatpush1.msra.mxu0 0.0
        %2121 = vmatprep.subr.mxu0 0.0
        %2122 = vmatpush1.msra.mxu0 0.0
        %2123 = vmatprep.subr.mxu0 0.0
        %2124 = vmatpush1.msra.mxu0 0.0
        %2125 = vmatprep.mubr.f32.mxu0 0.0
        %2126 = vmatmul.mubr.f32.gmra.mrb[0].mxu0 %v1082
        %v2127 = vpop.f32.mrb[0].mxu0
        %v2128 = vadd.f32 %v2059, %v2127
        %v2129 = vpop.f32.mrb[0].mxu0
        %2130 = vdwg.mxu0
        %s2131 = scalar_lea.vmem [#allocation2], 24
        %v2132 = vld [vmem:[%s2131] sm:$0xff]
        %v2134 = vsel %vm1155, %v2128, 0
        %v2137 = vsel %vm1155, %v2132, 0
        %2139 = vmatprep.subr.mxu0 0.0
        %2140 = vmatpush1.xpose.msra.mxu0 %v2137
        %2141 = vmatprep.subr.mxu0 0.0
        %2142 = vmatpush1.xpose.msra.mxu0 0.0
        %2143 = vmatprep.subr.mxu0 0.0
        %2144 = vmatpush1.xpose.msra.mxu0 0.0
        %2145 = vmatprep.subr.mxu0 0.0
        %2146 = vmatpush1.xpose.msra.mxu0 0.0
        %2147 = vmatprep.subr.mxu0 0.0
        %2148 = vmatpush1.xpose.msra.mxu0 0.0
        %2149 = vmatprep.subr.mxu0 0.0
        %2150 = vmatpush1.xpose.msra.mxu0 0.0
        %2151 = vmatprep.subr.mxu0 0.0
        %2152 = vmatpush1.xpose.msra.mxu0 0.0
        %2153 = vmatprep.subr.mxu0 0.0
        %2154 = vmatpush1.xpose.msra.mxu0 0.0
        %2155 = vmatprep.subr.mxu0 0.0
        %2156 = vmatpush1.xpose.msra.mxu0 0.0
        %2157 = vmatprep.subr.mxu0 0.0
        %2158 = vmatpush1.xpose.msra.mxu0 0.0
        %2159 = vmatprep.subr.mxu0 0.0
        %2160 = vmatpush1.xpose.msra.mxu0 0.0
        %2161 = vmatprep.subr.mxu0 0.0
        %2162 = vmatpush1.xpose.msra.mxu0 0.0
        %2163 = vmatprep.subr.mxu0 0.0
        %2164 = vmatpush1.xpose.msra.mxu0 0.0
        %2165 = vmatprep.subr.mxu0 0.0
        %2166 = vmatpush1.xpose.msra.mxu0 0.0
        %2167 = vmatprep.subr.mxu0 0.0
        %2168 = vmatpush1.xpose.msra.mxu0 0.0
        %2169 = vmatprep.subr.mxu0 0.0
        %2170 = vmatpush1.xpose.msra.mxu0 0.0
        %2171 = vmatprep.subr.mxu0 0.0
        %2172 = vmatpush1.xpose.msra.mxu0 0.0
        %2173 = vmatprep.subr.mxu0 0.0
        %2174 = vmatpush1.xpose.msra.mxu0 0.0
        %2175 = vmatprep.subr.mxu0 0.0
        %2176 = vmatpush1.xpose.msra.mxu0 0.0
        %2177 = vmatprep.subr.mxu0 0.0
        %2178 = vmatpush1.xpose.msra.mxu0 0.0
        %2179 = vmatprep.subr.mxu0 0.0
        %2180 = vmatpush1.xpose.msra.mxu0 0.0
        %2181 = vmatprep.subr.mxu0 0.0
        %2182 = vmatpush1.xpose.msra.mxu0 0.0
        %2183 = vmatprep.subr.mxu0 0.0
        %2184 = vmatpush1.xpose.msra.mxu0 0.0
        %2185 = vmatprep.subr.mxu0 0.0
        %2186 = vmatpush1.xpose.msra.mxu0 0.0
        %2187 = vmatprep.subr.mxu0 0.0
        %2188 = vmatpush1.xpose.msra.mxu0 0.0
        %2189 = vmatprep.subr.mxu0 0.0
        %2190 = vmatpush1.xpose.msra.mxu0 0.0
        %2191 = vmatprep.subr.mxu0 0.0
        %2192 = vmatpush1.xpose.msra.mxu0 0.0
        %2193 = vmatprep.subr.mxu0 0.0
        %2194 = vmatpush1.xpose.msra.mxu0 0.0
        %2195 = vmatprep.subr.mxu0 0.0
        %2196 = vmatpush1.xpose.msra.mxu0 0.0
        %2197 = vmatprep.subr.mxu0 0.0
        %2198 = vmatpush1.xpose.msra.mxu0 0.0
        %2199 = vmatprep.subr.mxu0 0.0
        %2200 = vmatpush1.xpose.msra.mxu0 0.0
        %2201 = vmatprep.subr.mxu0 0.0
        %2202 = vmatpush1.xpose.msra.mxu0 0.0
        %2203 = vmatprep.mubr.f32.mxu0 0.0
        %2204 = vmatmul.mubr.f32.gmra.mrb[0].mxu0 %v2134
        %v2205 = vpop.f32.mrb[0].mxu0
        %v2206 = vadd.f32 0.0, %v2205
        %v2207 = vpop.f32.mrb[0].mxu0
        %2208 = vdwg.mxu0
        %v2209 = vsel %vm1155, %v2206, -inf
        %2210 = vmax.xlane.f32.xlu0 %v2209
        %v2211 = vpop.xlane.xlu0 %2210
        %v2212 = vsub.f32 %v2206, %v2211
        %v2213 = vmul.f32 %v2212, 1.442695
        %v2214 = vpow.pop %v2213
        %v2215 = vsel %vm1155, %v2214, 0.0
        %2216 = vadd.xlane.f32.xlu0 %v2215
        %v2217 = vpop.xlane.xlu0 %2216
        %v2218 = vrcp.pop %v2217
        %v2219 = vmul.f32 %v2217, %v2218
        %v2220 = vsub.f32 2.0, %v2219
        %v2221 = vmul.f32 %v2218, %v2220
        %v2222 = vmul.f32 %v2214, %v2221
        %v2223 = vadd.f32 %v1896, %v2222
        %s2224 = scalar_lea.vmem [#allocation3], 24
        %v2225 = vld [vmem:[%s2224] sm:$0xff]
        %v2227 = vsel %vm1155, %v2222, 0
        %2229 = vmatprep.subr.mxu0 0.0
        %2230 = vmatpush1.msra.mxu0 %v2225
        %2231 = vmatprep.subr.mxu0 0.0
        %2232 = vmatpush1.msra.mxu0 0.0
        %2233 = vmatprep.subr.mxu0 0.0
        %2234 = vmatpush1.msra.mxu0 0.0
        %2235 = vmatprep.subr.mxu0 0.0
        %2236 = vmatpush1.msra.mxu0 0.0
        %2237 = vmatprep.subr.mxu0 0.0
        %2238 = vmatpush1.msra.mxu0 0.0
        %2239 = vmatprep.subr.mxu0 0.0
        %2240 = vmatpush1.msra.mxu0 0.0
        %2241 = vmatprep.subr.mxu0 0.0
        %2242 = vmatpush1.msra.mxu0 0.0
        %2243 = vmatprep.subr.mxu0 0.0
        %2244 = vmatpush1.msra.mxu0 0.0
        %2245 = vmatprep.subr.mxu0 0.0
        %2246 = vmatpush1.msra.mxu0 0.0
        %2247 = vmatprep.subr.mxu0 0.0
        %2248 = vmatpush1.msra.mxu0 0.0
        %2249 = vmatprep.subr.mxu0 0.0
        %2250 = vmatpush1.msra.mxu0 0.0
        %2251 = vmatprep.subr.mxu0 0.0
        %2252 = vmatpush1.msra.mxu0 0.0
        %2253 = vmatprep.subr.mxu0 0.0
        %2254 = vmatpush1.msra.mxu0 0.0
        %2255 = vmatprep.subr.mxu0 0.0
        %2256 = vmatpush1.msra.mxu0 0.0
        %2257 = vmatprep.subr.mxu0 0.0
        %2258 = vmatpush1.msra.mxu0 0.0
        %2259 = vmatprep.subr.mxu0 0.0
        %2260 = vmatpush1.msra.mxu0 0.0
        %2261 = vmatprep.subr.mxu0 0.0
        %2262 = vmatpush1.msra.mxu0 0.0
        %2263 = vmatprep.subr.mxu0 0.0
        %2264 = vmatpush1.msra.mxu0 0.0
        %2265 = vmatprep.subr.mxu0 0.0
        %2266 = vmatpush1.msra.mxu0 0.0
        %2267 = vmatprep.subr.mxu0 0.0
        %2268 = vmatpush1.msra.mxu0 0.0
        %2269 = vmatprep.subr.mxu0 0.0
        %2270 = vmatpush1.msra.mxu0 0.0
        %2271 = vmatprep.subr.mxu0 0.0
        %2272 = vmatpush1.msra.mxu0 0.0
        %2273 = vmatprep.subr.mxu0 0.0
        %2274 = vmatpush1.msra.mxu0 0.0
        %2275 = vmatprep.subr.mxu0 0.0
        %2276 = vmatpush1.msra.mxu0 0.0
        %2277 = vmatprep.subr.mxu0 0.0
        %2278 = vmatpush1.msra.mxu0 0.0
        %2279 = vmatprep.subr.mxu0 0.0
        %2280 = vmatpush1.msra.mxu0 0.0
        %2281 = vmatprep.subr.mxu0 0.0
        %2282 = vmatpush1.msra.mxu0 0.0
        %2283 = vmatprep.subr.mxu0 0.0
        %2284 = vmatpush1.msra.mxu0 0.0
        %2285 = vmatprep.subr.mxu0 0.0
        %2286 = vmatpush1.msra.mxu0 0.0
        %2287 = vmatprep.subr.mxu0 0.0
        %2288 = vmatpush1.msra.mxu0 0.0
        %2289 = vmatprep.subr.mxu0 0.0
        %2290 = vmatpush1.msra.mxu0 0.0
        %2291 = vmatprep.subr.mxu0 0.0
        %2292 = vmatpush1.msra.mxu0 0.0
        %2293 = vmatprep.mubr.f32.mxu0 0.0
        %2294 = vmatmul.mubr.f32.gmra.mrb[0].mxu0 %v2227
        %v2295 = vpop.f32.mrb[0].mxu0
        %v2296 = vadd.f32 0.0, %v2295
        %v2297 = vpop.f32.mrb[0].mxu0
        %2298 = vdwg.mxu0
        %s2299 = scalar_lea.vmem %s7, 24
        %v2300 = vld [vmem:[%s2299] sm:$0xff]
        %v2302 = vsel %vm1155, %v2296, 0
        %2304 = vmatprep.subr.mxu0 0.0
        %2305 = vmatpush1.msra.mxu0 %v2300
        %2306 = vmatprep.subr.mxu0 0.0
        %2307 = vmatpush1.msra.mxu0 0.0
        %2308 = vmatprep.subr.mxu0 0.0
        %2309 = vmatpush1.msra.mxu0 0.0
        %2310 = vmatprep.subr.mxu0 0.0
        %2311 = vmatpush1.msra.mxu0 0.0
        %2312 = vmatprep.subr.mxu0 0.0
        %2313 = vmatpush1.msra.mxu0 0.0
        %2314 = vmatprep.subr.mxu0 0.0
        %2315 = vmatpush1.msra.mxu0 0.0
        %2316 = vmatprep.subr.mxu0 0.0
        %2317 = vmatpush1.msra.mxu0 0.0
        %2318 = vmatprep.subr.mxu0 0.0
        %2319 = vmatpush1.msra.mxu0 0.0
        %2320 = vmatprep.subr.mxu0 0.0
        %2321 = vmatpush1.msra.mxu0 0.0
        %2322 = vmatprep.subr.mxu0 0.0
        %2323 = vmatpush1.msra.mxu0 0.0
        %2324 = vmatprep.subr.mxu0 0.0
        %2325 = vmatpush1.msra.mxu0 0.0
        %2326 = vmatprep.subr.mxu0 0.0
        %2327 = vmatpush1.msra.mxu0 0.0
        %2328 = vmatprep.subr.mxu0 0.0
        %2329 = vmatpush1.msra.mxu0 0.0
        %2330 = vmatprep.subr.mxu0 0.0
        %2331 = vmatpush1.msra.mxu0 0.0
        %2332 = vmatprep.subr.mxu0 0.0
        %2333 = vmatpush1.msra.mxu0 0.0
        %2334 = vmatprep.subr.mxu0 0.0
        %2335 = vmatpush1.msra.mxu0 0.0
        %2336 = vmatprep.subr.mxu0 0.0
        %2337 = vmatpush1.msra.mxu0 0.0
        %2338 = vmatprep.subr.mxu0 0.0
        %2339 = vmatpush1.msra.mxu0 0.0
        %2340 = vmatprep.subr.mxu0 0.0
        %2341 = vmatpush1.msra.mxu0 0.0
        %2342 = vmatprep.subr.mxu0 0.0
        %2343 = vmatpush1.msra.mxu0 0.0
        %2344 = vmatprep.subr.mxu0 0.0
        %2345 = vmatpush1.msra.mxu0 0.0
        %2346 = vmatprep.subr.mxu0 0.0
        %2347 = vmatpush1.msra.mxu0 0.0
        %2348 = vmatprep.subr.mxu0 0.0
        %2349 = vmatpush1.msra.mxu0 0.0
        %2350 = vmatprep.subr.mxu0 0.0
        %2351 = vmatpush1.msra.mxu0 0.0
        %2352 = vmatprep.subr.mxu0 0.0
        %2353 = vmatpush1.msra.mxu0 0.0
        %2354 = vmatprep.subr.mxu0 0.0
        %2355 = vmatpush1.msra.mxu0 0.0
        %2356 = vmatprep.subr.mxu0 0.0
        %2357 = vmatpush1.msra.mxu0 0.0
        %2358 = vmatprep.subr.mxu0 0.0
        %2359 = vmatpush1.msra.mxu0 0.0
        %2360 = vmatprep.subr.mxu0 0.0
        %2361 = vmatpush1.msra.mxu0 0.0
        %2362 = vmatprep.subr.mxu0 0.0
        %2363 = vmatpush1.msra.mxu0 0.0
        %2364 = vmatprep.subr.mxu0 0.0
        %2365 = vmatpush1.msra.mxu0 0.0
        %2366 = vmatprep.subr.mxu0 0.0
        %2367 = vmatpush1.msra.mxu0 0.0
        %2368 = vmatprep.mubr.f32.mxu0 0.0
        %2369 = vmatmul.mubr.f32.gmra.mrb[0].mxu0 %v2302
        %v2370 = vpop.f32.mrb[0].mxu0
        %v2371 = vadd.f32 0.0, %v2370
        %v2372 = vpop.f32.mrb[0].mxu0
        %2373 = vdwg.mxu0
        %v2374 = vadd.f32 %v2047, %v2371
        %v2375 = vld [vmem:[%s8] sm:$0x1]
        %v2377 = vlaneseq
        %v2378 = vshrl.u32 %v2377, 7
        %v2379 = vsub.s32 0, %v2378
        %v2380 = vrot.slane %v2375, %v2379
        %v2382 = vadd.f32 %v2374, %v2380
        %2383 = vst.msk [vmem:[%s370] sm:$0xff] %vm1080, %v2382
        %v2384 = vmul.f32 %v2223, 0.25
        %2385 = vst.msk [vmem:[%s377] sm:$0xff] %vm1155, %v2384
        %s2386 = sand.u32 %s244, 1
        %s2387 = scalar_lea.sflag [#allocation5], %s2386
        %s2388 = sand.u32 %s244, 1
        %s2389 = smul.addr %s2388, 8
        %s2390 = scalar_lea.vmem [#allocation4], %s2389
        %s2391 = sand.u32 %s272, 1
        %s2392 = scalar_lea.sflag [#allocation7], %s2391
        %s2393 = sand.u32 %s272, 1
        %s2394 = smul.addr %s2393, 8
        %s2395 = scalar_lea.vmem [#allocation6], %s2394
        // Predicated region
        $region61: #{tpu_custom_call.1} parent=55 // pred_check
          %p2396 = pneg %p254
        $region62: #{tpu_custom_call.1} parent=55 // pred_check_branch
          %2398 = sbr.rel (%p2396) target = $region64
        $region63: #{tpu_custom_call.1} parent=55 // pred_region
          %s2400 = ssub.s32 128, 128
          %2401 = vsyncadd %s2387, %s2400
          %s2402 = sadd.s32 %s33, %s32
          %s2403 = smul.addr %s2402, 128
          %s2404 = scalar_lea.hbm %s9, %s2403
          %s2406 = sshll.u32 %s2390, 4
          %s2407 = int_to_ptr.vmem [resolvable:$true] %s2406
          %2409 = dma.vmem_to_hbm [thread:$0]  %s2407, 128, %s2404, %s2387
        $region64: #{tpu_custom_call.1} parent=55 // pred_fallthru
          _
        // Predicated region
        $region65: #{tpu_custom_call.1} parent=55 // pred_check
          %p2410 = pneg %p282
        $region66: #{tpu_custom_call.1} parent=55 // pred_check_branch
          %2412 = sbr.rel (%p2410) target = $region68
        $region67: #{tpu_custom_call.1} parent=55 // pred_region
          %s2414 = ssub.s32 128, 128
          %2415 = vsyncadd %s2392, %s2414
          %s2416 = sadd.s32 %s33, %s32
          %s2417 = smul.addr %s2416, 128
          %s2418 = scalar_lea.hbm %s10, %s2417
          %s2420 = sshll.u32 %s2395, 4
          %s2421 = int_to_ptr.vmem [resolvable:$true] %s2420
          %2423 = dma.vmem_to_hbm [thread:$0]  %s2421, 128, %s2418, %s2392
        $region68: #{tpu_custom_call.1} parent=55 // pred_fallthru
          _
      $region56: #{tpu_custom_call.1} parent=5 // pred_fallthru
        _
      %p2424 = scmp.le.s32.totalorder 2, %s23
      // Predicated region
      $region69: #{tpu_custom_call.1} parent=5 // pred_check
        %p2425 = pneg %p2424
      $region70: #{tpu_custom_call.1} parent=5 // pred_check_branch
        %2427 = sbr.rel (%p2425) target = $region72
      $region71: #{tpu_custom_call.1} parent=5 // pred_region
        %s2428 = ssub.s32 %s23, 2
        // Predicated region
        $region73: #{tpu_custom_call.1} parent=71 // pred_check
          %p2429 = pneg %p260
        $region74: #{tpu_custom_call.1} parent=71 // pred_check_branch
          %2431 = sbr.rel (%p2429) target = $region76
        $region75: #{tpu_custom_call.1} parent=71 // pred_region
          %s2432 = sand.u32 %s245, 1
          %s2433 = scalar_lea.sflag [#allocation5], %s2432
          %s2434 = sand.u32 %s245, 1
          %s2435 = smul.addr %s2434, 8
          %s2436 = scalar_lea.vmem [#allocation4], %s2435
          %2437 = dma.done %s2433, 128
        $region76: #{tpu_custom_call.1} parent=71 // pred_fallthru
          _
        // Predicated region
        $region77: #{tpu_custom_call.1} parent=71 // pred_check
          %p2438 = pneg %p288
        $region78: #{tpu_custom_call.1} parent=71 // pred_check_branch
          %2440 = sbr.rel (%p2438) target = $region80
        $region79: #{tpu_custom_call.1} parent=71 // pred_region
          %s2441 = sand.u32 %s273, 1
          %s2442 = scalar_lea.sflag [#allocation7], %s2441
          %s2443 = sand.u32 %s273, 1
          %s2444 = smul.addr %s2443, 8
          %s2445 = scalar_lea.vmem [#allocation6], %s2444
          %2446 = dma.done %s2442, 128
        $region80: #{tpu_custom_call.1} parent=71 // pred_fallthru
          _
      $region72: #{tpu_custom_call.1} parent=5 // pred_fallthru
        _
    $region6: #{tpu_custom_call.1} parent=1 // loop_footer
      %s27 = sadd.s32 1, %s23
    $region7: #{tpu_custom_call.1} parent=1 // loop_footer_branch
      %22 = sbr.rel target = $region3
    $region8: #{tpu_custom_call.1} parent=1 // loop_exit
      _
    %2447 = vsyncpa [#allocation5], 1
    %s2448 = scalar_lea.sflag [#allocation5], 1
    %2449 = vsyncpa %s2448, 1
    %2450 = vsyncpa [#allocation7], 1
    %s2451 = scalar_lea.sflag [#allocation7], 1
    %2452 = vsyncpa %s2451, 1

</llo_original>
